<compile_context>
chip_gen: v5e
topology: v5e:2x2
jax: 0.10.0
libtpu: 0.0.40
codegen_flags: <defaults>
</compile_context>

<pallas_src>
import functools

import jax
import jax.numpy as jnp
from jax.experimental import pallas as pl
from jax.experimental.pallas import tpu as pltpu


def _resblock_kernel(xin_ref, xtop_ref, xbot_ref, w1_ref, b1_ref, w2_ref,
                     b2_ref, out_ref, xpad_ref, ypad_ref, *, res_scale):
    # xin_ref : (1, TH, W, Cp)   this row tile of the input
    # xtop_ref: (1, 2,  W, Cp)   2 rows above the tile (clamped; zeroed at top)
    # xbot_ref: (1, 2,  W, Cp)   2 rows below the tile (clamped; zeroed at bottom)
    # w*_ref  : (9*Cp, Cp)       im2col-reshaped conv weights
    # b*_ref  : (1, Cp)
    # out_ref : (1, TH, W, Cp)
    # xpad_ref: (TH+4, W+2, Cp)  VMEM scratch, zero-padded input window
    # ypad_ref: (TH+2, W+2, Cp)  VMEM scratch, zero-padded ReLU(conv1) window
    t = pl.program_id(1)
    last_t = pl.num_programs(1) - 1

    _, TH, W, Cp = xin_ref.shape
    R = TH + 2                      # conv1 output rows staged for conv2

    # ---- assemble the zero-padded input window in VMEM (no padded HBM copy)
    xpad_ref[2:2 + TH, 1:1 + W, :] = xin_ref[0]
    xpad_ref[0:2, 1:1 + W, :] = xtop_ref[0]
    xpad_ref[TH + 2:TH + 4, 1:1 + W, :] = xbot_ref[0]
    # O(perimeter) border zeroing, every step (interior is fully overwritten).
    xpad_ref[:, 0:1, :] = jnp.zeros((TH + 4, 1, Cp), jnp.float32)
    xpad_ref[:, W + 1:W + 2, :] = jnp.zeros((TH + 4, 1, Cp), jnp.float32)

    @pl.when(t == 0)
    def _():                         # top of the image: halo rows are padding
        xpad_ref[0:2, :, :] = jnp.zeros((2, W + 2, Cp), jnp.float32)

    @pl.when(t == last_t)
    def _():                         # bottom of the image
        xpad_ref[TH + 2:TH + 4, :, :] = jnp.zeros((2, W + 2, Cp), jnp.float32)

    # ---- conv1: single im2col matmul, K = 9*Cp, computed for TH+2 rows
    slab1 = jnp.concatenate(
        [xpad_ref[dh:dh + R, dw:dw + W, :]
         for dh in range(3) for dw in range(3)],
        axis=-1).reshape(R * W, 9 * Cp)
    y1 = jnp.dot(slab1, w1_ref[...], preferred_element_type=jnp.float32)
    y1 = jnp.maximum(y1 + b1_ref[...], 0.0).reshape(R, W, Cp)

    # Stage ReLU output (with its own "same" padding) for conv2.
    ypad_ref[:, 1:1 + W, :] = y1
    ypad_ref[:, 0:1, :] = jnp.zeros((R, 1, Cp), jnp.float32)
    ypad_ref[:, W + 1:W + 2, :] = jnp.zeros((R, 1, Cp), jnp.float32)

    @pl.when(t == 0)
    def _():                         # row above the image is zero padding
        ypad_ref[0:1, :, :] = jnp.zeros((1, W + 2, Cp), jnp.float32)

    @pl.when(t == last_t)
    def _():                         # row below the image is zero padding
        ypad_ref[R - 1:R, :, :] = jnp.zeros((1, W + 2, Cp), jnp.float32)

    # ---- conv2: single im2col matmul for the TH output rows of this tile
    slab2 = jnp.concatenate(
        [ypad_ref[dh:dh + TH, dw:dw + W, :]
         for dh in range(3) for dw in range(3)],
        axis=-1).reshape(TH * W, 9 * Cp)
    y2 = jnp.dot(slab2, w2_ref[...], preferred_element_type=jnp.float32)
    y2 = (y2 + b2_ref[...]).reshape(TH, W, Cp)

    out_ref[0] = (y2 * res_scale + xin_ref[0]).astype(out_ref.dtype)


def _pick_row_tile(h):
    for th in (8, 4, 2):             # even tiles so the 2-row halo BlockSpecs align
        if h % th == 0:
            return th
    return h                         # odd H: whole image per step


def resblock_forward(x_nchw, w1, b1, w2, b2, res_scale=1.0):
    """x_nchw: (N, C, H, W); w: (C, C, 3, 3) OIHW; b: (C,).  Returns NCHW f32-cast-back."""
    N, C, H, W = x_nchw.shape
    assert w1.shape == (C, C, 3, 3) and w2.shape == (C, C, 3, 3)
    assert H >= 2

    Cp = ((C + 127) // 128) * 128            # lane-dense channel padding
    TH = _pick_row_tile(H)
    nT = H // TH

    x = jnp.transpose(x_nchw, (0, 2, 3, 1)).astype(jnp.float32)   # NHWC
    if Cp != C:
        x = jnp.pad(x, ((0, 0), (0, 0), (0, 0), (0, Cp - C)))

    def prep_w(w):
        wk = jnp.transpose(w, (2, 3, 1, 0))                        # OIHW -> HWIO
        wk = jnp.pad(wk, ((0, 0), (0, 0), (0, Cp - C), (0, Cp - C)))
        return wk.reshape(9 * Cp, Cp).astype(jnp.float32)          # im2col layout

    w1_k, w2_k = prep_w(w1), prep_w(w2)
    b1_k = jnp.pad(b1, (0, Cp - C)).reshape(1, Cp).astype(jnp.float32)
    b2_k = jnp.pad(b2, (0, Cp - C)).reshape(1, Cp).astype(jnp.float32)

    kernel = functools.partial(_resblock_kernel, res_scale=float(res_scale))
    hb = TH // 2                     # halo block index stride (H-dim block of 2 rows)

    in_specs = [
        # interior row tile
        pl.BlockSpec((1, TH, W, Cp), lambda b, t: (b, t, 0, 0)),
        # 2-row halo above (clamped; contents zeroed in-kernel when t == 0)
        pl.BlockSpec((1, 2, W, Cp),
                     lambda b, t: (b, jnp.maximum(t * hb - 1, 0), 0, 0)),
        # 2-row halo below (clamped; zeroed in-kernel when t == last)
        pl.BlockSpec((1, 2, W, Cp),
                     lambda b, t: (b, jnp.minimum((t + 1) * hb, H // 2 - 1), 0, 0)),
        pl.BlockSpec((9 * Cp, Cp), lambda b, t: (0, 0)),
        pl.BlockSpec((1, Cp), lambda b, t: (0, 0)),
        pl.BlockSpec((9 * Cp, Cp), lambda b, t: (0, 0)),
        pl.BlockSpec((1, Cp), lambda b, t: (0, 0)),
    ]

    out = pl.pallas_call(
        kernel,
        out_shape=jax.ShapeDtypeStruct((N, H, W, Cp), jnp.float32),
        grid_spec=pltpu.PrefetchScalarGridSpec(
            num_scalar_prefetch=0,
            grid=(N, nT),
            in_specs=in_specs,
            out_specs=pl.BlockSpec((1, TH, W, Cp), lambda b, t: (b, t, 0, 0)),
            scratch_shapes=[
                pltpu.VMEM((TH + 4, W + 2, Cp), jnp.float32),   # padded x window
                pltpu.VMEM((TH + 2, W + 2, Cp), jnp.float32),   # padded relu(conv1)
            ],
        ),
        compiler_params=pltpu.CompilerParams(
            dimension_semantics=("parallel", "parallel")),
    )(x, x, x, w1_k, b1_k, w2_k, b2_k)

    out = out[..., :C]                                           # drop channel pad
    return jnp.transpose(out, (0, 3, 1, 2)).astype(x_nchw.dtype)  # back to NCHW


def _reference(x, w1, b1, w2, b2, res_scale):
    """Pure-JAX reference of the PyTorch ResBlock forward (NCHW)."""
    dn = ('NCHW', 'OIHW', 'NCHW')
    hp = jax.lax.Precision.HIGHEST
    y = jax.lax.conv_general_dilated(x, w1, (1, 1), 'SAME',
                                     dimension_numbers=dn, precision=hp)
    y = y + b1[None, :, None, None]
    y = jnp.maximum(y, 0.0)
    y = jax.lax.conv_general_dilated(y, w2, (1, 1), 'SAME',
                                     dimension_numbers=dn, precision=hp)
    y = y + b2[None, :, None, None]
    return y * res_scale + x


if __name__ == "__main__":
    N, C, H, W, K = 2, 4, 16, 16, 3          # n_feats=4, kernel_size=3
    res_scale = 1.0

    key = jax.random.PRNGKey(0)
    kx, k1, k2, k3, k4 = jax.random.split(key, 5)
    x = jax.random.normal(kx, (N, C, H, W), jnp.float32)

    fan_in = C * K * K
    w1 = jax.random.normal(k1, (C, C, K, K), jnp.float32) / jnp.sqrt(fan_in)
    b1 = 0.01 * jax.random.normal(k2, (C,), jnp.float32)
    w2 = jax.random.normal(k3, (C, C, K, K), jnp.float32) / jnp.sqrt(fan_in)
    b2 = 0.01 * jax.random.normal(k4, (C,), jnp.float32)

    out = jax.block_until_ready(resblock_forward(x, w1, b1, w2, b2, res_scale))
    ref = _reference(x, w1, b1, w2, b2, res_scale)
    assert out.shape == (N, C, H, W) and out.dtype == jnp.float32
    assert jnp.allclose(out, ref, atol=1e-4, rtol=1e-4)
    print("KERNEL_OK")
</pallas_src>

<mosaic_0001>
module attributes {stable_mosaic.version = 11 : i64} {
  func.func @_resblock_kernel(%arg0: i32, %arg1: i32, %arg2: memref<1x8x16x128xf32, #tpu.memory_space<vmem>>, %arg3: memref<1x2x16x128xf32, #tpu.memory_space<vmem>>, %arg4: memref<1x2x16x128xf32, #tpu.memory_space<vmem>>, %arg5: memref<1152x128xf32, #tpu.memory_space<vmem>>, %arg6: memref<1x128xf32, #tpu.memory_space<vmem>>, %arg7: memref<1152x128xf32, #tpu.memory_space<vmem>>, %arg8: memref<1x128xf32, #tpu.memory_space<vmem>>, %arg9: memref<1x8x16x128xf32, #tpu.memory_space<vmem>>, %arg10: memref<12x18x128xf32, #tpu.memory_space<vmem>>, %arg11: memref<10x18x128xf32, #tpu.memory_space<vmem>>) attributes {dimension_semantics = [#tpu.dimension_semantics<parallel>, #tpu.dimension_semantics<parallel>], iteration_bounds = array<i64: 2, 2>, scalar_prefetch = 0 : i64, scratch_operands = 2 : i64, tpu.core_type = #tpu.core_type<tc>, window_params = [{transform_indices = @transform_0, window_bounds = array<i64: 1, 8, 16, 128>}, {transform_indices = @transform_1, window_bounds = array<i64: 1, 2, 16, 128>}, {transform_indices = @transform_2, window_bounds = array<i64: 1, 2, 16, 128>}, {pipeline_mode = #tpu.pipeline_mode<synchronous>, transform_indices = @transform_3, window_bounds = array<i64: 1152, 128>}, {pipeline_mode = #tpu.pipeline_mode<synchronous>, transform_indices = @transform_4, window_bounds = array<i64: 1, 128>}, {pipeline_mode = #tpu.pipeline_mode<synchronous>, transform_indices = @transform_5, window_bounds = array<i64: 1152, 128>}, {pipeline_mode = #tpu.pipeline_mode<synchronous>, transform_indices = @transform_6, window_bounds = array<i64: 1, 128>}, {transform_indices = @transform_7, window_bounds = array<i64: 1, 8, 16, 128>}]} {
    %c0 = arith.constant 0 : index
    %c0_0 = arith.constant 0 : index
    %c0_1 = arith.constant 0 : index
    %c0_2 = arith.constant 0 : index
    %0 = vector.load %arg2[%c0, %c0_0, %c0_1, %c0_2] : memref<1x8x16x128xf32, #tpu.memory_space<vmem>>, vector<1x8x16x128xf32>
    %1 = vector.shape_cast %0 : vector<1x8x16x128xf32> to vector<8x16x128xf32>
    %c2 = arith.constant 2 : index
    %c1 = arith.constant 1 : index
    %c0_3 = arith.constant 0 : index
    %2 = vector.load %arg10[%c2, %c1, %c0_3] : memref<12x18x128xf32, #tpu.memory_space<vmem>>, vector<8x16x128xf32>
    tpu.vector_store %arg10[%c2, %c1, %c0_3], %1 {strides = array<i32>} : memref<12x18x128xf32, #tpu.memory_space<vmem>>, vector<8x16x128xf32>,
    %c0_4 = arith.constant 0 : index
    %c0_5 = arith.constant 0 : index
    %c0_6 = arith.constant 0 : index
    %c0_7 = arith.constant 0 : index
    %3 = vector.load %arg3[%c0_4, %c0_5, %c0_6, %c0_7] : memref<1x2x16x128xf32, #tpu.memory_space<vmem>>, vector<1x2x16x128xf32>
    %4 = vector.shape_cast %3 : vector<1x2x16x128xf32> to vector<2x16x128xf32>
    %c0_8 = arith.constant 0 : index
    %c1_9 = arith.constant 1 : index
    %c0_10 = arith.constant 0 : index
    %5 = vector.load %arg10[%c0_8, %c1_9, %c0_10] : memref<12x18x128xf32, #tpu.memory_space<vmem>>, vector<2x16x128xf32>
    tpu.vector_store %arg10[%c0_8, %c1_9, %c0_10], %4 {strides = array<i32>} : memref<12x18x128xf32, #tpu.memory_space<vmem>>, vector<2x16x128xf32>,
    %c0_11 = arith.constant 0 : index
    %c0_12 = arith.constant 0 : index
    %c0_13 = arith.constant 0 : index
    %c0_14 = arith.constant 0 : index
    %6 = vector.load %arg4[%c0_11, %c0_12, %c0_13, %c0_14] : memref<1x2x16x128xf32, #tpu.memory_space<vmem>>, vector<1x2x16x128xf32>
    %7 = vector.shape_cast %6 : vector<1x2x16x128xf32> to vector<2x16x128xf32>
    %c10 = arith.constant 10 : index
    %c1_15 = arith.constant 1 : index
    %c0_16 = arith.constant 0 : index
    %8 = vector.load %arg10[%c10, %c1_15, %c0_16] : memref<12x18x128xf32, #tpu.memory_space<vmem>>, vector<2x16x128xf32>
    tpu.vector_store %arg10[%c10, %c1_15, %c0_16], %7 {strides = array<i32>} : memref<12x18x128xf32, #tpu.memory_space<vmem>>, vector<2x16x128xf32>,
    %cst = arith.constant 0.000000e+00 : f32
    %9 = vector.broadcast %cst : f32 to vector<12x1x128xf32>
    %c0_17 = arith.constant 0 : index
    %c0_18 = arith.constant 0 : index
    %c0_19 = arith.constant 0 : index
    %10 = vector.load %arg10[%c0_17, %c0_18, %c0_19] : memref<12x18x128xf32, #tpu.memory_space<vmem>>, vector<12x1x128xf32>
    tpu.vector_store %arg10[%c0_17, %c0_18, %c0_19], %9 {strides = array<i32>} : memref<12x18x128xf32, #tpu.memory_space<vmem>>, vector<12x1x128xf32>,
    %cst_20 = arith.constant 0.000000e+00 : f32
    %11 = vector.broadcast %cst_20 : f32 to vector<12x1x128xf32>
    %c0_21 = arith.constant 0 : index
    %c17 = arith.constant 17 : index
    %c0_22 = arith.constant 0 : index
    %12 = vector.load %arg10[%c0_21, %c17, %c0_22] : memref<12x18x128xf32, #tpu.memory_space<vmem>>, vector<12x1x128xf32>
    tpu.vector_store %arg10[%c0_21, %c17, %c0_22], %11 {strides = array<i32>} : memref<12x18x128xf32, #tpu.memory_space<vmem>>, vector<12x1x128xf32>,
    %c0_i32 = arith.constant 0 : i32
    %13 = arith.cmpi eq, %arg1, %c0_i32 : i32
    %14 = arith.extui %13 : i1 to i32
    %c0_i32_23 = arith.constant 0 : i32
    %15 = arith.cmpi ne, %14, %c0_i32_23 : i32
    scf.if %15 {
      %cst_114 = arith.constant 0.000000e+00 : f32
      %74 = vector.broadcast %cst_114 : f32 to vector<2x18x128xf32>
      %c0_115 = arith.constant 0 : index
      %c0_116 = arith.constant 0 : index
      %c0_117 = arith.constant 0 : index
      %75 = vector.load %arg10[%c0_115, %c0_116, %c0_117] : memref<12x18x128xf32, #tpu.memory_space<vmem>>, vector<2x18x128xf32>
      tpu.vector_store %arg10[%c0_115, %c0_116, %c0_117], %74 {strides = array<i32>} : memref<12x18x128xf32, #tpu.memory_space<vmem>>, vector<2x18x128xf32>,
    } else {
    }
    %c1_i32 = arith.constant 1 : i32
    %16 = arith.cmpi eq, %arg1, %c1_i32 : i32
    %17 = arith.extui %16 : i1 to i32
    %c0_i32_24 = arith.constant 0 : i32
    %18 = arith.cmpi ne, %17, %c0_i32_24 : i32
    scf.if %18 {
      %cst_114 = arith.constant 0.000000e+00 : f32
      %74 = vector.broadcast %cst_114 : f32 to vector<2x18x128xf32>
      %c10_115 = arith.constant 10 : index
      %c0_116 = arith.constant 0 : index
      %c0_117 = arith.constant 0 : index
      %75 = vector.load %arg10[%c10_115, %c0_116, %c0_117] : memref<12x18x128xf32, #tpu.memory_space<vmem>>, vector<2x18x128xf32>
      tpu.vector_store %arg10[%c10_115, %c0_116, %c0_117], %74 {strides = array<i32>} : memref<12x18x128xf32, #tpu.memory_space<vmem>>, vector<2x18x128xf32>,
    } else {
    }
    %c0_25 = arith.constant 0 : index
    %c0_26 = arith.constant 0 : index
    %c0_27 = arith.constant 0 : index
    %19 = vector.load %arg10[%c0_25, %c0_26, %c0_27] : memref<12x18x128xf32, #tpu.memory_space<vmem>>, vector<10x16x128xf32>
    %c0_28 = arith.constant 0 : index
    %c1_29 = arith.constant 1 : index
    %c0_30 = arith.constant 0 : index
    %20 = vector.load %arg10[%c0_28, %c1_29, %c0_30] : memref<12x18x128xf32, #tpu.memory_space<vmem>>, vector<10x16x128xf32>
    %c0_31 = arith.constant 0 : index
    %c2_32 = arith.constant 2 : index
    %c0_33 = arith.constant 0 : index
    %21 = vector.load %arg10[%c0_31, %c2_32, %c0_33] : memref<12x18x128xf32, #tpu.memory_space<vmem>>, vector<10x16x128xf32>
    %c1_34 = arith.constant 1 : index
    %c0_35 = arith.constant 0 : index
    %c0_36 = arith.constant 0 : index
    %22 = vector.load %arg10[%c1_34, %c0_35, %c0_36] : memref<12x18x128xf32, #tpu.memory_space<vmem>>, vector<10x16x128xf32>
    %c1_37 = arith.constant 1 : index
    %c1_38 = arith.constant 1 : index
    %c0_39 = arith.constant 0 : index
    %23 = vector.load %arg10[%c1_37, %c1_38, %c0_39] : memref<12x18x128xf32, #tpu.memory_space<vmem>>, vector<10x16x128xf32>
    %c1_40 = arith.constant 1 : index
    %c2_41 = arith.constant 2 : index
    %c0_42 = arith.constant 0 : index
    %24 = vector.load %arg10[%c1_40, %c2_41, %c0_42] : memref<12x18x128xf32, #tpu.memory_space<vmem>>, vector<10x16x128xf32>
    %c2_43 = arith.constant 2 : index
    %c0_44 = arith.constant 0 : index
    %c0_45 = arith.constant 0 : index
    %25 = vector.load %arg10[%c2_43, %c0_44, %c0_45] : memref<12x18x128xf32, #tpu.memory_space<vmem>>, vector<10x16x128xf32>
    %c2_46 = arith.constant 2 : index
    %c1_47 = arith.constant 1 : index
    %c0_48 = arith.constant 0 : index
    %26 = vector.load %arg10[%c2_46, %c1_47, %c0_48] : memref<12x18x128xf32, #tpu.memory_space<vmem>>, vector<10x16x128xf32>
    %c2_49 = arith.constant 2 : index
    %c2_50 = arith.constant 2 : index
    %c0_51 = arith.constant 0 : index
    %27 = vector.load %arg10[%c2_49, %c2_50, %c0_51] : memref<12x18x128xf32, #tpu.memory_space<vmem>>, vector<10x16x128xf32>
    %28 = tpu.concatenate %19, %20, %21, %22, %23, %24, %25, %26, %27 in 2 : vector<10x16x128xf32>, vector<10x16x128xf32>, vector<10x16x128xf32>, vector<10x16x128xf32>, vector<10x16x128xf32>, vector<10x16x128xf32>, vector<10x16x128xf32>, vector<10x16x128xf32>, vector<10x16x128xf32> -> vector<10x16x1152xf32>
    %29 = vector.shape_cast %28 : vector<10x16x1152xf32> to vector<160x1152xf32>
    %c0_52 = arith.constant 0 : index
    %c0_53 = arith.constant 0 : index
    %30 = vector.load %arg5[%c0_52, %c0_53] : memref<1152x128xf32, #tpu.memory_space<vmem>>, vector<1152x128xf32>
    %cst_54 = arith.constant dense<0.000000e+00> : vector<160x128xf32>
    %31 = tpu.matmul %29, %30, %cst_54 {dimension_numbers = #tpu.dot_dimension_numbers<[1], [0], [0], [1], [0, 0, 1, 1], [], []>} : vector<160x1152xf32>, vector<1152x128xf32>, vector<160x128xf32> -> vector<160x128xf32>
    %c0_55 = arith.constant 0 : index
    %c0_56 = arith.constant 0 : index
    %32 = vector.load %arg6[%c0_55, %c0_56] : memref<1x128xf32, #tpu.memory_space<vmem>>, vector<1x128xf32>
    %33 = vector.broadcast %32 : vector<1x128xf32> to vector<160x128xf32>
    %34 = arith.addf %31, %33 : vector<160x128xf32>
    %cst_57 = arith.constant 0.000000e+00 : f32
    %35 = vector.broadcast %cst_57 : f32 to vector<160x128xf32>
    %36 = arith.maximumf %34, %35 : vector<160x128xf32>
    %37 = vector.shape_cast %36 : vector<160x128xf32> to vector<10x16x128xf32>
    %c0_58 = arith.constant 0 : index
    %c1_59 = arith.constant 1 : index
    %c0_60 = arith.constant 0 : index
    %38 = vector.load %arg11[%c0_58, %c1_59, %c0_60] : memref<10x18x128xf32, #tpu.memory_space<vmem>>, vector<10x16x128xf32>
    tpu.vector_store %arg11[%c0_58, %c1_59, %c0_60], %37 {strides = array<i32>} : memref<10x18x128xf32, #tpu.memory_space<vmem>>, vector<10x16x128xf32>,
    %cst_61 = arith.constant 0.000000e+00 : f32
    %39 = vector.broadcast %cst_61 : f32 to vector<10x1x128xf32>
    %c0_62 = arith.constant 0 : index
    %c0_63 = arith.constant 0 : index
    %c0_64 = arith.constant 0 : index
    %40 = vector.load %arg11[%c0_62, %c0_63, %c0_64] : memref<10x18x128xf32, #tpu.memory_space<vmem>>, vector<10x1x128xf32>
    tpu.vector_store %arg11[%c0_62, %c0_63, %c0_64], %39 {strides = array<i32>} : memref<10x18x128xf32, #tpu.memory_space<vmem>>, vector<10x1x128xf32>,
    %cst_65 = arith.constant 0.000000e+00 : f32
    %41 = vector.broadcast %cst_65 : f32 to vector<10x1x128xf32>
    %c0_66 = arith.constant 0 : index
    %c17_67 = arith.constant 17 : index
    %c0_68 = arith.constant 0 : index
    %42 = vector.load %arg11[%c0_66, %c17_67, %c0_68] : memref<10x18x128xf32, #tpu.memory_space<vmem>>, vector<10x1x128xf32>
    tpu.vector_store %arg11[%c0_66, %c17_67, %c0_68], %41 {strides = array<i32>} : memref<10x18x128xf32, #tpu.memory_space<vmem>>, vector<10x1x128xf32>,
    %c0_i32_69 = arith.constant 0 : i32
    %43 = arith.cmpi eq, %arg1, %c0_i32_69 : i32
    %44 = arith.extui %43 : i1 to i32
    %c0_i32_70 = arith.constant 0 : i32
    %45 = arith.cmpi ne, %44, %c0_i32_70 : i32
    scf.if %45 {
      %cst_114 = arith.constant 0.000000e+00 : f32
      %74 = vector.broadcast %cst_114 : f32 to vector<1x18x128xf32>
      %c0_115 = arith.constant 0 : index
      %c0_116 = arith.constant 0 : index
      %c0_117 = arith.constant 0 : index
      %75 = vector.load %arg11[%c0_115, %c0_116, %c0_117] : memref<10x18x128xf32, #tpu.memory_space<vmem>>, vector<1x18x128xf32>
      tpu.vector_store %arg11[%c0_115, %c0_116, %c0_117], %74 {strides = array<i32>} : memref<10x18x128xf32, #tpu.memory_space<vmem>>, vector<1x18x128xf32>,
    } else {
    }
    %c1_i32_71 = arith.constant 1 : i32
    %46 = arith.cmpi eq, %arg1, %c1_i32_71 : i32
    %47 = arith.extui %46 : i1 to i32
    %c0_i32_72 = arith.constant 0 : i32
    %48 = arith.cmpi ne, %47, %c0_i32_72 : i32
    scf.if %48 {
      %cst_114 = arith.constant 0.000000e+00 : f32
      %74 = vector.broadcast %cst_114 : f32 to vector<1x18x128xf32>
      %c9 = arith.constant 9 : index
      %c0_115 = arith.constant 0 : index
      %c0_116 = arith.constant 0 : index
      %75 = vector.load %arg11[%c9, %c0_115, %c0_116] : memref<10x18x128xf32, #tpu.memory_space<vmem>>, vector<1x18x128xf32>
      tpu.vector_store %arg11[%c9, %c0_115, %c0_116], %74 {strides = array<i32>} : memref<10x18x128xf32, #tpu.memory_space<vmem>>, vector<1x18x128xf32>,
    } else {
    }
    %c0_73 = arith.constant 0 : index
    %c0_74 = arith.constant 0 : index
    %c0_75 = arith.constant 0 : index
    %49 = vector.load %arg11[%c0_73, %c0_74, %c0_75] : memref<10x18x128xf32, #tpu.memory_space<vmem>>, vector<8x16x128xf32>
    %c0_76 = arith.constant 0 : index
    %c1_77 = arith.constant 1 : index
    %c0_78 = arith.constant 0 : index
    %50 = vector.load %arg11[%c0_76, %c1_77, %c0_78] : memref<10x18x128xf32, #tpu.memory_space<vmem>>, vector<8x16x128xf32>
    %c0_79 = arith.constant 0 : index
    %c2_80 = arith.constant 2 : index
    %c0_81 = arith.constant 0 : index
    %51 = vector.load %arg11[%c0_79, %c2_80, %c0_81] : memref<10x18x128xf32, #tpu.memory_space<vmem>>, vector<8x16x128xf32>
    %c1_82 = arith.constant 1 : index
    %c0_83 = arith.constant 0 : index
    %c0_84 = arith.constant 0 : index
    %52 = vector.load %arg11[%c1_82, %c0_83, %c0_84] : memref<10x18x128xf32, #tpu.memory_space<vmem>>, vector<8x16x128xf32>
    %c1_85 = arith.constant 1 : index
    %c1_86 = arith.constant 1 : index
    %c0_87 = arith.constant 0 : index
    %53 = vector.load %arg11[%c1_85, %c1_86, %c0_87] : memref<10x18x128xf32, #tpu.memory_space<vmem>>, vector<8x16x128xf32>
    %c1_88 = arith.constant 1 : index
    %c2_89 = arith.constant 2 : index
    %c0_90 = arith.constant 0 : index
    %54 = vector.load %arg11[%c1_88, %c2_89, %c0_90] : memref<10x18x128xf32, #tpu.memory_space<vmem>>, vector<8x16x128xf32>
    %c2_91 = arith.constant 2 : index
    %c0_92 = arith.constant 0 : index
    %c0_93 = arith.constant 0 : index
    %55 = vector.load %arg11[%c2_91, %c0_92, %c0_93] : memref<10x18x128xf32, #tpu.memory_space<vmem>>, vector<8x16x128xf32>
    %c2_94 = arith.constant 2 : index
    %c1_95 = arith.constant 1 : index
    %c0_96 = arith.constant 0 : index
    %56 = vector.load %arg11[%c2_94, %c1_95, %c0_96] : memref<10x18x128xf32, #tpu.memory_space<vmem>>, vector<8x16x128xf32>
    %c2_97 = arith.constant 2 : index
    %c2_98 = arith.constant 2 : index
    %c0_99 = arith.constant 0 : index
    %57 = vector.load %arg11[%c2_97, %c2_98, %c0_99] : memref<10x18x128xf32, #tpu.memory_space<vmem>>, vector<8x16x128xf32>
    %58 = tpu.concatenate %49, %50, %51, %52, %53, %54, %55, %56, %57 in 2 : vector<8x16x128xf32>, vector<8x16x128xf32>, vector<8x16x128xf32>, vector<8x16x128xf32>, vector<8x16x128xf32>, vector<8x16x128xf32>, vector<8x16x128xf32>, vector<8x16x128xf32>, vector<8x16x128xf32> -> vector<8x16x1152xf32>
    %59 = vector.shape_cast %58 : vector<8x16x1152xf32> to vector<128x1152xf32>
    %c0_100 = arith.constant 0 : index
    %c0_101 = arith.constant 0 : index
    %60 = vector.load %arg7[%c0_100, %c0_101] : memref<1152x128xf32, #tpu.memory_space<vmem>>, vector<1152x128xf32>
    %cst_102 = arith.constant dense<0.000000e+00> : vector<128x128xf32>
    %61 = tpu.matmul %59, %60, %cst_102 {dimension_numbers = #tpu.dot_dimension_numbers<[1], [0], [0], [1], [0, 0, 1, 1], [], []>} : vector<128x1152xf32>, vector<1152x128xf32>, vector<128x128xf32> -> vector<128x128xf32>
    %c0_103 = arith.constant 0 : index
    %c0_104 = arith.constant 0 : index
    %62 = vector.load %arg8[%c0_103, %c0_104] : memref<1x128xf32, #tpu.memory_space<vmem>>, vector<1x128xf32>
    %63 = vector.broadcast %62 : vector<1x128xf32> to vector<128x128xf32>
    %64 = arith.addf %61, %63 : vector<128x128xf32>
    %65 = vector.shape_cast %64 : vector<128x128xf32> to vector<8x16x128xf32>
    %cst_105 = arith.constant 1.000000e+00 : f32
    %66 = vector.broadcast %cst_105 : f32 to vector<8x16x128xf32>
    %67 = arith.mulf %65, %66 : vector<8x16x128xf32>
    %c0_106 = arith.constant 0 : index
    %c0_107 = arith.constant 0 : index
    %c0_108 = arith.constant 0 : index
    %c0_109 = arith.constant 0 : index
    %68 = vector.load %arg2[%c0_106, %c0_107, %c0_108, %c0_109] : memref<1x8x16x128xf32, #tpu.memory_space<vmem>>, vector<1x8x16x128xf32>
    %69 = vector.shape_cast %68 : vector<1x8x16x128xf32> to vector<8x16x128xf32>
    %70 = arith.addf %67, %69 : vector<8x16x128xf32>
    %c0_110 = arith.constant 0 : index
    %c0_111 = arith.constant 0 : index
    %c0_112 = arith.constant 0 : index
    %c0_113 = arith.constant 0 : index
    %71 = vector.load %arg9[%c0_110, %c0_111, %c0_112, %c0_113] : memref<1x8x16x128xf32, #tpu.memory_space<vmem>>, vector<1x8x16x128xf32>
    %72 = vector.shape_cast %71 : vector<1x8x16x128xf32> to vector<8x16x128xf32>
    %73 = vector.shape_cast %70 : vector<8x16x128xf32> to vector<1x8x16x128xf32>
    tpu.vector_store %arg9[%c0_110, %c0_111, %c0_112, %c0_113], %73 {strides = array<i32>} : memref<1x8x16x128xf32, #tpu.memory_space<vmem>>, vector<1x8x16x128xf32>,
    return
  }
  func.func @transform_0(%arg0: i32, %arg1: i32) -> (i32, i32, i32, i32) {
    %c0_i32 = arith.constant 0 : i32
    %c0_i32_0 = arith.constant 0 : i32
    %c0_i32_1 = arith.constant 0 : i32
    return %arg0, %arg1, %c0_i32, %c0_i32_0 : i32, i32, i32, i32
  }
  func.func @transform_1(%arg0: i32, %arg1: i32) -> (i32, i32, i32, i32) {
    %c4_i32 = arith.constant 4 : i32
    %0 = arith.muli %arg1, %c4_i32 : i32
    %c1_i32 = arith.constant 1 : i32
    %1 = arith.subi %0, %c1_i32 : i32
    %c0_i32 = arith.constant 0 : i32
    %2 = arith.maxsi %1, %c0_i32 : i32
    %c0_i32_0 = arith.constant 0 : i32
    %c0_i32_1 = arith.constant 0 : i32
    %c0_i32_2 = arith.constant 0 : i32
    return %arg0, %2, %c0_i32_0, %c0_i32_1 : i32, i32, i32, i32
  }
  func.func @transform_2(%arg0: i32, %arg1: i32) -> (i32, i32, i32, i32) {
    %c1_i32 = arith.constant 1 : i32
    %0 = arith.addi %arg1, %c1_i32 : i32
    %c4_i32 = arith.constant 4 : i32
    %1 = arith.muli %0, %c4_i32 : i32
    %c7_i32 = arith.constant 7 : i32
    %2 = arith.minsi %1, %c7_i32 : i32
    %c0_i32 = arith.constant 0 : i32
    %c0_i32_0 = arith.constant 0 : i32
    %c0_i32_1 = arith.constant 0 : i32
    return %arg0, %2, %c0_i32, %c0_i32_0 : i32, i32, i32, i32
  }
  func.func @transform_3(%arg0: i32, %arg1: i32) -> (i32, i32) {
    %c0_i32 = arith.constant 0 : i32
    %c0_i32_0 = arith.constant 0 : i32
    %c0_i32_1 = arith.constant 0 : i32
    return %c0_i32, %c0_i32_0 : i32, i32
  }
  func.func @transform_4(%arg0: i32, %arg1: i32) -> (i32, i32) {
    %c0_i32 = arith.constant 0 : i32
    %c0_i32_0 = arith.constant 0 : i32
    %c0_i32_1 = arith.constant 0 : i32
    return %c0_i32, %c0_i32_0 : i32, i32
  }
  func.func @transform_5(%arg0: i32, %arg1: i32) -> (i32, i32) {
    %c0_i32 = arith.constant 0 : i32
    %c0_i32_0 = arith.constant 0 : i32
    %c0_i32_1 = arith.constant 0 : i32
    return %c0_i32, %c0_i32_0 : i32, i32
  }
  func.func @transform_6(%arg0: i32, %arg1: i32) -> (i32, i32) {
    %c0_i32 = arith.constant 0 : i32
    %c0_i32_0 = arith.constant 0 : i32
    %c0_i32_1 = arith.constant 0 : i32
    return %c0_i32, %c0_i32_0 : i32, i32
  }
  func.func @transform_7(%arg0: i32, %arg1: i32) -> (i32, i32, i32, i32) {
    %c0_i32 = arith.constant 0 : i32
    %c0_i32_0 = arith.constant 0 : i32
    %c0_i32_1 = arith.constant 0 : i32
    return %arg0, %arg1, %c0_i32, %c0_i32_0 : i32, i32, i32, i32
  }
}

</mosaic_0001>

<llo_original>
// kernel: tpu_custom_call.1
$region0: #{tpu_custom_call.1}
  #allocation0 [shape = 'u32[]', space=smem, size = 0x4, offset = 0x4, fixed_abs, tag = 'smem constant byte address 0x4 - core index']
  #allocation1 [shape = 'u32[72,128]{1,0:T(1,128)}', space=vmem, size = 0x9000, scoped, tag = 'internal scratch']
  #allocation2 [shape = 'f32[12,18,128]{2,1,0:T(8,128)}', space=vmem, size = 0x24000, scoped, tag = 'scratch operand']
  #allocation3 [shape = 'f32[10,18,128]{2,1,0:T(8,128)}', space=vmem, size = 0x1e000, scoped, tag = 'scratch operand']
  %s0 = inlined_call_operand.hbm [shape: f32[2,16,16,128], index: 0, kind: input, shape index: {}]
  %s1 = inlined_call_operand.hbm [shape: f32[2,16,16,128], index: 1, kind: input, shape index: {}]
  %s2 = inlined_call_operand.hbm [shape: f32[2,16,16,128], index: 2, kind: input, shape index: {}]
  %s3 = inlined_call_operand.hbm [shape: f32[1152,128], index: 3, kind: input, shape index: {}]
  %s4 = inlined_call_operand.vmem [shape: f32[1,128], index: 4, kind: input, shape index: {}]
  %s5 = inlined_call_operand.hbm [shape: f32[1152,128], index: 5, kind: input, shape index: {}]
  %s6 = inlined_call_operand.vmem [shape: f32[1,128], index: 6, kind: input, shape index: {}]
  %s7 = inlined_call_operand.hbm [shape: f32[2,16,16,128], index: 7, kind: output, shape index: {}]
  %s8 = sld [smem:[#allocation0]]
  $region97: #{tpu_custom_call.1} parent=0
    _
  %s10 = ssub.s32 1, %s8
  %s11 = scalar_select 0, %s10, %s8
  $region1: #{tpu_custom_call.1} parent=0
    #allocation4 [shape = 'u8[131072]{0}', space=vmem, size = 0x20000, scoped, tag = 'input window, operand 0']
    #allocation5 [shape = 's32[2]{0}', space=sflag, size = 0x8, scoped, tag = 'scoped memory for tpu_custom_call.1']
    #allocation6 [shape = 's32[2]{0}', space=sflag, size = 0x8, scoped, tag = 'scoped memory for tpu_custom_call.1']
    #allocation7 [shape = 'u8[32768]{0}', space=vmem, size = 0x8000, scoped, tag = 'input window, operand 1']
    #allocation8 [shape = 's32[2]{0}', space=sflag, size = 0x8, scoped, tag = 'scoped memory for tpu_custom_call.1']
    #allocation9 [shape = 'u8[32768]{0}', space=vmem, size = 0x8000, scoped, tag = 'input window, operand 2']
    #allocation10 [shape = 'u8[589824]{0}', space=vmem, size = 0x90000, scoped, tag = 'input window, operand 3, single buffered']
    #allocation11 [shape = 's32[1]{0}', space=sflag, size = 0x4, scoped, tag = 'scoped memory for tpu_custom_call.1']
    #allocation12 [shape = 'u8[589824]{0}', space=vmem, size = 0x90000, scoped, tag = 'input window, operand 5, single buffered']
    #allocation13 [shape = 'u8[131072]{0}', space=vmem, size = 0x20000, scoped, tag = 'output window, operand 0']
    %12 = vsyncpa [#allocation5], 0
    %s13 = scalar_lea.sflag [#allocation5], 1
    %14 = vsyncpa %s13, 0
    %15 = vsyncpa [#allocation8], 0
    %s16 = scalar_lea.sflag [#allocation8], 1
    %17 = vsyncpa %s16, 0
    %18 = vsyncpa [#allocation11], 0
    %19 = vsyncpa [#allocation6], 0
    %s20 = scalar_lea.sflag [#allocation6], 1
    %21 = vsyncpa %s20, 0
    loop: start=0, step=1, limit=6
    $region2: #{tpu_custom_call.1} parent=1 // loop_pre_header
      _
    $region3: #{tpu_custom_call.1} parent=1 // loop_header
      %s23 = sphi 0, %s27
      %p24 = scmp.ge.s32.totalorder %s23, 6
      %s30 = sphi 0, %s42
      %s31 = sphi 0, %s38
      %s32 = sphi 0, %s30
      %s33 = sphi 0, %s31
      %s34 = sphi 0, %s32
      %s35 = sphi 0, %s33
      %s47 = sphi 0, %s49
      %s50 = sphi 0, %s47
      %s51 = sphi 0, %s50
      %s67 = sphi 0, %s51
      %s83 = sphi 0, %s85
      %s86 = sphi 0, %s83
      %s87 = sphi 0, %s86
      %s103 = sphi 0, %s87
      %s119 = sphi 0, %s121
      %s122 = sphi 0, %s119
      %s123 = sphi 0, %s122
      %s139 = sphi 0, %s123
      %s143 = sphi 0, %s143
      %s145 = sphi 0, %s143
      %s146 = sphi 0, %s145
      %s160 = sphi 0, %s146
      %s164 = sphi 0, %s164
      %s166 = sphi 0, %s164
      %s167 = sphi 0, %s166
      %s181 = sphi 0, %s167
      %s185 = sphi 0, %s185
      %s187 = sphi 0, %s185
      %s188 = sphi 0, %s187
      %s202 = sphi 0, %s188
      %s206 = sphi 0, %s206
      %s208 = sphi 0, %s206
      %s209 = sphi 0, %s208
      %s223 = sphi 0, %s209
      %s231 = sphi 0, %s233
      %s234 = sphi 0, %s231
      %s235 = sphi 0, %s234
      %s251 = sphi 0, %s235
    $region4: #{tpu_custom_call.1} parent=1 // loop_header_branch
      %26 = sbr.rel (%p24) target = $region8
    $region5: #{tpu_custom_call.1} parent=1 // loop_body
      %s28 = ssub.s32 %s23, 1
      %s29 = ssub.s32 %s23, 2
      %s36 = sadd.s32 1, %s31
      %p37 = scmp.ge.s32.totalorder %s36, 2
      %s38 = scalar_select %p37, 0, %s36
      %s39 = sadd.s32 1, %s30
      %s40 = scalar_select %p37, %s39, %s30
      %p41 = scmp.ge.s32.totalorder %s40, 2
      %s42 = scalar_select %p41, 0, %s40
      %s43 = ssub.s32 %s30, %s42
      %s44 = ssub.s32 %s31, %s38
      %s45 = sor.u32 %s43, %s44
      %p46 = scmp.eq.s32.totalorder %s45, 0
      %s48 = sadd.s32 %s47, 1
      %s49 = scalar_select %p46, %s47, %s48
      %p52 = pneg %p46
      %p53 = scmp.eq.s32.totalorder %s23, 3
      %p54 = por %p52, %p53
      %p55 = scmp.ne.s32.totalorder %s47, %s50
      %p56 = scmp.eq.s32.totalorder %s23, 0
      %p57 = por %p55, %p56
      %p58 = scmp.ne.s32.totalorder %s47, %s50
      %p59 = scmp.eq.s32.totalorder %s28, 3
      %p60 = por %p58, %p59
      %p61 = scmp.ne.s32.totalorder %s50, %s51
      %p62 = scmp.eq.s32.totalorder %s28, 0
      %p63 = por %p61, %p62
      %p64 = scmp.ne.s32.totalorder %s50, %s51
      %p65 = scmp.eq.s32.totalorder %s29, 3
      %p66 = por %p64, %p65
      %p68 = scmp.ne.s32.totalorder %s51, %s67
      %p69 = scmp.eq.s32.totalorder %s29, 0
      %p70 = por %p68, %p69
      %s71 = smul.u32 %s31, 4
      %s72 = ssub.s32 %s71, 1
      %p73 = scmp.gt.s32.totalorder %s72, 0
      %s74 = scalar_select %p73, %s72, 0
      %s75 = smul.u32 %s38, 4
      %s76 = ssub.s32 %s75, 1
      %p77 = scmp.gt.s32.totalorder %s76, 0
      %s78 = scalar_select %p77, %s76, 0
      %s79 = ssub.s32 %s30, %s42
      %s80 = ssub.s32 %s74, %s78
      %s81 = sor.u32 %s79, %s80
      %p82 = scmp.eq.s32.totalorder %s81, 0
      %s84 = sadd.s32 %s83, 1
      %s85 = scalar_select %p82, %s83, %s84
      %p88 = pneg %p82
      %p89 = scmp.eq.s32.totalorder %s23, 3
      %p90 = por %p88, %p89
      %p91 = scmp.ne.s32.totalorder %s83, %s86
      %p92 = scmp.eq.s32.totalorder %s23, 0
      %p93 = por %p91, %p92
      %p94 = scmp.ne.s32.totalorder %s83, %s86
      %p95 = scmp.eq.s32.totalorder %s28, 3
      %p96 = por %p94, %p95
      %p97 = scmp.ne.s32.totalorder %s86, %s87
      %p98 = scmp.eq.s32.totalorder %s28, 0
      %p99 = por %p97, %p98
      %p100 = scmp.ne.s32.totalorder %s86, %s87
      %p101 = scmp.eq.s32.totalorder %s29, 3
      %p102 = por %p100, %p101
      %p104 = scmp.ne.s32.totalorder %s87, %s103
      %p105 = scmp.eq.s32.totalorder %s29, 0
      %p106 = por %p104, %p105
      %s107 = sadd.s32 %s31, 1
      %s108 = smul.u32 %s107, 4
      %p109 = scmp.lt.s32.totalorder %s108, 7
      %s110 = scalar_select %p109, %s108, 7
      %s111 = sadd.s32 %s38, 1
      %s112 = smul.u32 %s111, 4
      %p113 = scmp.lt.s32.totalorder %s112, 7
      %s114 = scalar_select %p113, %s112, 7
      %s115 = ssub.s32 %s30, %s42
      %s116 = ssub.s32 %s110, %s114
      %s117 = sor.u32 %s115, %s116
      %p118 = scmp.eq.s32.totalorder %s117, 0
      %s120 = sadd.s32 %s119, 1
      %s121 = scalar_select %p118, %s119, %s120
      %p124 = pneg %p118
      %p125 = scmp.eq.s32.totalorder %s23, 3
      %p126 = por %p124, %p125
      %p127 = scmp.ne.s32.totalorder %s119, %s122
      %p128 = scmp.eq.s32.totalorder %s23, 0
      %p129 = por %p127, %p128
      %p130 = scmp.ne.s32.totalorder %s119, %s122
      %p131 = scmp.eq.s32.totalorder %s28, 3
      %p132 = por %p130, %p131
      %p133 = scmp.ne.s32.totalorder %s122, %s123
      %p134 = scmp.eq.s32.totalorder %s28, 0
      %p135 = por %p133, %p134
      %p136 = scmp.ne.s32.totalorder %s122, %s123
      %p137 = scmp.eq.s32.totalorder %s29, 3
      %p138 = por %p136, %p137
      %p140 = scmp.ne.s32.totalorder %s123, %s139
      %p141 = scmp.eq.s32.totalorder %s29, 0
      %p142 = por %p140, %p141
      %s144 = sadd.s32 %s143, 1
      %p147 = scmp.eq.s32.totalorder %s23, 3
      %p148 = scmp.ne.s32.totalorder %s143, %s145
      %p149 = scmp.eq.s32.totalorder %s23, 0
      %p150 = por %p148, %p149
      %p151 = scmp.ne.s32.totalorder %s143, %s145
      %p152 = scmp.eq.s32.totalorder %s28, 3
      %p153 = por %p151, %p152
      %p154 = scmp.ne.s32.totalorder %s145, %s146
      %p155 = scmp.eq.s32.totalorder %s28, 0
      %p156 = por %p154, %p155
      %p157 = scmp.ne.s32.totalorder %s145, %s146
      %p158 = scmp.eq.s32.totalorder %s29, 3
      %p159 = por %p157, %p158
      %p161 = scmp.ne.s32.totalorder %s146, %s160
      %p162 = scmp.eq.s32.totalorder %s29, 0
      %p163 = por %p161, %p162
      %s165 = sadd.s32 %s164, 1
      %p168 = scmp.eq.s32.totalorder %s23, 3
      %p169 = scmp.ne.s32.totalorder %s164, %s166
      %p170 = scmp.eq.s32.totalorder %s23, 0
      %p171 = por %p169, %p170
      %p172 = scmp.ne.s32.totalorder %s164, %s166
      %p173 = scmp.eq.s32.totalorder %s28, 3
      %p174 = por %p172, %p173
      %p175 = scmp.ne.s32.totalorder %s166, %s167
      %p176 = scmp.eq.s32.totalorder %s28, 0
      %p177 = por %p175, %p176
      %p178 = scmp.ne.s32.totalorder %s166, %s167
      %p179 = scmp.eq.s32.totalorder %s29, 3
      %p180 = por %p178, %p179
      %p182 = scmp.ne.s32.totalorder %s167, %s181
      %p183 = scmp.eq.s32.totalorder %s29, 0
      %p184 = por %p182, %p183
      %s186 = sadd.s32 %s185, 1
      %p189 = scmp.eq.s32.totalorder %s23, 3
      %p190 = scmp.ne.s32.totalorder %s185, %s187
      %p191 = scmp.eq.s32.totalorder %s23, 0
      %p192 = por %p190, %p191
      %p193 = scmp.ne.s32.totalorder %s185, %s187
      %p194 = scmp.eq.s32.totalorder %s28, 3
      %p195 = por %p193, %p194
      %p196 = scmp.ne.s32.totalorder %s187, %s188
      %p197 = scmp.eq.s32.totalorder %s28, 0
      %p198 = por %p196, %p197
      %p199 = scmp.ne.s32.totalorder %s187, %s188
      %p200 = scmp.eq.s32.totalorder %s29, 3
      %p201 = por %p199, %p200
      %p203 = scmp.ne.s32.totalorder %s188, %s202
      %p204 = scmp.eq.s32.totalorder %s29, 0
      %p205 = por %p203, %p204
      %s207 = sadd.s32 %s206, 1
      %p210 = scmp.eq.s32.totalorder %s23, 3
      %p211 = scmp.ne.s32.totalorder %s206, %s208
      %p212 = scmp.eq.s32.totalorder %s23, 0
      %p213 = por %p211, %p212
      %p214 = scmp.ne.s32.totalorder %s206, %s208
      %p215 = scmp.eq.s32.totalorder %s28, 3
      %p216 = por %p214, %p215
      %p217 = scmp.ne.s32.totalorder %s208, %s209
      %p218 = scmp.eq.s32.totalorder %s28, 0
      %p219 = por %p217, %p218
      %p220 = scmp.ne.s32.totalorder %s208, %s209
      %p221 = scmp.eq.s32.totalorder %s29, 3
      %p222 = por %p220, %p221
      %p224 = scmp.ne.s32.totalorder %s209, %s223
      %p225 = scmp.eq.s32.totalorder %s29, 0
      %p226 = por %p224, %p225
      %s227 = ssub.s32 %s30, %s42
      %s228 = ssub.s32 %s31, %s38
      %s229 = sor.u32 %s227, %s228
      %p230 = scmp.eq.s32.totalorder %s229, 0
      %s232 = sadd.s32 %s231, 1
      %s233 = scalar_select %p230, %s231, %s232
      %p236 = pneg %p230
      %p237 = scmp.eq.s32.totalorder %s23, 3
      %p238 = por %p236, %p237
      %p239 = scmp.ne.s32.totalorder %s231, %s234
      %p240 = scmp.eq.s32.totalorder %s23, 0
      %p241 = por %p239, %p240
      %p242 = scmp.ne.s32.totalorder %s231, %s234
      %p243 = scmp.eq.s32.totalorder %s28, 3
      %p244 = por %p242, %p243
      %p245 = scmp.ne.s32.totalorder %s234, %s235
      %p246 = scmp.eq.s32.totalorder %s28, 0
      %p247 = por %p245, %p246
      %p248 = scmp.ne.s32.totalorder %s234, %s235
      %p249 = scmp.eq.s32.totalorder %s29, 3
      %p250 = por %p248, %p249
      %p252 = scmp.ne.s32.totalorder %s235, %s251
      %p253 = scmp.eq.s32.totalorder %s29, 0
      %p254 = por %p252, %p253
      %p255 = scmp.le.s32.totalorder 1, %s23
      %p256 = scmp.lt.s32.totalorder %s23, 5
      %p257 = pnand %p255, %p256
      %p258 = pneg %p257
      // Predicated region
      $region9: #{tpu_custom_call.1} parent=5 // pred_check
        _
      $region10: #{tpu_custom_call.1} parent=5 // pred_check_branch
        %260 = sbr.rel (%p257) target = $region12
      $region11: #{tpu_custom_call.1} parent=5 // pred_region
        %s261 = ssub.s32 %s23, 1
        // Predicated region
        $region13: #{tpu_custom_call.1} parent=11 // pred_check
          %p262 = pneg %p156
        $region14: #{tpu_custom_call.1} parent=11 // pred_check_branch
          %264 = sbr.rel (%p262) target = $region16
        $region15: #{tpu_custom_call.1} parent=11 // pred_region
          %266 = vsyncadd [#allocation11], 0
          %s267 = sshll.u32 %s3, 4
          %s268 = int_to_ptr.hbm [resolvable:$true] %s267
          %s269 = sshll.u32 [#allocation10], 4
          %s270 = int_to_ptr.vmem [resolvable:$true] %s269
          %275 = dma.hbm_to_vmem [thread:$0]  %s268, 18432, %s270, [#allocation11], 128, 128, 8
        $region16: #{tpu_custom_call.1} parent=11 // pred_fallthru
          _
        // Predicated region
        $region17: #{tpu_custom_call.1} parent=11 // pred_check
          %p276 = pneg %p177
        $region18: #{tpu_custom_call.1} parent=11 // pred_check_branch
          %278 = sbr.rel (%p276) target = $region20
        $region19: #{tpu_custom_call.1} parent=11 // pred_region
          _
        $region20: #{tpu_custom_call.1} parent=11 // pred_fallthru
          _
        // Predicated region
        $region21: #{tpu_custom_call.1} parent=11 // pred_check
          %p279 = pneg %p198
        $region22: #{tpu_custom_call.1} parent=11 // pred_check_branch
          %281 = sbr.rel (%p279) target = $region24
        $region23: #{tpu_custom_call.1} parent=11 // pred_region
          %283 = vsyncadd [#allocation11], 0
          %s284 = sshll.u32 %s5, 4
          %s285 = int_to_ptr.hbm [resolvable:$true] %s284
          %s286 = sshll.u32 [#allocation12], 4
          %s287 = int_to_ptr.vmem [resolvable:$true] %s286
          %292 = dma.hbm_to_vmem [thread:$0]  %s285, 18432, %s287, [#allocation11], 128, 128, 8
        $region24: #{tpu_custom_call.1} parent=11 // pred_fallthru
          _
        // Predicated region
        $region25: #{tpu_custom_call.1} parent=11 // pred_check
          %p293 = pneg %p219
        $region26: #{tpu_custom_call.1} parent=11 // pred_check_branch
          %295 = sbr.rel (%p293) target = $region28
        $region27: #{tpu_custom_call.1} parent=11 // pred_region
          _
        $region28: #{tpu_custom_call.1} parent=11 // pred_fallthru
          _
      $region12: #{tpu_custom_call.1} parent=5 // pred_fallthru
        _
      %p296 = scmp.lt.s32.totalorder %s23, 4
      // Predicated region
      $region29: #{tpu_custom_call.1} parent=5 // pred_check
        %p297 = pneg %p296
      $region30: #{tpu_custom_call.1} parent=5 // pred_check_branch
        %299 = sbr.rel (%p297) target = $region32
      $region31: #{tpu_custom_call.1} parent=5 // pred_region
        // Predicated region
        $region33: #{tpu_custom_call.1} parent=31 // pred_check
          %p300 = pneg %p57
        $region34: #{tpu_custom_call.1} parent=31 // pred_check_branch
          %302 = sbr.rel (%p300) target = $region36
        $region35: #{tpu_custom_call.1} parent=31 // pred_region
          %s303 = sand.u32 %s47, 1
          %s304 = scalar_lea.sflag [#allocation5], %s303
          %s305 = sand.u32 %s47, 1
          %s306 = smul.addr %s305, 128
          %s307 = scalar_lea.vmem [#allocation4], %s306
          %s308 = smul.u32 8, %s31
          %310 = vsyncadd %s304, 0
          %s311 = smul.addr %s308, 2
          %s312 = smul.addr %s30, 32
          %s313 = sadd.s32 %s311, %s312
          %s314 = smul.addr %s313, 8
          %s315 = scalar_lea.hbm %s0, %s314
          %s316 = sshll.u32 %s315, 4
          %s317 = int_to_ptr.hbm [resolvable:$true] %s316
          %s318 = sshll.u32 %s307, 4
          %s319 = int_to_ptr.vmem [resolvable:$true] %s318
          %324 = dma.hbm_to_vmem [thread:$0]  %s317, 2048, %s319, %s304, 128, 128, 8
        $region36: #{tpu_custom_call.1} parent=31 // pred_fallthru
          _
        // Predicated region
        $region37: #{tpu_custom_call.1} parent=31 // pred_check
          %p325 = pneg %p93
        $region38: #{tpu_custom_call.1} parent=31 // pred_check_branch
          %327 = sbr.rel (%p325) target = $region40
        $region39: #{tpu_custom_call.1} parent=31 // pred_region
          %s328 = sand.u32 %s23, 1
          %s329 = scalar_lea.sflag [#allocation8], %s328
          %s330 = sand.u32 %s83, 1
          %s331 = smul.addr %s330, 32
          %s332 = scalar_lea.vmem [#allocation7], %s331
          %s333 = smul.u32 %s31, 4
          %s334 = ssub.s32 %s333, 1
          %p335 = scmp.gt.s32.totalorder %s334, 0
          %s336 = scalar_select %p335, %s334, 0
          %s337 = smul.u32 2, %s336
          %339 = vsyncadd %s329, 0
          %s340 = smul.addr %s337, 2
          %s341 = smul.addr %s30, 32
          %s342 = sadd.s32 %s340, %s341
          %s343 = smul.addr %s342, 8
          %s344 = scalar_lea.hbm %s1, %s343
          %s345 = sshll.u32 %s344, 4
          %s346 = int_to_ptr.hbm [resolvable:$true] %s345
          %s347 = sshll.u32 %s332, 4
          %s348 = int_to_ptr.vmem [resolvable:$true] %s347
          %353 = dma.hbm_to_vmem [thread:$0]  %s346, 512, %s348, %s329, 128, 128, 8
        $region40: #{tpu_custom_call.1} parent=31 // pred_fallthru
          _
        // Predicated region
        $region41: #{tpu_custom_call.1} parent=31 // pred_check
          %p354 = pneg %p129
        $region42: #{tpu_custom_call.1} parent=31 // pred_check_branch
          %356 = sbr.rel (%p354) target = $region44
        $region43: #{tpu_custom_call.1} parent=31 // pred_region
          %s357 = sand.u32 %s23, 1
          %s358 = scalar_lea.sflag [#allocation8], %s357
          %s359 = sand.u32 %s119, 1
          %s360 = smul.addr %s359, 32
          %s361 = scalar_lea.vmem [#allocation9], %s360
          %s362 = sadd.s32 %s31, 1
          %s363 = smul.u32 %s362, 4
          %p364 = scmp.lt.s32.totalorder %s363, 7
          %s365 = scalar_select %p364, %s363, 7
          %s366 = smul.u32 2, %s365
          %368 = vsyncadd %s358, 0
          %s369 = smul.addr %s366, 2
          %s370 = smul.addr %s30, 32
          %s371 = sadd.s32 %s369, %s370
          %s372 = smul.addr %s371, 8
          %s373 = scalar_lea.hbm %s2, %s372
          %s374 = sshll.u32 %s373, 4
          %s375 = int_to_ptr.hbm [resolvable:$true] %s374
          %s376 = sshll.u32 %s361, 4
          %s377 = int_to_ptr.vmem [resolvable:$true] %s376
          %382 = dma.hbm_to_vmem [thread:$0]  %s375, 512, %s377, %s358, 128, 128, 8
        $region44: #{tpu_custom_call.1} parent=31 // pred_fallthru
          _
      $region32: #{tpu_custom_call.1} parent=5 // pred_fallthru
        _
      %p383 = scmp.le.s32.totalorder 1, %s23
      %p384 = scmp.lt.s32.totalorder %s23, 5
      %p385 = pnand %p383, %p384
      %p386 = pneg %p385
      // Predicated region
      $region45: #{tpu_custom_call.1} parent=5 // pred_check
        _
      $region46: #{tpu_custom_call.1} parent=5 // pred_check_branch
        %388 = sbr.rel (%p385) target = $region48
      $region47: #{tpu_custom_call.1} parent=5 // pred_region
        %s389 = ssub.s32 %s23, 1
        %s390 = sand.u32 %s50, 1
        %s391 = scalar_lea.sflag [#allocation5], %s390
        %s392 = sand.u32 %s50, 1
        %s393 = smul.addr %s392, 128
        %s394 = scalar_lea.vmem [#allocation4], %s393
        // Predicated region
        $region49: #{tpu_custom_call.1} parent=47 // pred_check
          %p395 = pneg %p63
        $region50: #{tpu_custom_call.1} parent=47 // pred_check_branch
          %397 = sbr.rel (%p395) target = $region52
        $region51: #{tpu_custom_call.1} parent=47 // pred_region
          %399 = dma.done %s391, 2048
        $region52: #{tpu_custom_call.1} parent=47 // pred_fallthru
          _
        %s400 = sand.u32 %s28, 1
        %s401 = scalar_lea.sflag [#allocation8], %s400
        %s402 = sand.u32 %s86, 1
        %s403 = smul.addr %s402, 32
        %s404 = scalar_lea.vmem [#allocation7], %s403
        // Predicated region
        $region53: #{tpu_custom_call.1} parent=47 // pred_check
          %p405 = pneg %p99
        $region54: #{tpu_custom_call.1} parent=47 // pred_check_branch
          %407 = sbr.rel (%p405) target = $region56
        $region55: #{tpu_custom_call.1} parent=47 // pred_region
          %409 = dma.done %s401, 512
        $region56: #{tpu_custom_call.1} parent=47 // pred_fallthru
          _
        %s410 = sand.u32 %s28, 1
        %s411 = scalar_lea.sflag [#allocation8], %s410
        %s412 = sand.u32 %s122, 1
        %s413 = smul.addr %s412, 32
        %s414 = scalar_lea.vmem [#allocation9], %s413
        // Predicated region
        $region57: #{tpu_custom_call.1} parent=47 // pred_check
          %p415 = pneg %p135
        $region58: #{tpu_custom_call.1} parent=47 // pred_check_branch
          %417 = sbr.rel (%p415) target = $region60
        $region59: #{tpu_custom_call.1} parent=47 // pred_region
          %419 = dma.done %s411, 512
        $region60: #{tpu_custom_call.1} parent=47 // pred_fallthru
          _
        // Predicated region
        $region61: #{tpu_custom_call.1} parent=47 // pred_check
          %p420 = pneg %p156
        $region62: #{tpu_custom_call.1} parent=47 // pred_check_branch
          %422 = sbr.rel (%p420) target = $region64
        $region63: #{tpu_custom_call.1} parent=47 // pred_region
          %424 = dma.done [#allocation11], 18432
        $region64: #{tpu_custom_call.1} parent=47 // pred_fallthru
          _
        // Predicated region
        $region65: #{tpu_custom_call.1} parent=47 // pred_check
          %p425 = pneg %p198
        $region66: #{tpu_custom_call.1} parent=47 // pred_check_branch
          %427 = sbr.rel (%p425) target = $region68
        $region67: #{tpu_custom_call.1} parent=47 // pred_region
          %429 = dma.done [#allocation11], 18432
        $region68: #{tpu_custom_call.1} parent=47 // pred_fallthru
          _
        %s430 = sand.u32 %s50, 1
        %s431 = scalar_lea.sflag [#allocation5], %s430
        %s432 = sand.u32 %s50, 1
        %s433 = smul.addr %s432, 128
        %s434 = scalar_lea.vmem [#allocation4], %s433
        %p435 = pneg %p63
        %p436 = pneg %p60
        %s437 = sand.u32 %s28, 1
        %s438 = scalar_lea.sflag [#allocation8], %s437
        %s439 = sand.u32 %s86, 1
        %s440 = smul.addr %s439, 32
        %s441 = scalar_lea.vmem [#allocation7], %s440
        %p442 = pneg %p99
        %p443 = pneg %p96
        %s444 = sand.u32 %s28, 1
        %s445 = scalar_lea.sflag [#allocation8], %s444
        %s446 = sand.u32 %s122, 1
        %s447 = smul.addr %s446, 32
        %s448 = scalar_lea.vmem [#allocation9], %s447
        %p449 = pneg %p135
        %p450 = pneg %p132
        %p451 = pneg %p156
        %p452 = pneg %p153
        %p453 = pneg %p177
        %p454 = pneg %p174
        %p455 = pneg %p198
        %p456 = pneg %p195
        %p457 = pneg %p219
        %p458 = pneg %p216
        %p459 = pneg %p247
        %p460 = pneg %p244
        %s461 = sand.u32 %s234, 1
        %s462 = scalar_lea.sflag [#allocation6], %s461
        %s463 = sand.u32 %s234, 1
        %s464 = smul.addr %s463, 128
        %s465 = scalar_lea.vmem [#allocation13], %s464
        %s466 = smul.u32 8, %s33
        %s467 = smul.u32 %s33, 4
        %s468 = ssub.s32 %s467, 1
        %p469 = scmp.gt.s32.totalorder %s468, 0
        %s470 = scalar_select %p469, %s468, 0
        %s471 = smul.u32 2, %s470
        %s472 = sadd.s32 %s33, 1
        %s473 = smul.u32 %s472, 4
        %p474 = scmp.lt.s32.totalorder %s473, 7
        %s475 = scalar_select %p474, %s473, 7
        %s476 = smul.u32 2, %s475
        %s477 = smul.u32 8, %s33
        %v478 = vld [vmem:[%s394] sm:$0xff]
        %v479 = vld [vmem:[%s394 + $0x8] sm:$0xff]
        %v480 = vld [vmem:[%s394 + $0x10] sm:$0xff]
        %v481 = vld [vmem:[%s394 + $0x18] sm:$0xff]
        %v482 = vld [vmem:[%s394 + $0x20] sm:$0xff]
        %v483 = vld [vmem:[%s394 + $0x28] sm:$0xff]
        %v484 = vld [vmem:[%s394 + $0x30] sm:$0xff]
        %v485 = vld [vmem:[%s394 + $0x38] sm:$0xff]
        %v486 = vld [vmem:[%s394 + $0x40] sm:$0xff]
        %v487 = vld [vmem:[%s394 + $0x48] sm:$0xff]
        %v488 = vld [vmem:[%s394 + $0x50] sm:$0xff]
        %v489 = vld [vmem:[%s394 + $0x58] sm:$0xff]
        %v490 = vld [vmem:[%s394 + $0x60] sm:$0xff]
        %v491 = vld [vmem:[%s394 + $0x68] sm:$0xff]
        %v492 = vld [vmem:[%s394 + $0x70] sm:$0xff]
        %v493 = vld [vmem:[%s394 + $0x78] sm:$0xff]
        %s494 = scalar_lea.vmem [#allocation2], 48
        %495 = vst [vmem:[%s494 + $0x1] sm:$0xff] %v478
        %496 = vst [vmem:[%s494 + $0x9] sm:$0xff] %v479
        %497 = vst [vmem:[%s494 + $0x19] sm:$0xff] %v480
        %498 = vst [vmem:[%s494 + $0x21] sm:$0xff] %v481
        %499 = vst [vmem:[%s494 + $0x31] sm:$0xff] %v482
        %500 = vst [vmem:[%s494 + $0x39] sm:$0xff] %v483
        %501 = vst [vmem:[%s494 + $0x49] sm:$0xff] %v484
        %502 = vst [vmem:[%s494 + $0x51] sm:$0xff] %v485
        %503 = vst [vmem:[%s494 + $0x61] sm:$0xff] %v486
        %504 = vst [vmem:[%s494 + $0x69] sm:$0xff] %v487
        %505 = vst [vmem:[%s494 + $0x79] sm:$0xff] %v488
        %506 = vst [vmem:[%s494 + $0x81] sm:$0xff] %v489
        %507 = vst [vmem:[%s494 + $0x91] sm:$0xff] %v490
        %508 = vst [vmem:[%s494 + $0x99] sm:$0xff] %v491
        %509 = vst [vmem:[%s494 + $0xa9] sm:$0xff] %v492
        %510 = vst [vmem:[%s494 + $0xb1] sm:$0xff] %v493
        %v511 = vld [vmem:[%s404] sm:$0xff]
        %v512 = vld [vmem:[%s404 + $0x8] sm:$0xff]
        %v513 = vld [vmem:[%s404 + $0x10] sm:$0xff]
        %v514 = vld [vmem:[%s404 + $0x18] sm:$0xff]
        %515 = vst [vmem:[#allocation2 + $0x1] sm:$0xff] %v511
        %516 = vst [vmem:[#allocation2 + $0x9] sm:$0xff] %v512
        %517 = vst [vmem:[#allocation2 + $0x19] sm:$0xff] %v513
        %518 = vst [vmem:[#allocation2 + $0x21] sm:$0xff] %v514
        %v519 = vld [vmem:[%s414] sm:$0xff]
        %v520 = vld [vmem:[%s414 + $0x8] sm:$0xff]
        %v521 = vld [vmem:[%s414 + $0x10] sm:$0xff]
        %v522 = vld [vmem:[%s414 + $0x18] sm:$0xff]
        %s523 = scalar_lea.vmem [#allocation2], 240
        %524 = vst [vmem:[%s523 + $0x1] sm:$0xff] %v519
        %525 = vst [vmem:[%s523 + $0x9] sm:$0xff] %v520
        %526 = vst [vmem:[%s523 + $0x19] sm:$0xff] %v521
        %527 = vst [vmem:[%s523 + $0x21] sm:$0xff] %v522
        %528 = vst [vmem:[#allocation2] sm:$0x1] 0.0
        %529 = vst [vmem:[#allocation2 + $0x18] sm:$0x1] 0.0
        %530 = vst [vmem:[#allocation2 + $0x30] sm:$0x1] 0.0
        %531 = vst [vmem:[#allocation2 + $0x48] sm:$0x1] 0.0
        %532 = vst [vmem:[#allocation2 + $0x60] sm:$0x1] 0.0
        %533 = vst [vmem:[#allocation2 + $0x78] sm:$0x1] 0.0
        %534 = vst [vmem:[#allocation2 + $0x90] sm:$0x1] 0.0
        %535 = vst [vmem:[#allocation2 + $0xa8] sm:$0x1] 0.0
        %536 = vst [vmem:[#allocation2 + $0xc0] sm:$0x1] 0.0
        %537 = vst [vmem:[#allocation2 + $0xd8] sm:$0x1] 0.0
        %538 = vst [vmem:[#allocation2 + $0xf0] sm:$0x1] 0.0
        %539 = vst [vmem:[#allocation2 + $0x108] sm:$0x1] 0.0
        %540 = vst [vmem:[#allocation2 + $0x11] sm:$0x1] 0.0
        %541 = vst [vmem:[#allocation2 + $0x29] sm:$0x1] 0.0
        %542 = vst [vmem:[#allocation2 + $0x41] sm:$0x1] 0.0
        %543 = vst [vmem:[#allocation2 + $0x59] sm:$0x1] 0.0
        %544 = vst [vmem:[#allocation2 + $0x71] sm:$0x1] 0.0
        %545 = vst [vmem:[#allocation2 + $0x89] sm:$0x1] 0.0
        %546 = vst [vmem:[#allocation2 + $0xa1] sm:$0x1] 0.0
        %547 = vst [vmem:[#allocation2 + $0xb9] sm:$0x1] 0.0
        %548 = vst [vmem:[#allocation2 + $0xd1] sm:$0x1] 0.0
        %549 = vst [vmem:[#allocation2 + $0xe9] sm:$0x1] 0.0
        %550 = vst [vmem:[#allocation2 + $0x101] sm:$0x1] 0.0
        %551 = vst [vmem:[#allocation2 + $0x119] sm:$0x1] 0.0
        %p552 = scmp.eq.s32.totalorder %s33, 0
        // Predicated region
        $region69: #{tpu_custom_call.1} parent=47 // pred_check
          %p553 = pneg %p552
        $region70: #{tpu_custom_call.1} parent=47 // pred_check_branch
          %555 = sbr.rel (%p553) target = $region72
        $region71: #{tpu_custom_call.1} parent=47 // pred_region
          %556 = vst [vmem:[#allocation2] sm:$0xff] 0.0
          %557 = vst [vmem:[#allocation2 + $0x8] sm:$0xff] 0.0
          %558 = vst [vmem:[#allocation2 + $0x10] sm:$0x3] 0.0
          %559 = vst [vmem:[#allocation2 + $0x18] sm:$0xff] 0.0
          %560 = vst [vmem:[#allocation2 + $0x20] sm:$0xff] 0.0
          %561 = vst [vmem:[#allocation2 + $0x28] sm:$0x3] 0.0
        $region72: #{tpu_custom_call.1} parent=47 // pred_fallthru
          _
        %p562 = scmp.eq.s32.totalorder %s33, 1
        // Predicated region
        $region73: #{tpu_custom_call.1} parent=47 // pred_check
          %p563 = pneg %p562
        $region74: #{tpu_custom_call.1} parent=47 // pred_check_branch
          %565 = sbr.rel (%p563) target = $region76
        $region75: #{tpu_custom_call.1} parent=47 // pred_region
          %566 = vst [vmem:[%s523] sm:$0xff] 0.0
          %567 = vst [vmem:[%s523 + $0x8] sm:$0xff] 0.0
          %568 = vst [vmem:[%s523 + $0x10] sm:$0x3] 0.0
          %569 = vst [vmem:[%s523 + $0x18] sm:$0xff] 0.0
          %570 = vst [vmem:[%s523 + $0x20] sm:$0xff] 0.0
          %571 = vst [vmem:[%s523 + $0x28] sm:$0x3] 0.0
        $region76: #{tpu_custom_call.1} parent=47 // pred_fallthru
          _
        %v572 = vld [vmem:[#allocation2] sm:$0xff]
        %v573 = vld [vmem:[#allocation2 + $0x8] sm:$0xff]
        %v574 = vld [vmem:[#allocation2 + $0x18] sm:$0xff]
        %v575 = vld [vmem:[#allocation2 + $0x20] sm:$0xff]
        %v576 = vld [vmem:[#allocation2 + $0x30] sm:$0xff]
        %v577 = vld [vmem:[#allocation2 + $0x38] sm:$0xff]
        %v578 = vld [vmem:[#allocation2 + $0x48] sm:$0xff]
        %v579 = vld [vmem:[#allocation2 + $0x50] sm:$0xff]
        %v580 = vld [vmem:[#allocation2 + $0x60] sm:$0xff]
        %v581 = vld [vmem:[#allocation2 + $0x68] sm:$0xff]
        %v582 = vld [vmem:[#allocation2 + $0x78] sm:$0xff]
        %v583 = vld [vmem:[#allocation2 + $0x80] sm:$0xff]
        %v584 = vld [vmem:[#allocation2 + $0x90] sm:$0xff]
        %v585 = vld [vmem:[#allocation2 + $0x98] sm:$0xff]
        %v586 = vld [vmem:[#allocation2 + $0xa8] sm:$0xff]
        %v587 = vld [vmem:[#allocation2 + $0xb0] sm:$0xff]
        %v588 = vld [vmem:[#allocation2 + $0xc0] sm:$0xff]
        %v589 = vld [vmem:[#allocation2 + $0xc8] sm:$0xff]
        %v590 = vld [vmem:[#allocation2 + $0xd8] sm:$0xff]
        %v591 = vld [vmem:[#allocation2 + $0xe0] sm:$0xff]
        %v592 = vld [vmem:[#allocation2 + $0x1] sm:$0xff]
        %v593 = vld [vmem:[#allocation2 + $0x9] sm:$0xff]
        %v594 = vld [vmem:[#allocation2 + $0x19] sm:$0xff]
        %v595 = vld [vmem:[#allocation2 + $0x21] sm:$0xff]
        %v596 = vld [vmem:[#allocation2 + $0x31] sm:$0xff]
        %v597 = vld [vmem:[#allocation2 + $0x39] sm:$0xff]
        %v598 = vld [vmem:[#allocation2 + $0x49] sm:$0xff]
        %v599 = vld [vmem:[#allocation2 + $0x51] sm:$0xff]
        %v600 = vld [vmem:[#allocation2 + $0x61] sm:$0xff]
        %v601 = vld [vmem:[#allocation2 + $0x69] sm:$0xff]
        %v602 = vld [vmem:[#allocation2 + $0x79] sm:$0xff]
        %v603 = vld [vmem:[#allocation2 + $0x81] sm:$0xff]
        %v604 = vld [vmem:[#allocation2 + $0x91] sm:$0xff]
        %v605 = vld [vmem:[#allocation2 + $0x99] sm:$0xff]
        %v606 = vld [vmem:[#allocation2 + $0xa9] sm:$0xff]
        %v607 = vld [vmem:[#allocation2 + $0xb1] sm:$0xff]
        %v608 = vld [vmem:[#allocation2 + $0xc1] sm:$0xff]
        %v609 = vld [vmem:[#allocation2 + $0xc9] sm:$0xff]
        %v610 = vld [vmem:[#allocation2 + $0xd9] sm:$0xff]
        %v611 = vld [vmem:[#allocation2 + $0xe1] sm:$0xff]
        %v612 = vld [vmem:[#allocation2 + $0x2] sm:$0xff]
        %v613 = vld [vmem:[#allocation2 + $0xa] sm:$0xff]
        %v614 = vld [vmem:[#allocation2 + $0x1a] sm:$0xff]
        %v615 = vld [vmem:[#allocation2 + $0x22] sm:$0xff]
        %v616 = vld [vmem:[#allocation2 + $0x32] sm:$0xff]
        %v617 = vld [vmem:[#allocation2 + $0x3a] sm:$0xff]
        %v618 = vld [vmem:[#allocation2 + $0x4a] sm:$0xff]
        %v619 = vld [vmem:[#allocation2 + $0x52] sm:$0xff]
        %v620 = vld [vmem:[#allocation2 + $0x62] sm:$0xff]
        %v621 = vld [vmem:[#allocation2 + $0x6a] sm:$0xff]
        %v622 = vld [vmem:[#allocation2 + $0x7a] sm:$0xff]
        %v623 = vld [vmem:[#allocation2 + $0x82] sm:$0xff]
        %v624 = vld [vmem:[#allocation2 + $0x92] sm:$0xff]
        %v625 = vld [vmem:[#allocation2 + $0x9a] sm:$0xff]
        %v626 = vld [vmem:[#allocation2 + $0xaa] sm:$0xff]
        %v627 = vld [vmem:[#allocation2 + $0xb2] sm:$0xff]
        %v628 = vld [vmem:[#allocation2 + $0xc2] sm:$0xff]
        %v629 = vld [vmem:[#allocation2 + $0xca] sm:$0xff]
        %v630 = vld [vmem:[#allocation2 + $0xda] sm:$0xff]
        %v631 = vld [vmem:[#allocation2 + $0xe2] sm:$0xff]
        %s632 = scalar_lea.vmem [#allocation2], 24
        %v633 = vld [vmem:[%s632] sm:$0xff]
        %v634 = vld [vmem:[%s632 + $0x8] sm:$0xff]
        %v635 = vld [vmem:[%s632 + $0x18] sm:$0xff]
        %v636 = vld [vmem:[%s632 + $0x20] sm:$0xff]
        %v637 = vld [vmem:[%s632 + $0x30] sm:$0xff]
        %v638 = vld [vmem:[%s632 + $0x38] sm:$0xff]
        %v639 = vld [vmem:[%s632 + $0x48] sm:$0xff]
        %v640 = vld [vmem:[%s632 + $0x50] sm:$0xff]
        %v641 = vld [vmem:[%s632 + $0x60] sm:$0xff]
        %v642 = vld [vmem:[%s632 + $0x68] sm:$0xff]
        %v643 = vld [vmem:[%s632 + $0x78] sm:$0xff]
        %v644 = vld [vmem:[%s632 + $0x80] sm:$0xff]
        %v645 = vld [vmem:[%s632 + $0x90] sm:$0xff]
        %v646 = vld [vmem:[%s632 + $0x98] sm:$0xff]
        %v647 = vld [vmem:[%s632 + $0xa8] sm:$0xff]
        %v648 = vld [vmem:[%s632 + $0xb0] sm:$0xff]
        %v649 = vld [vmem:[%s632 + $0xc0] sm:$0xff]
        %v650 = vld [vmem:[%s632 + $0xc8] sm:$0xff]
        %v651 = vld [vmem:[%s632 + $0xd8] sm:$0xff]
        %v652 = vld [vmem:[%s632 + $0xe0] sm:$0xff]
        %v653 = vld [vmem:[%s632 + $0x1] sm:$0xff]
        %v654 = vld [vmem:[%s632 + $0x9] sm:$0xff]
        %v655 = vld [vmem:[%s632 + $0x19] sm:$0xff]
        %v656 = vld [vmem:[%s632 + $0x21] sm:$0xff]
        %v657 = vld [vmem:[%s632 + $0x31] sm:$0xff]
        %v658 = vld [vmem:[%s632 + $0x39] sm:$0xff]
        %v659 = vld [vmem:[%s632 + $0x49] sm:$0xff]
        %v660 = vld [vmem:[%s632 + $0x51] sm:$0xff]
        %v661 = vld [vmem:[%s632 + $0x61] sm:$0xff]
        %v662 = vld [vmem:[%s632 + $0x69] sm:$0xff]
        %v663 = vld [vmem:[%s632 + $0x79] sm:$0xff]
        %v664 = vld [vmem:[%s632 + $0x81] sm:$0xff]
        %v665 = vld [vmem:[%s632 + $0x91] sm:$0xff]
        %v666 = vld [vmem:[%s632 + $0x99] sm:$0xff]
        %v667 = vld [vmem:[%s632 + $0xa9] sm:$0xff]
        %v668 = vld [vmem:[%s632 + $0xb1] sm:$0xff]
        %v669 = vld [vmem:[%s632 + $0xc1] sm:$0xff]
        %v670 = vld [vmem:[%s632 + $0xc9] sm:$0xff]
        %v671 = vld [vmem:[%s632 + $0xd9] sm:$0xff]
        %v672 = vld [vmem:[%s632 + $0xe1] sm:$0xff]
        %v673 = vld [vmem:[%s632 + $0x2] sm:$0xff]
        %v674 = vld [vmem:[%s632 + $0xa] sm:$0xff]
        %v675 = vld [vmem:[%s632 + $0x1a] sm:$0xff]
        %v676 = vld [vmem:[%s632 + $0x22] sm:$0xff]
        %v677 = vld [vmem:[%s632 + $0x32] sm:$0xff]
        %v678 = vld [vmem:[%s632 + $0x3a] sm:$0xff]
        %v679 = vld [vmem:[%s632 + $0x4a] sm:$0xff]
        %v680 = vld [vmem:[%s632 + $0x52] sm:$0xff]
        %v681 = vld [vmem:[%s632 + $0x62] sm:$0xff]
        %v682 = vld [vmem:[%s632 + $0x6a] sm:$0xff]
        %v683 = vld [vmem:[%s632 + $0x7a] sm:$0xff]
        %v684 = vld [vmem:[%s632 + $0x82] sm:$0xff]
        %v685 = vld [vmem:[%s632 + $0x92] sm:$0xff]
        %v686 = vld [vmem:[%s632 + $0x9a] sm:$0xff]
        %v687 = vld [vmem:[%s632 + $0xaa] sm:$0xff]
        %v688 = vld [vmem:[%s632 + $0xb2] sm:$0xff]
        %v689 = vld [vmem:[%s632 + $0xc2] sm:$0xff]
        %v690 = vld [vmem:[%s632 + $0xca] sm:$0xff]
        %v691 = vld [vmem:[%s632 + $0xda] sm:$0xff]
        %v692 = vld [vmem:[%s632 + $0xe2] sm:$0xff]
        %v693 = vld [vmem:[%s494] sm:$0xff]
        %v694 = vld [vmem:[%s494 + $0x8] sm:$0xff]
        %v695 = vld [vmem:[%s494 + $0x18] sm:$0xff]
        %v696 = vld [vmem:[%s494 + $0x20] sm:$0xff]
        %v697 = vld [vmem:[%s494 + $0x30] sm:$0xff]
        %v698 = vld [vmem:[%s494 + $0x38] sm:$0xff]
        %v699 = vld [vmem:[%s494 + $0x48] sm:$0xff]
        %v700 = vld [vmem:[%s494 + $0x50] sm:$0xff]
        %v701 = vld [vmem:[%s494 + $0x60] sm:$0xff]
        %v702 = vld [vmem:[%s494 + $0x68] sm:$0xff]
        %v703 = vld [vmem:[%s494 + $0x78] sm:$0xff]
        %v704 = vld [vmem:[%s494 + $0x80] sm:$0xff]
        %v705 = vld [vmem:[%s494 + $0x90] sm:$0xff]
        %v706 = vld [vmem:[%s494 + $0x98] sm:$0xff]
        %v707 = vld [vmem:[%s494 + $0xa8] sm:$0xff]
        %v708 = vld [vmem:[%s494 + $0xb0] sm:$0xff]
        %v709 = vld [vmem:[%s494 + $0xc0] sm:$0xff]
        %v710 = vld [vmem:[%s494 + $0xc8] sm:$0xff]
        %v711 = vld [vmem:[%s494 + $0xd8] sm:$0xff]
        %v712 = vld [vmem:[%s494 + $0xe0] sm:$0xff]
        %v713 = vld [vmem:[%s494 + $0x1] sm:$0xff]
        %v714 = vld [vmem:[%s494 + $0x9] sm:$0xff]
        %v715 = vld [vmem:[%s494 + $0x19] sm:$0xff]
        %v716 = vld [vmem:[%s494 + $0x21] sm:$0xff]
        %v717 = vld [vmem:[%s494 + $0x31] sm:$0xff]
        %v718 = vld [vmem:[%s494 + $0x39] sm:$0xff]
        %v719 = vld [vmem:[%s494 + $0x49] sm:$0xff]
        %v720 = vld [vmem:[%s494 + $0x51] sm:$0xff]
        %v721 = vld [vmem:[%s494 + $0x61] sm:$0xff]
        %v722 = vld [vmem:[%s494 + $0x69] sm:$0xff]
        %v723 = vld [vmem:[%s494 + $0x79] sm:$0xff]
        %v724 = vld [vmem:[%s494 + $0x81] sm:$0xff]
        %v725 = vld [vmem:[%s494 + $0x91] sm:$0xff]
        %v726 = vld [vmem:[%s494 + $0x99] sm:$0xff]
        %v727 = vld [vmem:[%s494 + $0xa9] sm:$0xff]
        %v728 = vld [vmem:[%s494 + $0xb1] sm:$0xff]
        %v729 = vld [vmem:[%s494 + $0xc1] sm:$0xff]
        %v730 = vld [vmem:[%s494 + $0xc9] sm:$0xff]
        %v731 = vld [vmem:[%s494 + $0xd9] sm:$0xff]
        %v732 = vld [vmem:[%s494 + $0xe1] sm:$0xff]
        %v733 = vld [vmem:[%s494 + $0x2] sm:$0xff]
        %v734 = vld [vmem:[%s494 + $0xa] sm:$0xff]
        %v735 = vld [vmem:[%s494 + $0x1a] sm:$0xff]
        %v736 = vld [vmem:[%s494 + $0x22] sm:$0xff]
        %v737 = vld [vmem:[%s494 + $0x32] sm:$0xff]
        %v738 = vld [vmem:[%s494 + $0x3a] sm:$0xff]
        %v739 = vld [vmem:[%s494 + $0x4a] sm:$0xff]
        %v740 = vld [vmem:[%s494 + $0x52] sm:$0xff]
        %v741 = vld [vmem:[%s494 + $0x62] sm:$0xff]
        %v742 = vld [vmem:[%s494 + $0x6a] sm:$0xff]
        %v743 = vld [vmem:[%s494 + $0x7a] sm:$0xff]
        %v744 = vld [vmem:[%s494 + $0x82] sm:$0xff]
        %v745 = vld [vmem:[%s494 + $0x92] sm:$0xff]
        %v746 = vld [vmem:[%s494 + $0x9a] sm:$0xff]
        %v747 = vld [vmem:[%s494 + $0xaa] sm:$0xff]
        %v748 = vld [vmem:[%s494 + $0xb2] sm:$0xff]
        %v749 = vld [vmem:[%s494 + $0xc2] sm:$0xff]
        %v750 = vld [vmem:[%s494 + $0xca] sm:$0xff]
        %v751 = vld [vmem:[%s494 + $0xda] sm:$0xff]
        %v752 = vld [vmem:[%s494 + $0xe2] sm:$0xff]
        %v753 = vld [vmem:[#allocation10] sm:$0xff]
        %v754 = vld [vmem:[#allocation10 + $0x8] sm:$0xff]
        %v755 = vld [vmem:[#allocation10 + $0x10] sm:$0xff]
        %v756 = vld [vmem:[#allocation10 + $0x18] sm:$0xff]
        %v757 = vld [vmem:[#allocation10 + $0x20] sm:$0xff]
        %v758 = vld [vmem:[#allocation10 + $0x28] sm:$0xff]
        %v759 = vld [vmem:[#allocation10 + $0x30] sm:$0xff]
        %v760 = vld [vmem:[#allocation10 + $0x38] sm:$0xff]
        %v761 = vld [vmem:[#allocation10 + $0x40] sm:$0xff]
        %v762 = vld [vmem:[#allocation10 + $0x48] sm:$0xff]
        %v763 = vld [vmem:[#allocation10 + $0x50] sm:$0xff]
        %v764 = vld [vmem:[#allocation10 + $0x58] sm:$0xff]
        %v765 = vld [vmem:[#allocation10 + $0x60] sm:$0xff]
        %v766 = vld [vmem:[#allocation10 + $0x68] sm:$0xff]
        %v767 = vld [vmem:[#allocation10 + $0x70] sm:$0xff]
        %v768 = vld [vmem:[#allocation10 + $0x78] sm:$0xff]
        %v769 = vld [vmem:[#allocation10 + $0x80] sm:$0xff]
        %v770 = vld [vmem:[#allocation10 + $0x88] sm:$0xff]
        %v771 = vld [vmem:[#allocation10 + $0x90] sm:$0xff]
        %v772 = vld [vmem:[#allocation10 + $0x98] sm:$0xff]
        %v773 = vld [vmem:[#allocation10 + $0xa0] sm:$0xff]
        %v774 = vld [vmem:[#allocation10 + $0xa8] sm:$0xff]
        %v775 = vld [vmem:[#allocation10 + $0xb0] sm:$0xff]
        %v776 = vld [vmem:[#allocation10 + $0xb8] sm:$0xff]
        %v777 = vld [vmem:[#allocation10 + $0xc0] sm:$0xff]
        %v778 = vld [vmem:[#allocation10 + $0xc8] sm:$0xff]
        %v779 = vld [vmem:[#allocation10 + $0xd0] sm:$0xff]
        %v780 = vld [vmem:[#allocation10 + $0xd8] sm:$0xff]
        %v781 = vld [vmem:[#allocation10 + $0xe0] sm:$0xff]
        %v782 = vld [vmem:[#allocation10 + $0xe8] sm:$0xff]
        %v783 = vld [vmem:[#allocation10 + $0xf0] sm:$0xff]
        %v784 = vld [vmem:[#allocation10 + $0xf8] sm:$0xff]
        %v785 = vld [vmem:[#allocation10 + $0x100] sm:$0xff]
        %v786 = vld [vmem:[#allocation10 + $0x108] sm:$0xff]
        %v787 = vld [vmem:[#allocation10 + $0x110] sm:$0xff]
        %v788 = vld [vmem:[#allocation10 + $0x118] sm:$0xff]
        %v789 = vld [vmem:[#allocation10 + $0x120] sm:$0xff]
        %v790 = vld [vmem:[#allocation10 + $0x128] sm:$0xff]
        %v791 = vld [vmem:[#allocation10 + $0x130] sm:$0xff]
        %v792 = vld [vmem:[#allocation10 + $0x138] sm:$0xff]
        %v793 = vld [vmem:[#allocation10 + $0x140] sm:$0xff]
        %v794 = vld [vmem:[#allocation10 + $0x148] sm:$0xff]
        %v795 = vld [vmem:[#allocation10 + $0x150] sm:$0xff]
        %v796 = vld [vmem:[#allocation10 + $0x158] sm:$0xff]
        %v797 = vld [vmem:[#allocation10 + $0x160] sm:$0xff]
        %v798 = vld [vmem:[#allocation10 + $0x168] sm:$0xff]
        %v799 = vld [vmem:[#allocation10 + $0x170] sm:$0xff]
        %v800 = vld [vmem:[#allocation10 + $0x178] sm:$0xff]
        %v801 = vld [vmem:[#allocation10 + $0x180] sm:$0xff]
        %v802 = vld [vmem:[#allocation10 + $0x188] sm:$0xff]
        %v803 = vld [vmem:[#allocation10 + $0x190] sm:$0xff]
        %v804 = vld [vmem:[#allocation10 + $0x198] sm:$0xff]
        %v805 = vld [vmem:[#allocation10 + $0x1a0] sm:$0xff]
        %v806 = vld [vmem:[#allocation10 + $0x1a8] sm:$0xff]
        %v807 = vld [vmem:[#allocation10 + $0x1b0] sm:$0xff]
        %v808 = vld [vmem:[#allocation10 + $0x1b8] sm:$0xff]
        %v809 = vld [vmem:[#allocation10 + $0x1c0] sm:$0xff]
        %v810 = vld [vmem:[#allocation10 + $0x1c8] sm:$0xff]
        %v811 = vld [vmem:[#allocation10 + $0x1d0] sm:$0xff]
        %v812 = vld [vmem:[#allocation10 + $0x1d8] sm:$0xff]
        %v813 = vld [vmem:[#allocation10 + $0x1e0] sm:$0xff]
        %v814 = vld [vmem:[#allocation10 + $0x1e8] sm:$0xff]
        %v815 = vld [vmem:[#allocation10 + $0x1f0] sm:$0xff]
        %v816 = vld [vmem:[#allocation10 + $0x1f8] sm:$0xff]
        %v817 = vld [vmem:[#allocation10 + $0x200] sm:$0xff]
        %v818 = vld [vmem:[#allocation10 + $0x208] sm:$0xff]
        %v819 = vld [vmem:[#allocation10 + $0x210] sm:$0xff]
        %v820 = vld [vmem:[#allocation10 + $0x218] sm:$0xff]
        %v821 = vld [vmem:[#allocation10 + $0x220] sm:$0xff]
        %v822 = vld [vmem:[#allocation10 + $0x228] sm:$0xff]
        %v823 = vld [vmem:[#allocation10 + $0x230] sm:$0xff]
        %v824 = vld [vmem:[#allocation10 + $0x238] sm:$0xff]
        %v825 = vld [vmem:[#allocation10 + $0x240] sm:$0xff]
        %v826 = vld [vmem:[#allocation10 + $0x248] sm:$0xff]
        %v827 = vld [vmem:[#allocation10 + $0x250] sm:$0xff]
        %v828 = vld [vmem:[#allocation10 + $0x258] sm:$0xff]
        %v829 = vld [vmem:[#allocation10 + $0x260] sm:$0xff]
        %v830 = vld [vmem:[#allocation10 + $0x268] sm:$0xff]
        %v831 = vld [vmem:[#allocation10 + $0x270] sm:$0xff]
        %v832 = vld [vmem:[#allocation10 + $0x278] sm:$0xff]
        %v833 = vld [vmem:[#allocation10 + $0x280] sm:$0xff]
        %v834 = vld [vmem:[#allocation10 + $0x288] sm:$0xff]
        %v835 = vld [vmem:[#allocation10 + $0x290] sm:$0xff]
        %v836 = vld [vmem:[#allocation10 + $0x298] sm:$0xff]
        %v837 = vld [vmem:[#allocation10 + $0x2a0] sm:$0xff]
        %v838 = vld [vmem:[#allocation10 + $0x2a8] sm:$0xff]
        %v839 = vld [vmem:[#allocation10 + $0x2b0] sm:$0xff]
        %v840 = vld [vmem:[#allocation10 + $0x2b8] sm:$0xff]
        %v841 = vld [vmem:[#allocation10 + $0x2c0] sm:$0xff]
        %v842 = vld [vmem:[#allocation10 + $0x2c8] sm:$0xff]
        %v843 = vld [vmem:[#allocation10 + $0x2d0] sm:$0xff]
        %v844 = vld [vmem:[#allocation10 + $0x2d8] sm:$0xff]
        %v845 = vld [vmem:[#allocation10 + $0x2e0] sm:$0xff]
        %v846 = vld [vmem:[#allocation10 + $0x2e8] sm:$0xff]
        %v847 = vld [vmem:[#allocation10 + $0x2f0] sm:$0xff]
        %v848 = vld [vmem:[#allocation10 + $0x2f8] sm:$0xff]
        %v849 = vld [vmem:[#allocation10 + $0x300] sm:$0xff]
        %v850 = vld [vmem:[#allocation10 + $0x308] sm:$0xff]
        %v851 = vld [vmem:[#allocation10 + $0x310] sm:$0xff]
        %v852 = vld [vmem:[#allocation10 + $0x318] sm:$0xff]
        %v853 = vld [vmem:[#allocation10 + $0x320] sm:$0xff]
        %v854 = vld [vmem:[#allocation10 + $0x328] sm:$0xff]
        %v855 = vld [vmem:[#allocation10 + $0x330] sm:$0xff]
        %v856 = vld [vmem:[#allocation10 + $0x338] sm:$0xff]
        %v857 = vld [vmem:[#allocation10 + $0x340] sm:$0xff]
        %v858 = vld [vmem:[#allocation10 + $0x348] sm:$0xff]
        %v859 = vld [vmem:[#allocation10 + $0x350] sm:$0xff]
        %v860 = vld [vmem:[#allocation10 + $0x358] sm:$0xff]
        %v861 = vld [vmem:[#allocation10 + $0x360] sm:$0xff]
        %v862 = vld [vmem:[#allocation10 + $0x368] sm:$0xff]
        %v863 = vld [vmem:[#allocation10 + $0x370] sm:$0xff]
        %v864 = vld [vmem:[#allocation10 + $0x378] sm:$0xff]
        %v865 = vld [vmem:[#allocation10 + $0x380] sm:$0xff]
        %v866 = vld [vmem:[#allocation10 + $0x388] sm:$0xff]
        %v867 = vld [vmem:[#allocation10 + $0x390] sm:$0xff]
        %v868 = vld [vmem:[#allocation10 + $0x398] sm:$0xff]
        %v869 = vld [vmem:[#allocation10 + $0x3a0] sm:$0xff]
        %v870 = vld [vmem:[#allocation10 + $0x3a8] sm:$0xff]
        %v871 = vld [vmem:[#allocation10 + $0x3b0] sm:$0xff]
        %v872 = vld [vmem:[#allocation10 + $0x3b8] sm:$0xff]
        %v873 = vld [vmem:[#allocation10 + $0x3c0] sm:$0xff]
        %v874 = vld [vmem:[#allocation10 + $0x3c8] sm:$0xff]
        %v875 = vld [vmem:[#allocation10 + $0x3d0] sm:$0xff]
        %v876 = vld [vmem:[#allocation10 + $0x3d8] sm:$0xff]
        %v877 = vld [vmem:[#allocation10 + $0x3e0] sm:$0xff]
        %v878 = vld [vmem:[#allocation10 + $0x3e8] sm:$0xff]
        %v879 = vld [vmem:[#allocation10 + $0x3f0] sm:$0xff]
        %v880 = vld [vmem:[#allocation10 + $0x3f8] sm:$0xff]
        %v881 = vld [vmem:[#allocation10 + $0x400] sm:$0xff]
        %v882 = vld [vmem:[#allocation10 + $0x408] sm:$0xff]
        %v883 = vld [vmem:[#allocation10 + $0x410] sm:$0xff]
        %v884 = vld [vmem:[#allocation10 + $0x418] sm:$0xff]
        %v885 = vld [vmem:[#allocation10 + $0x420] sm:$0xff]
        %v886 = vld [vmem:[#allocation10 + $0x428] sm:$0xff]
        %v887 = vld [vmem:[#allocation10 + $0x430] sm:$0xff]
        %v888 = vld [vmem:[#allocation10 + $0x438] sm:$0xff]
        %v889 = vld [vmem:[#allocation10 + $0x440] sm:$0xff]
        %v890 = vld [vmem:[#allocation10 + $0x448] sm:$0xff]
        %v891 = vld [vmem:[#allocation10 + $0x450] sm:$0xff]
        %v892 = vld [vmem:[#allocation10 + $0x458] sm:$0xff]
        %v893 = vld [vmem:[#allocation10 + $0x460] sm:$0xff]
        %v894 = vld [vmem:[#allocation10 + $0x468] sm:$0xff]
        %v895 = vld [vmem:[#allocation10 + $0x470] sm:$0xff]
        %v896 = vld [vmem:[#allocation10 + $0x478] sm:$0xff]
        %v897 = vld [vmem:[%s4] sm:$0x1]
        %v899 = vperm.slane %v897, 0
        %901 = vmatpush.msra.mxu0 %v768
        %902 = vmatpush.msra.mxu0 %v767
        %903 = vmatpush.msra.mxu0 %v766
        %904 = vmatpush.msra.mxu0 %v765
        %905 = vmatpush.msra.mxu0 %v764
        %906 = vmatpush.msra.mxu0 %v763
        %907 = vmatpush.msra.mxu0 %v762
        %908 = vmatpush.msra.mxu0 %v761
        %909 = vmatpush.msra.mxu0 %v760
        %910 = vmatpush.msra.mxu0 %v759
        %911 = vmatpush.msra.mxu0 %v758
        %912 = vmatpush.msra.mxu0 %v757
        %913 = vmatpush.msra.mxu0 %v756
        %914 = vmatpush.msra.mxu0 %v755
        %915 = vmatpush.msra.mxu0 %v754
        %916 = vmatpush.msra.mxu0 %v753
        %917 = vmatmul.f32.gmra.mxu0 %v572
        %v918 = vpop.f32.mrf.mxu0
        %v919 = vadd.f32 %v899, %v918
        %920 = vmatmul.f32.gmra.mxu0 %v573
        %v921 = vpop.f32.mrf.mxu0
        %v922 = vadd.f32 %v899, %v921
        %923 = vmatmul.f32.gmra.mxu0 %v574
        %v924 = vpop.f32.mrf.mxu0
        %v925 = vadd.f32 %v899, %v924
        %926 = vmatmul.f32.gmra.mxu0 %v575
        %v927 = vpop.f32.mrf.mxu0
        %v928 = vadd.f32 %v899, %v927
        %929 = vmatmul.f32.gmra.mxu0 %v576
        %v930 = vpop.f32.mrf.mxu0
        %v931 = vadd.f32 %v899, %v930
        %932 = vmatmul.f32.gmra.mxu0 %v577
        %v933 = vpop.f32.mrf.mxu0
        %v934 = vadd.f32 %v899, %v933
        %935 = vmatmul.f32.gmra.mxu0 %v578
        %v936 = vpop.f32.mrf.mxu0
        %v937 = vadd.f32 %v899, %v936
        %938 = vmatmul.f32.gmra.mxu0 %v579
        %v939 = vpop.f32.mrf.mxu0
        %v940 = vadd.f32 %v899, %v939
        %941 = vmatmul.f32.gmra.mxu0 %v580
        %v942 = vpop.f32.mrf.mxu0
        %v943 = vadd.f32 %v899, %v942
        %944 = vmatmul.f32.gmra.mxu0 %v581
        %v945 = vpop.f32.mrf.mxu0
        %v946 = vadd.f32 %v899, %v945
        %947 = vmatmul.f32.gmra.mxu0 %v582
        %v948 = vpop.f32.mrf.mxu0
        %v949 = vadd.f32 %v899, %v948
        %950 = vmatmul.f32.gmra.mxu0 %v583
        %v951 = vpop.f32.mrf.mxu0
        %v952 = vadd.f32 %v899, %v951
        %953 = vmatmul.f32.gmra.mxu0 %v584
        %v954 = vpop.f32.mrf.mxu0
        %v955 = vadd.f32 %v899, %v954
        %956 = vmatmul.f32.gmra.mxu0 %v585
        %v957 = vpop.f32.mrf.mxu0
        %v958 = vadd.f32 %v899, %v957
        %959 = vmatmul.f32.gmra.mxu0 %v586
        %v960 = vpop.f32.mrf.mxu0
        %v961 = vadd.f32 %v899, %v960
        %962 = vmatmul.f32.gmra.mxu0 %v587
        %v963 = vpop.f32.mrf.mxu0
        %v964 = vadd.f32 %v899, %v963
        %965 = vmatmul.f32.gmra.mxu0 %v588
        %v966 = vpop.f32.mrf.mxu0
        %v967 = vadd.f32 %v899, %v966
        %968 = vmatmul.f32.gmra.mxu0 %v589
        %v969 = vpop.f32.mrf.mxu0
        %v970 = vadd.f32 %v899, %v969
        %971 = vmatmul.f32.gmra.mxu0 %v590
        %v972 = vpop.f32.mrf.mxu0
        %v973 = vadd.f32 %v899, %v972
        %974 = vmatmul.f32.gmra.mxu0 %v591
        %v975 = vpop.f32.mrf.mxu0
        %v976 = vadd.f32 %v899, %v975
        %977 = vdwg.mxu0
        %978 = vmatpush.msra.mxu0 %v784
        %979 = vmatpush.msra.mxu0 %v783
        %980 = vmatpush.msra.mxu0 %v782
        %981 = vmatpush.msra.mxu0 %v781
        %982 = vmatpush.msra.mxu0 %v780
        %983 = vmatpush.msra.mxu0 %v779
        %984 = vmatpush.msra.mxu0 %v778
        %985 = vmatpush.msra.mxu0 %v777
        %986 = vmatpush.msra.mxu0 %v776
        %987 = vmatpush.msra.mxu0 %v775
        %988 = vmatpush.msra.mxu0 %v774
        %989 = vmatpush.msra.mxu0 %v773
        %990 = vmatpush.msra.mxu0 %v772
        %991 = vmatpush.msra.mxu0 %v771
        %992 = vmatpush.msra.mxu0 %v770
        %993 = vmatpush.msra.mxu0 %v769
        %994 = vmatmul.f32.gmra.mxu0 %v592
        %v995 = vpop.f32.mrf.mxu0
        %v996 = vadd.f32 %v919, %v995
        %997 = vmatmul.f32.gmra.mxu0 %v593
        %v998 = vpop.f32.mrf.mxu0
        %v999 = vadd.f32 %v922, %v998
        %1000 = vmatmul.f32.gmra.mxu0 %v594
        %v1001 = vpop.f32.mrf.mxu0
        %v1002 = vadd.f32 %v925, %v1001
        %1003 = vmatmul.f32.gmra.mxu0 %v595
        %v1004 = vpop.f32.mrf.mxu0
        %v1005 = vadd.f32 %v928, %v1004
        %1006 = vmatmul.f32.gmra.mxu0 %v596
        %v1007 = vpop.f32.mrf.mxu0
        %v1008 = vadd.f32 %v931, %v1007
        %1009 = vmatmul.f32.gmra.mxu0 %v597
        %v1010 = vpop.f32.mrf.mxu0
        %v1011 = vadd.f32 %v934, %v1010
        %1012 = vmatmul.f32.gmra.mxu0 %v598
        %v1013 = vpop.f32.mrf.mxu0
        %v1014 = vadd.f32 %v937, %v1013
        %1015 = vmatmul.f32.gmra.mxu0 %v599
        %v1016 = vpop.f32.mrf.mxu0
        %v1017 = vadd.f32 %v940, %v1016
        %1018 = vmatmul.f32.gmra.mxu0 %v600
        %v1019 = vpop.f32.mrf.mxu0
        %v1020 = vadd.f32 %v943, %v1019
        %1021 = vmatmul.f32.gmra.mxu0 %v601
        %v1022 = vpop.f32.mrf.mxu0
        %v1023 = vadd.f32 %v946, %v1022
        %1024 = vmatmul.f32.gmra.mxu0 %v602
        %v1025 = vpop.f32.mrf.mxu0
        %v1026 = vadd.f32 %v949, %v1025
        %1027 = vmatmul.f32.gmra.mxu0 %v603
        %v1028 = vpop.f32.mrf.mxu0
        %v1029 = vadd.f32 %v952, %v1028
        %1030 = vmatmul.f32.gmra.mxu0 %v604
        %v1031 = vpop.f32.mrf.mxu0
        %v1032 = vadd.f32 %v955, %v1031
        %1033 = vmatmul.f32.gmra.mxu0 %v605
        %v1034 = vpop.f32.mrf.mxu0
        %v1035 = vadd.f32 %v958, %v1034
        %1036 = vmatmul.f32.gmra.mxu0 %v606
        %v1037 = vpop.f32.mrf.mxu0
        %v1038 = vadd.f32 %v961, %v1037
        %1039 = vmatmul.f32.gmra.mxu0 %v607
        %v1040 = vpop.f32.mrf.mxu0
        %v1041 = vadd.f32 %v964, %v1040
        %1042 = vmatmul.f32.gmra.mxu0 %v608
        %v1043 = vpop.f32.mrf.mxu0
        %v1044 = vadd.f32 %v967, %v1043
        %1045 = vmatmul.f32.gmra.mxu0 %v609
        %v1046 = vpop.f32.mrf.mxu0
        %v1047 = vadd.f32 %v970, %v1046
        %1048 = vmatmul.f32.gmra.mxu0 %v610
        %v1049 = vpop.f32.mrf.mxu0
        %v1050 = vadd.f32 %v973, %v1049
        %1051 = vmatmul.f32.gmra.mxu0 %v611
        %v1052 = vpop.f32.mrf.mxu0
        %v1053 = vadd.f32 %v976, %v1052
        %1054 = vdwg.mxu0
        %1055 = vmatpush.msra.mxu0 %v800
        %1056 = vmatpush.msra.mxu0 %v799
        %1057 = vmatpush.msra.mxu0 %v798
        %1058 = vmatpush.msra.mxu0 %v797
        %1059 = vmatpush.msra.mxu0 %v796
        %1060 = vmatpush.msra.mxu0 %v795
        %1061 = vmatpush.msra.mxu0 %v794
        %1062 = vmatpush.msra.mxu0 %v793
        %1063 = vmatpush.msra.mxu0 %v792
        %1064 = vmatpush.msra.mxu0 %v791
        %1065 = vmatpush.msra.mxu0 %v790
        %1066 = vmatpush.msra.mxu0 %v789
        %1067 = vmatpush.msra.mxu0 %v788
        %1068 = vmatpush.msra.mxu0 %v787
        %1069 = vmatpush.msra.mxu0 %v786
        %1070 = vmatpush.msra.mxu0 %v785
        %1071 = vmatmul.f32.gmra.mxu0 %v612
        %v1072 = vpop.f32.mrf.mxu0
        %v1073 = vadd.f32 %v996, %v1072
        %1074 = vmatmul.f32.gmra.mxu0 %v613
        %v1075 = vpop.f32.mrf.mxu0
        %v1076 = vadd.f32 %v999, %v1075
        %1077 = vmatmul.f32.gmra.mxu0 %v614
        %v1078 = vpop.f32.mrf.mxu0
        %v1079 = vadd.f32 %v1002, %v1078
        %1080 = vmatmul.f32.gmra.mxu0 %v615
        %v1081 = vpop.f32.mrf.mxu0
        %v1082 = vadd.f32 %v1005, %v1081
        %1083 = vmatmul.f32.gmra.mxu0 %v616
        %v1084 = vpop.f32.mrf.mxu0
        %v1085 = vadd.f32 %v1008, %v1084
        %1086 = vmatmul.f32.gmra.mxu0 %v617
        %v1087 = vpop.f32.mrf.mxu0
        %v1088 = vadd.f32 %v1011, %v1087
        %1089 = vmatmul.f32.gmra.mxu0 %v618
        %v1090 = vpop.f32.mrf.mxu0
        %v1091 = vadd.f32 %v1014, %v1090
        %1092 = vmatmul.f32.gmra.mxu0 %v619
        %v1093 = vpop.f32.mrf.mxu0
        %v1094 = vadd.f32 %v1017, %v1093
        %1095 = vmatmul.f32.gmra.mxu0 %v620
        %v1096 = vpop.f32.mrf.mxu0
        %v1097 = vadd.f32 %v1020, %v1096
        %1098 = vmatmul.f32.gmra.mxu0 %v621
        %v1099 = vpop.f32.mrf.mxu0
        %v1100 = vadd.f32 %v1023, %v1099
        %1101 = vmatmul.f32.gmra.mxu0 %v622
        %v1102 = vpop.f32.mrf.mxu0
        %v1103 = vadd.f32 %v1026, %v1102
        %1104 = vmatmul.f32.gmra.mxu0 %v623
        %v1105 = vpop.f32.mrf.mxu0
        %v1106 = vadd.f32 %v1029, %v1105
        %1107 = vmatmul.f32.gmra.mxu0 %v624
        %v1108 = vpop.f32.mrf.mxu0
        %v1109 = vadd.f32 %v1032, %v1108
        %1110 = vmatmul.f32.gmra.mxu0 %v625
        %v1111 = vpop.f32.mrf.mxu0
        %v1112 = vadd.f32 %v1035, %v1111
        %1113 = vmatmul.f32.gmra.mxu0 %v626
        %v1114 = vpop.f32.mrf.mxu0
        %v1115 = vadd.f32 %v1038, %v1114
        %1116 = vmatmul.f32.gmra.mxu0 %v627
        %v1117 = vpop.f32.mrf.mxu0
        %v1118 = vadd.f32 %v1041, %v1117
        %1119 = vmatmul.f32.gmra.mxu0 %v628
        %v1120 = vpop.f32.mrf.mxu0
        %v1121 = vadd.f32 %v1044, %v1120
        %1122 = vmatmul.f32.gmra.mxu0 %v629
        %v1123 = vpop.f32.mrf.mxu0
        %v1124 = vadd.f32 %v1047, %v1123
        %1125 = vmatmul.f32.gmra.mxu0 %v630
        %v1126 = vpop.f32.mrf.mxu0
        %v1127 = vadd.f32 %v1050, %v1126
        %1128 = vmatmul.f32.gmra.mxu0 %v631
        %v1129 = vpop.f32.mrf.mxu0
        %v1130 = vadd.f32 %v1053, %v1129
        %1131 = vdwg.mxu0
        %1132 = vmatpush.msra.mxu0 %v816
        %1133 = vmatpush.msra.mxu0 %v815
        %1134 = vmatpush.msra.mxu0 %v814
        %1135 = vmatpush.msra.mxu0 %v813
        %1136 = vmatpush.msra.mxu0 %v812
        %1137 = vmatpush.msra.mxu0 %v811
        %1138 = vmatpush.msra.mxu0 %v810
        %1139 = vmatpush.msra.mxu0 %v809
        %1140 = vmatpush.msra.mxu0 %v808
        %1141 = vmatpush.msra.mxu0 %v807
        %1142 = vmatpush.msra.mxu0 %v806
        %1143 = vmatpush.msra.mxu0 %v805
        %1144 = vmatpush.msra.mxu0 %v804
        %1145 = vmatpush.msra.mxu0 %v803
        %1146 = vmatpush.msra.mxu0 %v802
        %1147 = vmatpush.msra.mxu0 %v801
        %1148 = vmatmul.f32.gmra.mxu0 %v633
        %v1149 = vpop.f32.mrf.mxu0
        %v1150 = vadd.f32 %v1073, %v1149
        %1151 = vmatmul.f32.gmra.mxu0 %v634
        %v1152 = vpop.f32.mrf.mxu0
        %v1153 = vadd.f32 %v1076, %v1152
        %1154 = vmatmul.f32.gmra.mxu0 %v635
        %v1155 = vpop.f32.mrf.mxu0
        %v1156 = vadd.f32 %v1079, %v1155
        %1157 = vmatmul.f32.gmra.mxu0 %v636
        %v1158 = vpop.f32.mrf.mxu0
        %v1159 = vadd.f32 %v1082, %v1158
        %1160 = vmatmul.f32.gmra.mxu0 %v637
        %v1161 = vpop.f32.mrf.mxu0
        %v1162 = vadd.f32 %v1085, %v1161
        %1163 = vmatmul.f32.gmra.mxu0 %v638
        %v1164 = vpop.f32.mrf.mxu0
        %v1165 = vadd.f32 %v1088, %v1164
        %1166 = vmatmul.f32.gmra.mxu0 %v639
        %v1167 = vpop.f32.mrf.mxu0
        %v1168 = vadd.f32 %v1091, %v1167
        %1169 = vmatmul.f32.gmra.mxu0 %v640
        %v1170 = vpop.f32.mrf.mxu0
        %v1171 = vadd.f32 %v1094, %v1170
        %1172 = vmatmul.f32.gmra.mxu0 %v641
        %v1173 = vpop.f32.mrf.mxu0
        %v1174 = vadd.f32 %v1097, %v1173
        %1175 = vmatmul.f32.gmra.mxu0 %v642
        %v1176 = vpop.f32.mrf.mxu0
        %v1177 = vadd.f32 %v1100, %v1176
        %1178 = vmatmul.f32.gmra.mxu0 %v643
        %v1179 = vpop.f32.mrf.mxu0
        %v1180 = vadd.f32 %v1103, %v1179
        %1181 = vmatmul.f32.gmra.mxu0 %v644
        %v1182 = vpop.f32.mrf.mxu0
        %v1183 = vadd.f32 %v1106, %v1182
        %1184 = vmatmul.f32.gmra.mxu0 %v645
        %v1185 = vpop.f32.mrf.mxu0
        %v1186 = vadd.f32 %v1109, %v1185
        %1187 = vmatmul.f32.gmra.mxu0 %v646
        %v1188 = vpop.f32.mrf.mxu0
        %v1189 = vadd.f32 %v1112, %v1188
        %1190 = vmatmul.f32.gmra.mxu0 %v647
        %v1191 = vpop.f32.mrf.mxu0
        %v1192 = vadd.f32 %v1115, %v1191
        %1193 = vmatmul.f32.gmra.mxu0 %v648
        %v1194 = vpop.f32.mrf.mxu0
        %v1195 = vadd.f32 %v1118, %v1194
        %1196 = vmatmul.f32.gmra.mxu0 %v649
        %v1197 = vpop.f32.mrf.mxu0
        %v1198 = vadd.f32 %v1121, %v1197
        %1199 = vmatmul.f32.gmra.mxu0 %v650
        %v1200 = vpop.f32.mrf.mxu0
        %v1201 = vadd.f32 %v1124, %v1200
        %1202 = vmatmul.f32.gmra.mxu0 %v651
        %v1203 = vpop.f32.mrf.mxu0
        %v1204 = vadd.f32 %v1127, %v1203
        %1205 = vmatmul.f32.gmra.mxu0 %v652
        %v1206 = vpop.f32.mrf.mxu0
        %v1207 = vadd.f32 %v1130, %v1206
        %1208 = vdwg.mxu0
        %1209 = vmatpush.msra.mxu0 %v832
        %1210 = vmatpush.msra.mxu0 %v831
        %1211 = vmatpush.msra.mxu0 %v830
        %1212 = vmatpush.msra.mxu0 %v829
        %1213 = vmatpush.msra.mxu0 %v828
        %1214 = vmatpush.msra.mxu0 %v827
        %1215 = vmatpush.msra.mxu0 %v826
        %1216 = vmatpush.msra.mxu0 %v825
        %1217 = vmatpush.msra.mxu0 %v824
        %1218 = vmatpush.msra.mxu0 %v823
        %1219 = vmatpush.msra.mxu0 %v822
        %1220 = vmatpush.msra.mxu0 %v821
        %1221 = vmatpush.msra.mxu0 %v820
        %1222 = vmatpush.msra.mxu0 %v819
        %1223 = vmatpush.msra.mxu0 %v818
        %1224 = vmatpush.msra.mxu0 %v817
        %1225 = vmatmul.f32.gmra.mxu0 %v653
        %v1226 = vpop.f32.mrf.mxu0
        %v1227 = vadd.f32 %v1150, %v1226
        %1228 = vmatmul.f32.gmra.mxu0 %v654
        %v1229 = vpop.f32.mrf.mxu0
        %v1230 = vadd.f32 %v1153, %v1229
        %1231 = vmatmul.f32.gmra.mxu0 %v655
        %v1232 = vpop.f32.mrf.mxu0
        %v1233 = vadd.f32 %v1156, %v1232
        %1234 = vmatmul.f32.gmra.mxu0 %v656
        %v1235 = vpop.f32.mrf.mxu0
        %v1236 = vadd.f32 %v1159, %v1235
        %1237 = vmatmul.f32.gmra.mxu0 %v657
        %v1238 = vpop.f32.mrf.mxu0
        %v1239 = vadd.f32 %v1162, %v1238
        %1240 = vmatmul.f32.gmra.mxu0 %v658
        %v1241 = vpop.f32.mrf.mxu0
        %v1242 = vadd.f32 %v1165, %v1241
        %1243 = vmatmul.f32.gmra.mxu0 %v659
        %v1244 = vpop.f32.mrf.mxu0
        %v1245 = vadd.f32 %v1168, %v1244
        %1246 = vmatmul.f32.gmra.mxu0 %v660
        %v1247 = vpop.f32.mrf.mxu0
        %v1248 = vadd.f32 %v1171, %v1247
        %1249 = vmatmul.f32.gmra.mxu0 %v661
        %v1250 = vpop.f32.mrf.mxu0
        %v1251 = vadd.f32 %v1174, %v1250
        %1252 = vmatmul.f32.gmra.mxu0 %v662
        %v1253 = vpop.f32.mrf.mxu0
        %v1254 = vadd.f32 %v1177, %v1253
        %1255 = vmatmul.f32.gmra.mxu0 %v663
        %v1256 = vpop.f32.mrf.mxu0
        %v1257 = vadd.f32 %v1180, %v1256
        %1258 = vmatmul.f32.gmra.mxu0 %v664
        %v1259 = vpop.f32.mrf.mxu0
        %v1260 = vadd.f32 %v1183, %v1259
        %1261 = vmatmul.f32.gmra.mxu0 %v665
        %v1262 = vpop.f32.mrf.mxu0
        %v1263 = vadd.f32 %v1186, %v1262
        %1264 = vmatmul.f32.gmra.mxu0 %v666
        %v1265 = vpop.f32.mrf.mxu0
        %v1266 = vadd.f32 %v1189, %v1265
        %1267 = vmatmul.f32.gmra.mxu0 %v667
        %v1268 = vpop.f32.mrf.mxu0
        %v1269 = vadd.f32 %v1192, %v1268
        %1270 = vmatmul.f32.gmra.mxu0 %v668
        %v1271 = vpop.f32.mrf.mxu0
        %v1272 = vadd.f32 %v1195, %v1271
        %1273 = vmatmul.f32.gmra.mxu0 %v669
        %v1274 = vpop.f32.mrf.mxu0
        %v1275 = vadd.f32 %v1198, %v1274
        %1276 = vmatmul.f32.gmra.mxu0 %v670
        %v1277 = vpop.f32.mrf.mxu0
        %v1278 = vadd.f32 %v1201, %v1277
        %1279 = vmatmul.f32.gmra.mxu0 %v671
        %v1280 = vpop.f32.mrf.mxu0
        %v1281 = vadd.f32 %v1204, %v1280
        %1282 = vmatmul.f32.gmra.mxu0 %v672
        %v1283 = vpop.f32.mrf.mxu0
        %v1284 = vadd.f32 %v1207, %v1283
        %1285 = vdwg.mxu0
        %1286 = vmatpush.msra.mxu0 %v848
        %1287 = vmatpush.msra.mxu0 %v847
        %1288 = vmatpush.msra.mxu0 %v846
        %1289 = vmatpush.msra.mxu0 %v845
        %1290 = vmatpush.msra.mxu0 %v844
        %1291 = vmatpush.msra.mxu0 %v843
        %1292 = vmatpush.msra.mxu0 %v842
        %1293 = vmatpush.msra.mxu0 %v841
        %1294 = vmatpush.msra.mxu0 %v840
        %1295 = vmatpush.msra.mxu0 %v839
        %1296 = vmatpush.msra.mxu0 %v838
        %1297 = vmatpush.msra.mxu0 %v837
        %1298 = vmatpush.msra.mxu0 %v836
        %1299 = vmatpush.msra.mxu0 %v835
        %1300 = vmatpush.msra.mxu0 %v834
        %1301 = vmatpush.msra.mxu0 %v833
        %1302 = vmatmul.f32.gmra.mxu0 %v673
        %v1303 = vpop.f32.mrf.mxu0
        %v1304 = vadd.f32 %v1227, %v1303
        %1305 = vmatmul.f32.gmra.mxu0 %v674
        %v1306 = vpop.f32.mrf.mxu0
        %v1307 = vadd.f32 %v1230, %v1306
        %1308 = vmatmul.f32.gmra.mxu0 %v675
        %v1309 = vpop.f32.mrf.mxu0
        %v1310 = vadd.f32 %v1233, %v1309
        %1311 = vmatmul.f32.gmra.mxu0 %v676
        %v1312 = vpop.f32.mrf.mxu0
        %v1313 = vadd.f32 %v1236, %v1312
        %1314 = vmatmul.f32.gmra.mxu0 %v677
        %v1315 = vpop.f32.mrf.mxu0
        %v1316 = vadd.f32 %v1239, %v1315
        %1317 = vmatmul.f32.gmra.mxu0 %v678
        %v1318 = vpop.f32.mrf.mxu0
        %v1319 = vadd.f32 %v1242, %v1318
        %1320 = vmatmul.f32.gmra.mxu0 %v679
        %v1321 = vpop.f32.mrf.mxu0
        %v1322 = vadd.f32 %v1245, %v1321
        %1323 = vmatmul.f32.gmra.mxu0 %v680
        %v1324 = vpop.f32.mrf.mxu0
        %v1325 = vadd.f32 %v1248, %v1324
        %1326 = vmatmul.f32.gmra.mxu0 %v681
        %v1327 = vpop.f32.mrf.mxu0
        %v1328 = vadd.f32 %v1251, %v1327
        %1329 = vmatmul.f32.gmra.mxu0 %v682
        %v1330 = vpop.f32.mrf.mxu0
        %v1331 = vadd.f32 %v1254, %v1330
        %1332 = vmatmul.f32.gmra.mxu0 %v683
        %v1333 = vpop.f32.mrf.mxu0
        %v1334 = vadd.f32 %v1257, %v1333
        %1335 = vmatmul.f32.gmra.mxu0 %v684
        %v1336 = vpop.f32.mrf.mxu0
        %v1337 = vadd.f32 %v1260, %v1336
        %1338 = vmatmul.f32.gmra.mxu0 %v685
        %v1339 = vpop.f32.mrf.mxu0
        %v1340 = vadd.f32 %v1263, %v1339
        %1341 = vmatmul.f32.gmra.mxu0 %v686
        %v1342 = vpop.f32.mrf.mxu0
        %v1343 = vadd.f32 %v1266, %v1342
        %1344 = vmatmul.f32.gmra.mxu0 %v687
        %v1345 = vpop.f32.mrf.mxu0
        %v1346 = vadd.f32 %v1269, %v1345
        %1347 = vmatmul.f32.gmra.mxu0 %v688
        %v1348 = vpop.f32.mrf.mxu0
        %v1349 = vadd.f32 %v1272, %v1348
        %1350 = vmatmul.f32.gmra.mxu0 %v689
        %v1351 = vpop.f32.mrf.mxu0
        %v1352 = vadd.f32 %v1275, %v1351
        %1353 = vmatmul.f32.gmra.mxu0 %v690
        %v1354 = vpop.f32.mrf.mxu0
        %v1355 = vadd.f32 %v1278, %v1354
        %1356 = vmatmul.f32.gmra.mxu0 %v691
        %v1357 = vpop.f32.mrf.mxu0
        %v1358 = vadd.f32 %v1281, %v1357
        %1359 = vmatmul.f32.gmra.mxu0 %v692
        %v1360 = vpop.f32.mrf.mxu0
        %v1361 = vadd.f32 %v1284, %v1360
        %1362 = vdwg.mxu0
        %1363 = vmatpush.msra.mxu0 %v864
        %1364 = vmatpush.msra.mxu0 %v863
        %1365 = vmatpush.msra.mxu0 %v862
        %1366 = vmatpush.msra.mxu0 %v861
        %1367 = vmatpush.msra.mxu0 %v860
        %1368 = vmatpush.msra.mxu0 %v859
        %1369 = vmatpush.msra.mxu0 %v858
        %1370 = vmatpush.msra.mxu0 %v857
        %1371 = vmatpush.msra.mxu0 %v856
        %1372 = vmatpush.msra.mxu0 %v855
        %1373 = vmatpush.msra.mxu0 %v854
        %1374 = vmatpush.msra.mxu0 %v853
        %1375 = vmatpush.msra.mxu0 %v852
        %1376 = vmatpush.msra.mxu0 %v851
        %1377 = vmatpush.msra.mxu0 %v850
        %1378 = vmatpush.msra.mxu0 %v849
        %1379 = vmatmul.f32.gmra.mxu0 %v693
        %v1380 = vpop.f32.mrf.mxu0
        %v1381 = vadd.f32 %v1304, %v1380
        %1382 = vmatmul.f32.gmra.mxu0 %v694
        %v1383 = vpop.f32.mrf.mxu0
        %v1384 = vadd.f32 %v1307, %v1383
        %1385 = vmatmul.f32.gmra.mxu0 %v695
        %v1386 = vpop.f32.mrf.mxu0
        %v1387 = vadd.f32 %v1310, %v1386
        %1388 = vmatmul.f32.gmra.mxu0 %v696
        %v1389 = vpop.f32.mrf.mxu0
        %v1390 = vadd.f32 %v1313, %v1389
        %1391 = vmatmul.f32.gmra.mxu0 %v697
        %v1392 = vpop.f32.mrf.mxu0
        %v1393 = vadd.f32 %v1316, %v1392
        %1394 = vmatmul.f32.gmra.mxu0 %v698
        %v1395 = vpop.f32.mrf.mxu0
        %v1396 = vadd.f32 %v1319, %v1395
        %1397 = vmatmul.f32.gmra.mxu0 %v699
        %v1398 = vpop.f32.mrf.mxu0
        %v1399 = vadd.f32 %v1322, %v1398
        %1400 = vmatmul.f32.gmra.mxu0 %v700
        %v1401 = vpop.f32.mrf.mxu0
        %v1402 = vadd.f32 %v1325, %v1401
        %1403 = vmatmul.f32.gmra.mxu0 %v701
        %v1404 = vpop.f32.mrf.mxu0
        %v1405 = vadd.f32 %v1328, %v1404
        %1406 = vmatmul.f32.gmra.mxu0 %v702
        %v1407 = vpop.f32.mrf.mxu0
        %v1408 = vadd.f32 %v1331, %v1407
        %1409 = vmatmul.f32.gmra.mxu0 %v703
        %v1410 = vpop.f32.mrf.mxu0
        %v1411 = vadd.f32 %v1334, %v1410
        %1412 = vmatmul.f32.gmra.mxu0 %v704
        %v1413 = vpop.f32.mrf.mxu0
        %v1414 = vadd.f32 %v1337, %v1413
        %1415 = vmatmul.f32.gmra.mxu0 %v705
        %v1416 = vpop.f32.mrf.mxu0
        %v1417 = vadd.f32 %v1340, %v1416
        %1418 = vmatmul.f32.gmra.mxu0 %v706
        %v1419 = vpop.f32.mrf.mxu0
        %v1420 = vadd.f32 %v1343, %v1419
        %1421 = vmatmul.f32.gmra.mxu0 %v707
        %v1422 = vpop.f32.mrf.mxu0
        %v1423 = vadd.f32 %v1346, %v1422
        %1424 = vmatmul.f32.gmra.mxu0 %v708
        %v1425 = vpop.f32.mrf.mxu0
        %v1426 = vadd.f32 %v1349, %v1425
        %1427 = vmatmul.f32.gmra.mxu0 %v709
        %v1428 = vpop.f32.mrf.mxu0
        %v1429 = vadd.f32 %v1352, %v1428
        %1430 = vmatmul.f32.gmra.mxu0 %v710
        %v1431 = vpop.f32.mrf.mxu0
        %v1432 = vadd.f32 %v1355, %v1431
        %1433 = vmatmul.f32.gmra.mxu0 %v711
        %v1434 = vpop.f32.mrf.mxu0
        %v1435 = vadd.f32 %v1358, %v1434
        %1436 = vmatmul.f32.gmra.mxu0 %v712
        %v1437 = vpop.f32.mrf.mxu0
        %v1438 = vadd.f32 %v1361, %v1437
        %1439 = vdwg.mxu0
        %1440 = vmatpush.msra.mxu0 %v880
        %1441 = vmatpush.msra.mxu0 %v879
        %1442 = vmatpush.msra.mxu0 %v878
        %1443 = vmatpush.msra.mxu0 %v877
        %1444 = vmatpush.msra.mxu0 %v876
        %1445 = vmatpush.msra.mxu0 %v875
        %1446 = vmatpush.msra.mxu0 %v874
        %1447 = vmatpush.msra.mxu0 %v873
        %1448 = vmatpush.msra.mxu0 %v872
        %1449 = vmatpush.msra.mxu0 %v871
        %1450 = vmatpush.msra.mxu0 %v870
        %1451 = vmatpush.msra.mxu0 %v869
        %1452 = vmatpush.msra.mxu0 %v868
        %1453 = vmatpush.msra.mxu0 %v867
        %1454 = vmatpush.msra.mxu0 %v866
        %1455 = vmatpush.msra.mxu0 %v865
        %1456 = vmatmul.f32.gmra.mxu0 %v713
        %v1457 = vpop.f32.mrf.mxu0
        %v1458 = vadd.f32 %v1381, %v1457
        %1459 = vmatmul.f32.gmra.mxu0 %v714
        %v1460 = vpop.f32.mrf.mxu0
        %v1461 = vadd.f32 %v1384, %v1460
        %1462 = vmatmul.f32.gmra.mxu0 %v715
        %v1463 = vpop.f32.mrf.mxu0
        %v1464 = vadd.f32 %v1387, %v1463
        %1465 = vmatmul.f32.gmra.mxu0 %v716
        %v1466 = vpop.f32.mrf.mxu0
        %v1467 = vadd.f32 %v1390, %v1466
        %1468 = vmatmul.f32.gmra.mxu0 %v717
        %v1469 = vpop.f32.mrf.mxu0
        %v1470 = vadd.f32 %v1393, %v1469
        %1471 = vmatmul.f32.gmra.mxu0 %v718
        %v1472 = vpop.f32.mrf.mxu0
        %v1473 = vadd.f32 %v1396, %v1472
        %1474 = vmatmul.f32.gmra.mxu0 %v719
        %v1475 = vpop.f32.mrf.mxu0
        %v1476 = vadd.f32 %v1399, %v1475
        %1477 = vmatmul.f32.gmra.mxu0 %v720
        %v1478 = vpop.f32.mrf.mxu0
        %v1479 = vadd.f32 %v1402, %v1478
        %1480 = vmatmul.f32.gmra.mxu0 %v721
        %v1481 = vpop.f32.mrf.mxu0
        %v1482 = vadd.f32 %v1405, %v1481
        %1483 = vmatmul.f32.gmra.mxu0 %v722
        %v1484 = vpop.f32.mrf.mxu0
        %v1485 = vadd.f32 %v1408, %v1484
        %1486 = vmatmul.f32.gmra.mxu0 %v723
        %v1487 = vpop.f32.mrf.mxu0
        %v1488 = vadd.f32 %v1411, %v1487
        %1489 = vmatmul.f32.gmra.mxu0 %v724
        %v1490 = vpop.f32.mrf.mxu0
        %v1491 = vadd.f32 %v1414, %v1490
        %1492 = vmatmul.f32.gmra.mxu0 %v725
        %v1493 = vpop.f32.mrf.mxu0
        %v1494 = vadd.f32 %v1417, %v1493
        %1495 = vmatmul.f32.gmra.mxu0 %v726
        %v1496 = vpop.f32.mrf.mxu0
        %v1497 = vadd.f32 %v1420, %v1496
        %1498 = vmatmul.f32.gmra.mxu0 %v727
        %v1499 = vpop.f32.mrf.mxu0
        %v1500 = vadd.f32 %v1423, %v1499
        %1501 = vmatmul.f32.gmra.mxu0 %v728
        %v1502 = vpop.f32.mrf.mxu0
        %v1503 = vadd.f32 %v1426, %v1502
        %1504 = vmatmul.f32.gmra.mxu0 %v729
        %v1505 = vpop.f32.mrf.mxu0
        %v1506 = vadd.f32 %v1429, %v1505
        %1507 = vmatmul.f32.gmra.mxu0 %v730
        %v1508 = vpop.f32.mrf.mxu0
        %v1509 = vadd.f32 %v1432, %v1508
        %1510 = vmatmul.f32.gmra.mxu0 %v731
        %v1511 = vpop.f32.mrf.mxu0
        %v1512 = vadd.f32 %v1435, %v1511
        %1513 = vmatmul.f32.gmra.mxu0 %v732
        %v1514 = vpop.f32.mrf.mxu0
        %v1515 = vadd.f32 %v1438, %v1514
        %1516 = vdwg.mxu0
        %1517 = vmatpush.msra.mxu0 %v896
        %1518 = vmatpush.msra.mxu0 %v895
        %1519 = vmatpush.msra.mxu0 %v894
        %1520 = vmatpush.msra.mxu0 %v893
        %1521 = vmatpush.msra.mxu0 %v892
        %1522 = vmatpush.msra.mxu0 %v891
        %1523 = vmatpush.msra.mxu0 %v890
        %1524 = vmatpush.msra.mxu0 %v889
        %1525 = vmatpush.msra.mxu0 %v888
        %1526 = vmatpush.msra.mxu0 %v887
        %1527 = vmatpush.msra.mxu0 %v886
        %1528 = vmatpush.msra.mxu0 %v885
        %1529 = vmatpush.msra.mxu0 %v884
        %1530 = vmatpush.msra.mxu0 %v883
        %1531 = vmatpush.msra.mxu0 %v882
        %1532 = vmatpush.msra.mxu0 %v881
        %1533 = vmatmul.f32.gmra.mxu0 %v733
        %v1534 = vpop.f32.mrf.mxu0
        %v1535 = vadd.f32 %v1458, %v1534
        %1536 = vmatmul.f32.gmra.mxu0 %v734
        %v1537 = vpop.f32.mrf.mxu0
        %v1538 = vadd.f32 %v1461, %v1537
        %1539 = vmatmul.f32.gmra.mxu0 %v735
        %v1540 = vpop.f32.mrf.mxu0
        %v1541 = vadd.f32 %v1464, %v1540
        %1542 = vmatmul.f32.gmra.mxu0 %v736
        %v1543 = vpop.f32.mrf.mxu0
        %v1544 = vadd.f32 %v1467, %v1543
        %1545 = vmatmul.f32.gmra.mxu0 %v737
        %v1546 = vpop.f32.mrf.mxu0
        %v1547 = vadd.f32 %v1470, %v1546
        %1548 = vmatmul.f32.gmra.mxu0 %v738
        %v1549 = vpop.f32.mrf.mxu0
        %v1550 = vadd.f32 %v1473, %v1549
        %1551 = vmatmul.f32.gmra.mxu0 %v739
        %v1552 = vpop.f32.mrf.mxu0
        %v1553 = vadd.f32 %v1476, %v1552
        %1554 = vmatmul.f32.gmra.mxu0 %v740
        %v1555 = vpop.f32.mrf.mxu0
        %v1556 = vadd.f32 %v1479, %v1555
        %1557 = vmatmul.f32.gmra.mxu0 %v741
        %v1558 = vpop.f32.mrf.mxu0
        %v1559 = vadd.f32 %v1482, %v1558
        %1560 = vmatmul.f32.gmra.mxu0 %v742
        %v1561 = vpop.f32.mrf.mxu0
        %v1562 = vadd.f32 %v1485, %v1561
        %1563 = vmatmul.f32.gmra.mxu0 %v743
        %v1564 = vpop.f32.mrf.mxu0
        %v1565 = vadd.f32 %v1488, %v1564
        %1566 = vmatmul.f32.gmra.mxu0 %v744
        %v1567 = vpop.f32.mrf.mxu0
        %v1568 = vadd.f32 %v1491, %v1567
        %1569 = vmatmul.f32.gmra.mxu0 %v745
        %v1570 = vpop.f32.mrf.mxu0
        %v1571 = vadd.f32 %v1494, %v1570
        %1572 = vmatmul.f32.gmra.mxu0 %v746
        %v1573 = vpop.f32.mrf.mxu0
        %v1574 = vadd.f32 %v1497, %v1573
        %1575 = vmatmul.f32.gmra.mxu0 %v747
        %v1576 = vpop.f32.mrf.mxu0
        %v1577 = vadd.f32 %v1500, %v1576
        %1578 = vmatmul.f32.gmra.mxu0 %v748
        %v1579 = vpop.f32.mrf.mxu0
        %v1580 = vadd.f32 %v1503, %v1579
        %1581 = vmatmul.f32.gmra.mxu0 %v749
        %v1582 = vpop.f32.mrf.mxu0
        %v1583 = vadd.f32 %v1506, %v1582
        %1584 = vmatmul.f32.gmra.mxu0 %v750
        %v1585 = vpop.f32.mrf.mxu0
        %v1586 = vadd.f32 %v1509, %v1585
        %1587 = vmatmul.f32.gmra.mxu0 %v751
        %v1588 = vpop.f32.mrf.mxu0
        %v1589 = vadd.f32 %v1512, %v1588
        %1590 = vmatmul.f32.gmra.mxu0 %v752
        %v1591 = vpop.f32.mrf.mxu0
        %v1592 = vadd.f32 %v1515, %v1591
        %1593 = vdwg.mxu0
        %v1594 = vmax.f32 %v1535, 0.0
        %v1595 = vmax.f32 %v1538, 0.0
        %v1596 = vmax.f32 %v1541, 0.0
        %v1597 = vmax.f32 %v1544, 0.0
        %v1598 = vmax.f32 %v1547, 0.0
        %v1599 = vmax.f32 %v1550, 0.0
        %v1600 = vmax.f32 %v1553, 0.0
        %v1601 = vmax.f32 %v1556, 0.0
        %v1602 = vmax.f32 %v1559, 0.0
        %v1603 = vmax.f32 %v1562, 0.0
        %v1604 = vmax.f32 %v1565, 0.0
        %v1605 = vmax.f32 %v1568, 0.0
        %v1606 = vmax.f32 %v1571, 0.0
        %v1607 = vmax.f32 %v1574, 0.0
        %v1608 = vmax.f32 %v1577, 0.0
        %v1609 = vmax.f32 %v1580, 0.0
        %v1610 = vmax.f32 %v1583, 0.0
        %v1611 = vmax.f32 %v1586, 0.0
        %v1612 = vmax.f32 %v1589, 0.0
        %v1613 = vmax.f32 %v1592, 0.0
        %1614 = vst [vmem:[#allocation3 + $0x1] sm:$0xff] %v1594
        %1615 = vst [vmem:[#allocation3 + $0x9] sm:$0xff] %v1595
        %1616 = vst [vmem:[#allocation3 + $0x19] sm:$0xff] %v1596
        %1617 = vst [vmem:[#allocation3 + $0x21] sm:$0xff] %v1597
        %1618 = vst [vmem:[#allocation3 + $0x31] sm:$0xff] %v1598
        %1619 = vst [vmem:[#allocation3 + $0x39] sm:$0xff] %v1599
        %1620 = vst [vmem:[#allocation3 + $0x49] sm:$0xff] %v1600
        %1621 = vst [vmem:[#allocation3 + $0x51] sm:$0xff] %v1601
        %1622 = vst [vmem:[#allocation3 + $0x61] sm:$0xff] %v1602
        %1623 = vst [vmem:[#allocation3 + $0x69] sm:$0xff] %v1603
        %1624 = vst [vmem:[#allocation3 + $0x79] sm:$0xff] %v1604
        %1625 = vst [vmem:[#allocation3 + $0x81] sm:$0xff] %v1605
        %1626 = vst [vmem:[#allocation3 + $0x91] sm:$0xff] %v1606
        %1627 = vst [vmem:[#allocation3 + $0x99] sm:$0xff] %v1607
        %1628 = vst [vmem:[#allocation3 + $0xa9] sm:$0xff] %v1608
        %1629 = vst [vmem:[#allocation3 + $0xb1] sm:$0xff] %v1609
        %1630 = vst [vmem:[#allocation3 + $0xc1] sm:$0xff] %v1610
        %1631 = vst [vmem:[#allocation3 + $0xc9] sm:$0xff] %v1611
        %1632 = vst [vmem:[#allocation3 + $0xd9] sm:$0xff] %v1612
        %1633 = vst [vmem:[#allocation3 + $0xe1] sm:$0xff] %v1613
        %1634 = vst [vmem:[#allocation3] sm:$0x1] 0.0
        %1635 = vst [vmem:[#allocation3 + $0x18] sm:$0x1] 0.0
        %1636 = vst [vmem:[#allocation3 + $0x30] sm:$0x1] 0.0
        %1637 = vst [vmem:[#allocation3 + $0x48] sm:$0x1] 0.0
        %1638 = vst [vmem:[#allocation3 + $0x60] sm:$0x1] 0.0
        %1639 = vst [vmem:[#allocation3 + $0x78] sm:$0x1] 0.0
        %1640 = vst [vmem:[#allocation3 + $0x90] sm:$0x1] 0.0
        %1641 = vst [vmem:[#allocation3 + $0xa8] sm:$0x1] 0.0
        %1642 = vst [vmem:[#allocation3 + $0xc0] sm:$0x1] 0.0
        %1643 = vst [vmem:[#allocation3 + $0xd8] sm:$0x1] 0.0
        %1644 = vst [vmem:[#allocation3 + $0x11] sm:$0x1] 0.0
        %1645 = vst [vmem:[#allocation3 + $0x29] sm:$0x1] 0.0
        %1646 = vst [vmem:[#allocation3 + $0x41] sm:$0x1] 0.0
        %1647 = vst [vmem:[#allocation3 + $0x59] sm:$0x1] 0.0
        %1648 = vst [vmem:[#allocation3 + $0x71] sm:$0x1] 0.0
        %1649 = vst [vmem:[#allocation3 + $0x89] sm:$0x1] 0.0
        %1650 = vst [vmem:[#allocation3 + $0xa1] sm:$0x1] 0.0
        %1651 = vst [vmem:[#allocation3 + $0xb9] sm:$0x1] 0.0
        %1652 = vst [vmem:[#allocation3 + $0xd1] sm:$0x1] 0.0
        %1653 = vst [vmem:[#allocation3 + $0xe9] sm:$0x1] 0.0
        // Predicated region
        $region77: #{tpu_custom_call.1} parent=47 // pred_check
          %p1654 = pneg %p552
        $region78: #{tpu_custom_call.1} parent=47 // pred_check_branch
          %1656 = sbr.rel (%p1654) target = $region80
        $region79: #{tpu_custom_call.1} parent=47 // pred_region
          %1657 = vst [vmem:[#allocation3] sm:$0xff] 0.0
          %1658 = vst [vmem:[#allocation3 + $0x8] sm:$0xff] 0.0
          %1659 = vst [vmem:[#allocation3 + $0x10] sm:$0x3] 0.0
        $region80: #{tpu_custom_call.1} parent=47 // pred_fallthru
          _
        // Predicated region
        $region81: #{tpu_custom_call.1} parent=47 // pred_check
          %p1660 = pneg %p562
        $region82: #{tpu_custom_call.1} parent=47 // pred_check_branch
          %1662 = sbr.rel (%p1660) target = $region84
        $region83: #{tpu_custom_call.1} parent=47 // pred_region
          %s1663 = scalar_lea.vmem [#allocation3], 216
          %1664 = vst [vmem:[%s1663] sm:$0xff] 0.0
          %1665 = vst [vmem:[%s1663 + $0x8] sm:$0xff] 0.0
          %1666 = vst [vmem:[%s1663 + $0x10] sm:$0x3] 0.0
        $region84: #{tpu_custom_call.1} parent=47 // pred_fallthru
          _
        %v1667 = vld [vmem:[#allocation3] sm:$0xff]
        %v1668 = vld [vmem:[#allocation3 + $0x8] sm:$0xff]
        %v1669 = vld [vmem:[#allocation3 + $0x18] sm:$0xff]
        %v1670 = vld [vmem:[#allocation3 + $0x20] sm:$0xff]
        %v1671 = vld [vmem:[#allocation3 + $0x30] sm:$0xff]
        %v1672 = vld [vmem:[#allocation3 + $0x38] sm:$0xff]
        %v1673 = vld [vmem:[#allocation3 + $0x48] sm:$0xff]
        %v1674 = vld [vmem:[#allocation3 + $0x50] sm:$0xff]
        %v1675 = vld [vmem:[#allocation3 + $0x60] sm:$0xff]
        %v1676 = vld [vmem:[#allocation3 + $0x68] sm:$0xff]
        %v1677 = vld [vmem:[#allocation3 + $0x78] sm:$0xff]
        %v1678 = vld [vmem:[#allocation3 + $0x80] sm:$0xff]
        %v1679 = vld [vmem:[#allocation3 + $0x90] sm:$0xff]
        %v1680 = vld [vmem:[#allocation3 + $0x98] sm:$0xff]
        %v1681 = vld [vmem:[#allocation3 + $0xa8] sm:$0xff]
        %v1682 = vld [vmem:[#allocation3 + $0xb0] sm:$0xff]
        %v1683 = vld [vmem:[#allocation3 + $0x1] sm:$0xff]
        %v1684 = vld [vmem:[#allocation3 + $0x9] sm:$0xff]
        %v1685 = vld [vmem:[#allocation3 + $0x19] sm:$0xff]
        %v1686 = vld [vmem:[#allocation3 + $0x21] sm:$0xff]
        %v1687 = vld [vmem:[#allocation3 + $0x31] sm:$0xff]
        %v1688 = vld [vmem:[#allocation3 + $0x39] sm:$0xff]
        %v1689 = vld [vmem:[#allocation3 + $0x49] sm:$0xff]
        %v1690 = vld [vmem:[#allocation3 + $0x51] sm:$0xff]
        %v1691 = vld [vmem:[#allocation3 + $0x61] sm:$0xff]
        %v1692 = vld [vmem:[#allocation3 + $0x69] sm:$0xff]
        %v1693 = vld [vmem:[#allocation3 + $0x79] sm:$0xff]
        %v1694 = vld [vmem:[#allocation3 + $0x81] sm:$0xff]
        %v1695 = vld [vmem:[#allocation3 + $0x91] sm:$0xff]
        %v1696 = vld [vmem:[#allocation3 + $0x99] sm:$0xff]
        %v1697 = vld [vmem:[#allocation3 + $0xa9] sm:$0xff]
        %v1698 = vld [vmem:[#allocation3 + $0xb1] sm:$0xff]
        %v1699 = vld [vmem:[#allocation3 + $0x2] sm:$0xff]
        %v1700 = vld [vmem:[#allocation3 + $0xa] sm:$0xff]
        %v1701 = vld [vmem:[#allocation3 + $0x1a] sm:$0xff]
        %v1702 = vld [vmem:[#allocation3 + $0x22] sm:$0xff]
        %v1703 = vld [vmem:[#allocation3 + $0x32] sm:$0xff]
        %v1704 = vld [vmem:[#allocation3 + $0x3a] sm:$0xff]
        %v1705 = vld [vmem:[#allocation3 + $0x4a] sm:$0xff]
        %v1706 = vld [vmem:[#allocation3 + $0x52] sm:$0xff]
        %v1707 = vld [vmem:[#allocation3 + $0x62] sm:$0xff]
        %v1708 = vld [vmem:[#allocation3 + $0x6a] sm:$0xff]
        %v1709 = vld [vmem:[#allocation3 + $0x7a] sm:$0xff]
        %v1710 = vld [vmem:[#allocation3 + $0x82] sm:$0xff]
        %v1711 = vld [vmem:[#allocation3 + $0x92] sm:$0xff]
        %v1712 = vld [vmem:[#allocation3 + $0x9a] sm:$0xff]
        %v1713 = vld [vmem:[#allocation3 + $0xaa] sm:$0xff]
        %v1714 = vld [vmem:[#allocation3 + $0xb2] sm:$0xff]
        %s1715 = scalar_lea.vmem [#allocation3], 24
        %v1716 = vld [vmem:[%s1715] sm:$0xff]
        %v1717 = vld [vmem:[%s1715 + $0x8] sm:$0xff]
        %v1718 = vld [vmem:[%s1715 + $0x18] sm:$0xff]
        %v1719 = vld [vmem:[%s1715 + $0x20] sm:$0xff]
        %v1720 = vld [vmem:[%s1715 + $0x30] sm:$0xff]
        %v1721 = vld [vmem:[%s1715 + $0x38] sm:$0xff]
        %v1722 = vld [vmem:[%s1715 + $0x48] sm:$0xff]
        %v1723 = vld [vmem:[%s1715 + $0x50] sm:$0xff]
        %v1724 = vld [vmem:[%s1715 + $0x60] sm:$0xff]
        %v1725 = vld [vmem:[%s1715 + $0x68] sm:$0xff]
        %v1726 = vld [vmem:[%s1715 + $0x78] sm:$0xff]
        %v1727 = vld [vmem:[%s1715 + $0x80] sm:$0xff]
        %v1728 = vld [vmem:[%s1715 + $0x90] sm:$0xff]
        %v1729 = vld [vmem:[%s1715 + $0x98] sm:$0xff]
        %v1730 = vld [vmem:[%s1715 + $0xa8] sm:$0xff]
        %v1731 = vld [vmem:[%s1715 + $0xb0] sm:$0xff]
        %v1732 = vld [vmem:[%s1715 + $0x1] sm:$0xff]
        %v1733 = vld [vmem:[%s1715 + $0x9] sm:$0xff]
        %v1734 = vld [vmem:[%s1715 + $0x19] sm:$0xff]
        %v1735 = vld [vmem:[%s1715 + $0x21] sm:$0xff]
        %v1736 = vld [vmem:[%s1715 + $0x31] sm:$0xff]
        %v1737 = vld [vmem:[%s1715 + $0x39] sm:$0xff]
        %v1738 = vld [vmem:[%s1715 + $0x49] sm:$0xff]
        %v1739 = vld [vmem:[%s1715 + $0x51] sm:$0xff]
        %v1740 = vld [vmem:[%s1715 + $0x61] sm:$0xff]
        %v1741 = vld [vmem:[%s1715 + $0x69] sm:$0xff]
        %v1742 = vld [vmem:[%s1715 + $0x79] sm:$0xff]
        %v1743 = vld [vmem:[%s1715 + $0x81] sm:$0xff]
        %v1744 = vld [vmem:[%s1715 + $0x91] sm:$0xff]
        %v1745 = vld [vmem:[%s1715 + $0x99] sm:$0xff]
        %v1746 = vld [vmem:[%s1715 + $0xa9] sm:$0xff]
        %v1747 = vld [vmem:[%s1715 + $0xb1] sm:$0xff]
        %v1748 = vld [vmem:[%s1715 + $0x2] sm:$0xff]
        %v1749 = vld [vmem:[%s1715 + $0xa] sm:$0xff]
        %v1750 = vld [vmem:[%s1715 + $0x1a] sm:$0xff]
        %v1751 = vld [vmem:[%s1715 + $0x22] sm:$0xff]
        %v1752 = vld [vmem:[%s1715 + $0x32] sm:$0xff]
        %v1753 = vld [vmem:[%s1715 + $0x3a] sm:$0xff]
        %v1754 = vld [vmem:[%s1715 + $0x4a] sm:$0xff]
        %v1755 = vld [vmem:[%s1715 + $0x52] sm:$0xff]
        %v1756 = vld [vmem:[%s1715 + $0x62] sm:$0xff]
        %v1757 = vld [vmem:[%s1715 + $0x6a] sm:$0xff]
        %v1758 = vld [vmem:[%s1715 + $0x7a] sm:$0xff]
        %v1759 = vld [vmem:[%s1715 + $0x82] sm:$0xff]
        %v1760 = vld [vmem:[%s1715 + $0x92] sm:$0xff]
        %v1761 = vld [vmem:[%s1715 + $0x9a] sm:$0xff]
        %v1762 = vld [vmem:[%s1715 + $0xaa] sm:$0xff]
        %v1763 = vld [vmem:[%s1715 + $0xb2] sm:$0xff]
        %s1764 = scalar_lea.vmem [#allocation3], 48
        %v1765 = vld [vmem:[%s1764] sm:$0xff]
        %v1766 = vld [vmem:[%s1764 + $0x8] sm:$0xff]
        %v1767 = vld [vmem:[%s1764 + $0x18] sm:$0xff]
        %v1768 = vld [vmem:[%s1764 + $0x20] sm:$0xff]
        %v1769 = vld [vmem:[%s1764 + $0x30] sm:$0xff]
        %v1770 = vld [vmem:[%s1764 + $0x38] sm:$0xff]
        %v1771 = vld [vmem:[%s1764 + $0x48] sm:$0xff]
        %v1772 = vld [vmem:[%s1764 + $0x50] sm:$0xff]
        %v1773 = vld [vmem:[%s1764 + $0x60] sm:$0xff]
        %v1774 = vld [vmem:[%s1764 + $0x68] sm:$0xff]
        %v1775 = vld [vmem:[%s1764 + $0x78] sm:$0xff]
        %v1776 = vld [vmem:[%s1764 + $0x80] sm:$0xff]
        %v1777 = vld [vmem:[%s1764 + $0x90] sm:$0xff]
        %v1778 = vld [vmem:[%s1764 + $0x98] sm:$0xff]
        %v1779 = vld [vmem:[%s1764 + $0xa8] sm:$0xff]
        %v1780 = vld [vmem:[%s1764 + $0xb0] sm:$0xff]
        %v1781 = vld [vmem:[%s1764 + $0x1] sm:$0xff]
        %v1782 = vld [vmem:[%s1764 + $0x9] sm:$0xff]
        %v1783 = vld [vmem:[%s1764 + $0x19] sm:$0xff]
        %v1784 = vld [vmem:[%s1764 + $0x21] sm:$0xff]
        %v1785 = vld [vmem:[%s1764 + $0x31] sm:$0xff]
        %v1786 = vld [vmem:[%s1764 + $0x39] sm:$0xff]
        %v1787 = vld [vmem:[%s1764 + $0x49] sm:$0xff]
        %v1788 = vld [vmem:[%s1764 + $0x51] sm:$0xff]
        %v1789 = vld [vmem:[%s1764 + $0x61] sm:$0xff]
        %v1790 = vld [vmem:[%s1764 + $0x69] sm:$0xff]
        %v1791 = vld [vmem:[%s1764 + $0x79] sm:$0xff]
        %v1792 = vld [vmem:[%s1764 + $0x81] sm:$0xff]
        %v1793 = vld [vmem:[%s1764 + $0x91] sm:$0xff]
        %v1794 = vld [vmem:[%s1764 + $0x99] sm:$0xff]
        %v1795 = vld [vmem:[%s1764 + $0xa9] sm:$0xff]
        %v1796 = vld [vmem:[%s1764 + $0xb1] sm:$0xff]
        %v1797 = vld [vmem:[%s1764 + $0x2] sm:$0xff]
        %v1798 = vld [vmem:[%s1764 + $0xa] sm:$0xff]
        %v1799 = vld [vmem:[%s1764 + $0x1a] sm:$0xff]
        %v1800 = vld [vmem:[%s1764 + $0x22] sm:$0xff]
        %v1801 = vld [vmem:[%s1764 + $0x32] sm:$0xff]
        %v1802 = vld [vmem:[%s1764 + $0x3a] sm:$0xff]
        %v1803 = vld [vmem:[%s1764 + $0x4a] sm:$0xff]
        %v1804 = vld [vmem:[%s1764 + $0x52] sm:$0xff]
        %v1805 = vld [vmem:[%s1764 + $0x62] sm:$0xff]
        %v1806 = vld [vmem:[%s1764 + $0x6a] sm:$0xff]
        %v1807 = vld [vmem:[%s1764 + $0x7a] sm:$0xff]
        %v1808 = vld [vmem:[%s1764 + $0x82] sm:$0xff]
        %v1809 = vld [vmem:[%s1764 + $0x92] sm:$0xff]
        %v1810 = vld [vmem:[%s1764 + $0x9a] sm:$0xff]
        %v1811 = vld [vmem:[%s1764 + $0xaa] sm:$0xff]
        %v1812 = vld [vmem:[%s1764 + $0xb2] sm:$0xff]
        %v1813 = vld [vmem:[#allocation12] sm:$0xff]
        %v1814 = vld [vmem:[#allocation12 + $0x8] sm:$0xff]
        %v1815 = vld [vmem:[#allocation12 + $0x10] sm:$0xff]
        %v1816 = vld [vmem:[#allocation12 + $0x18] sm:$0xff]
        %v1817 = vld [vmem:[#allocation12 + $0x20] sm:$0xff]
        %v1818 = vld [vmem:[#allocation12 + $0x28] sm:$0xff]
        %v1819 = vld [vmem:[#allocation12 + $0x30] sm:$0xff]
        %v1820 = vld [vmem:[#allocation12 + $0x38] sm:$0xff]
        %v1821 = vld [vmem:[#allocation12 + $0x40] sm:$0xff]
        %v1822 = vld [vmem:[#allocation12 + $0x48] sm:$0xff]
        %v1823 = vld [vmem:[#allocation12 + $0x50] sm:$0xff]
        %v1824 = vld [vmem:[#allocation12 + $0x58] sm:$0xff]
        %v1825 = vld [vmem:[#allocation12 + $0x60] sm:$0xff]
        %v1826 = vld [vmem:[#allocation12 + $0x68] sm:$0xff]
        %v1827 = vld [vmem:[#allocation12 + $0x70] sm:$0xff]
        %v1828 = vld [vmem:[#allocation12 + $0x78] sm:$0xff]
        %v1829 = vld [vmem:[#allocation12 + $0x80] sm:$0xff]
        %v1830 = vld [vmem:[#allocation12 + $0x88] sm:$0xff]
        %v1831 = vld [vmem:[#allocation12 + $0x90] sm:$0xff]
        %v1832 = vld [vmem:[#allocation12 + $0x98] sm:$0xff]
        %v1833 = vld [vmem:[#allocation12 + $0xa0] sm:$0xff]
        %v1834 = vld [vmem:[#allocation12 + $0xa8] sm:$0xff]
        %v1835 = vld [vmem:[#allocation12 + $0xb0] sm:$0xff]
        %v1836 = vld [vmem:[#allocation12 + $0xb8] sm:$0xff]
        %v1837 = vld [vmem:[#allocation12 + $0xc0] sm:$0xff]
        %v1838 = vld [vmem:[#allocation12 + $0xc8] sm:$0xff]
        %v1839 = vld [vmem:[#allocation12 + $0xd0] sm:$0xff]
        %v1840 = vld [vmem:[#allocation12 + $0xd8] sm:$0xff]
        %v1841 = vld [vmem:[#allocation12 + $0xe0] sm:$0xff]
        %v1842 = vld [vmem:[#allocation12 + $0xe8] sm:$0xff]
        %v1843 = vld [vmem:[#allocation12 + $0xf0] sm:$0xff]
        %v1844 = vld [vmem:[#allocation12 + $0xf8] sm:$0xff]
        %v1845 = vld [vmem:[#allocation12 + $0x100] sm:$0xff]
        %v1846 = vld [vmem:[#allocation12 + $0x108] sm:$0xff]
        %v1847 = vld [vmem:[#allocation12 + $0x110] sm:$0xff]
        %v1848 = vld [vmem:[#allocation12 + $0x118] sm:$0xff]
        %v1849 = vld [vmem:[#allocation12 + $0x120] sm:$0xff]
        %v1850 = vld [vmem:[#allocation12 + $0x128] sm:$0xff]
        %v1851 = vld [vmem:[#allocation12 + $0x130] sm:$0xff]
        %v1852 = vld [vmem:[#allocation12 + $0x138] sm:$0xff]
        %v1853 = vld [vmem:[#allocation12 + $0x140] sm:$0xff]
        %v1854 = vld [vmem:[#allocation12 + $0x148] sm:$0xff]
        %v1855 = vld [vmem:[#allocation12 + $0x150] sm:$0xff]
        %v1856 = vld [vmem:[#allocation12 + $0x158] sm:$0xff]
        %v1857 = vld [vmem:[#allocation12 + $0x160] sm:$0xff]
        %v1858 = vld [vmem:[#allocation12 + $0x168] sm:$0xff]
        %v1859 = vld [vmem:[#allocation12 + $0x170] sm:$0xff]
        %v1860 = vld [vmem:[#allocation12 + $0x178] sm:$0xff]
        %v1861 = vld [vmem:[#allocation12 + $0x180] sm:$0xff]
        %v1862 = vld [vmem:[#allocation12 + $0x188] sm:$0xff]
        %v1863 = vld [vmem:[#allocation12 + $0x190] sm:$0xff]
        %v1864 = vld [vmem:[#allocation12 + $0x198] sm:$0xff]
        %v1865 = vld [vmem:[#allocation12 + $0x1a0] sm:$0xff]
        %v1866 = vld [vmem:[#allocation12 + $0x1a8] sm:$0xff]
        %v1867 = vld [vmem:[#allocation12 + $0x1b0] sm:$0xff]
        %v1868 = vld [vmem:[#allocation12 + $0x1b8] sm:$0xff]
        %v1869 = vld [vmem:[#allocation12 + $0x1c0] sm:$0xff]
        %v1870 = vld [vmem:[#allocation12 + $0x1c8] sm:$0xff]
        %v1871 = vld [vmem:[#allocation12 + $0x1d0] sm:$0xff]
        %v1872 = vld [vmem:[#allocation12 + $0x1d8] sm:$0xff]
        %v1873 = vld [vmem:[#allocation12 + $0x1e0] sm:$0xff]
        %v1874 = vld [vmem:[#allocation12 + $0x1e8] sm:$0xff]
        %v1875 = vld [vmem:[#allocation12 + $0x1f0] sm:$0xff]
        %v1876 = vld [vmem:[#allocation12 + $0x1f8] sm:$0xff]
        %v1877 = vld [vmem:[#allocation12 + $0x200] sm:$0xff]
        %v1878 = vld [vmem:[#allocation12 + $0x208] sm:$0xff]
        %v1879 = vld [vmem:[#allocation12 + $0x210] sm:$0xff]
        %v1880 = vld [vmem:[#allocation12 + $0x218] sm:$0xff]
        %v1881 = vld [vmem:[#allocation12 + $0x220] sm:$0xff]
        %v1882 = vld [vmem:[#allocation12 + $0x228] sm:$0xff]
        %v1883 = vld [vmem:[#allocation12 + $0x230] sm:$0xff]
        %v1884 = vld [vmem:[#allocation12 + $0x238] sm:$0xff]
        %v1885 = vld [vmem:[#allocation12 + $0x240] sm:$0xff]
        %v1886 = vld [vmem:[#allocation12 + $0x248] sm:$0xff]
        %v1887 = vld [vmem:[#allocation12 + $0x250] sm:$0xff]
        %v1888 = vld [vmem:[#allocation12 + $0x258] sm:$0xff]
        %v1889 = vld [vmem:[#allocation12 + $0x260] sm:$0xff]
        %v1890 = vld [vmem:[#allocation12 + $0x268] sm:$0xff]
        %v1891 = vld [vmem:[#allocation12 + $0x270] sm:$0xff]
        %v1892 = vld [vmem:[#allocation12 + $0x278] sm:$0xff]
        %v1893 = vld [vmem:[#allocation12 + $0x280] sm:$0xff]
        %v1894 = vld [vmem:[#allocation12 + $0x288] sm:$0xff]
        %v1895 = vld [vmem:[#allocation12 + $0x290] sm:$0xff]
        %v1896 = vld [vmem:[#allocation12 + $0x298] sm:$0xff]
        %v1897 = vld [vmem:[#allocation12 + $0x2a0] sm:$0xff]
        %v1898 = vld [vmem:[#allocation12 + $0x2a8] sm:$0xff]
        %v1899 = vld [vmem:[#allocation12 + $0x2b0] sm:$0xff]
        %v1900 = vld [vmem:[#allocation12 + $0x2b8] sm:$0xff]
        %v1901 = vld [vmem:[#allocation12 + $0x2c0] sm:$0xff]
        %v1902 = vld [vmem:[#allocation12 + $0x2c8] sm:$0xff]
        %v1903 = vld [vmem:[#allocation12 + $0x2d0] sm:$0xff]
        %v1904 = vld [vmem:[#allocation12 + $0x2d8] sm:$0xff]
        %v1905 = vld [vmem:[#allocation12 + $0x2e0] sm:$0xff]
        %v1906 = vld [vmem:[#allocation12 + $0x2e8] sm:$0xff]
        %v1907 = vld [vmem:[#allocation12 + $0x2f0] sm:$0xff]
        %v1908 = vld [vmem:[#allocation12 + $0x2f8] sm:$0xff]
        %v1909 = vld [vmem:[#allocation12 + $0x300] sm:$0xff]
        %v1910 = vld [vmem:[#allocation12 + $0x308] sm:$0xff]
        %v1911 = vld [vmem:[#allocation12 + $0x310] sm:$0xff]
        %v1912 = vld [vmem:[#allocation12 + $0x318] sm:$0xff]
        %v1913 = vld [vmem:[#allocation12 + $0x320] sm:$0xff]
        %v1914 = vld [vmem:[#allocation12 + $0x328] sm:$0xff]
        %v1915 = vld [vmem:[#allocation12 + $0x330] sm:$0xff]
        %v1916 = vld [vmem:[#allocation12 + $0x338] sm:$0xff]
        %v1917 = vld [vmem:[#allocation12 + $0x340] sm:$0xff]
        %v1918 = vld [vmem:[#allocation12 + $0x348] sm:$0xff]
        %v1919 = vld [vmem:[#allocation12 + $0x350] sm:$0xff]
        %v1920 = vld [vmem:[#allocation12 + $0x358] sm:$0xff]
        %v1921 = vld [vmem:[#allocation12 + $0x360] sm:$0xff]
        %v1922 = vld [vmem:[#allocation12 + $0x368] sm:$0xff]
        %v1923 = vld [vmem:[#allocation12 + $0x370] sm:$0xff]
        %v1924 = vld [vmem:[#allocation12 + $0x378] sm:$0xff]
        %v1925 = vld [vmem:[#allocation12 + $0x380] sm:$0xff]
        %v1926 = vld [vmem:[#allocation12 + $0x388] sm:$0xff]
        %v1927 = vld [vmem:[#allocation12 + $0x390] sm:$0xff]
        %v1928 = vld [vmem:[#allocation12 + $0x398] sm:$0xff]
        %v1929 = vld [vmem:[#allocation12 + $0x3a0] sm:$0xff]
        %v1930 = vld [vmem:[#allocation12 + $0x3a8] sm:$0xff]
        %v1931 = vld [vmem:[#allocation12 + $0x3b0] sm:$0xff]
        %v1932 = vld [vmem:[#allocation12 + $0x3b8] sm:$0xff]
        %v1933 = vld [vmem:[#allocation12 + $0x3c0] sm:$0xff]
        %v1934 = vld [vmem:[#allocation12 + $0x3c8] sm:$0xff]
        %v1935 = vld [vmem:[#allocation12 + $0x3d0] sm:$0xff]
        %v1936 = vld [vmem:[#allocation12 + $0x3d8] sm:$0xff]
        %v1937 = vld [vmem:[#allocation12 + $0x3e0] sm:$0xff]
        %v1938 = vld [vmem:[#allocation12 + $0x3e8] sm:$0xff]
        %v1939 = vld [vmem:[#allocation12 + $0x3f0] sm:$0xff]
        %v1940 = vld [vmem:[#allocation12 + $0x3f8] sm:$0xff]
        %v1941 = vld [vmem:[#allocation12 + $0x400] sm:$0xff]
        %v1942 = vld [vmem:[#allocation12 + $0x408] sm:$0xff]
        %v1943 = vld [vmem:[#allocation12 + $0x410] sm:$0xff]
        %v1944 = vld [vmem:[#allocation12 + $0x418] sm:$0xff]
        %v1945 = vld [vmem:[#allocation12 + $0x420] sm:$0xff]
        %v1946 = vld [vmem:[#allocation12 + $0x428] sm:$0xff]
        %v1947 = vld [vmem:[#allocation12 + $0x430] sm:$0xff]
        %v1948 = vld [vmem:[#allocation12 + $0x438] sm:$0xff]
        %v1949 = vld [vmem:[#allocation12 + $0x440] sm:$0xff]
        %v1950 = vld [vmem:[#allocation12 + $0x448] sm:$0xff]
        %v1951 = vld [vmem:[#allocation12 + $0x450] sm:$0xff]
        %v1952 = vld [vmem:[#allocation12 + $0x458] sm:$0xff]
        %v1953 = vld [vmem:[#allocation12 + $0x460] sm:$0xff]
        %v1954 = vld [vmem:[#allocation12 + $0x468] sm:$0xff]
        %v1955 = vld [vmem:[#allocation12 + $0x470] sm:$0xff]
        %v1956 = vld [vmem:[#allocation12 + $0x478] sm:$0xff]
        %v1957 = vld [vmem:[%s6] sm:$0x1]
        %v1959 = vperm.slane %v1957, 0
        %1961 = vmatpush.msra.mxu0 %v1828
        %1962 = vmatpush.msra.mxu0 %v1827
        %1963 = vmatpush.msra.mxu0 %v1826
        %1964 = vmatpush.msra.mxu0 %v1825
        %1965 = vmatpush.msra.mxu0 %v1824
        %1966 = vmatpush.msra.mxu0 %v1823
        %1967 = vmatpush.msra.mxu0 %v1822
        %1968 = vmatpush.msra.mxu0 %v1821
        %1969 = vmatpush.msra.mxu0 %v1820
        %1970 = vmatpush.msra.mxu0 %v1819
        %1971 = vmatpush.msra.mxu0 %v1818
        %1972 = vmatpush.msra.mxu0 %v1817
        %1973 = vmatpush.msra.mxu0 %v1816
        %1974 = vmatpush.msra.mxu0 %v1815
        %1975 = vmatpush.msra.mxu0 %v1814
        %1976 = vmatpush.msra.mxu0 %v1813
        %1977 = vmatmul.f32.gmra.mxu0 %v1667
        %v1978 = vpop.f32.mrf.mxu0
        %v1979 = vadd.f32 %v1959, %v1978
        %1980 = vmatmul.f32.gmra.mxu0 %v1668
        %v1981 = vpop.f32.mrf.mxu0
        %v1982 = vadd.f32 %v1959, %v1981
        %1983 = vmatmul.f32.gmra.mxu0 %v1669
        %v1984 = vpop.f32.mrf.mxu0
        %v1985 = vadd.f32 %v1959, %v1984
        %1986 = vmatmul.f32.gmra.mxu0 %v1670
        %v1987 = vpop.f32.mrf.mxu0
        %v1988 = vadd.f32 %v1959, %v1987
        %1989 = vmatmul.f32.gmra.mxu0 %v1671
        %v1990 = vpop.f32.mrf.mxu0
        %v1991 = vadd.f32 %v1959, %v1990
        %1992 = vmatmul.f32.gmra.mxu0 %v1672
        %v1993 = vpop.f32.mrf.mxu0
        %v1994 = vadd.f32 %v1959, %v1993
        %1995 = vmatmul.f32.gmra.mxu0 %v1673
        %v1996 = vpop.f32.mrf.mxu0
        %v1997 = vadd.f32 %v1959, %v1996
        %1998 = vmatmul.f32.gmra.mxu0 %v1674
        %v1999 = vpop.f32.mrf.mxu0
        %v2000 = vadd.f32 %v1959, %v1999
        %2001 = vmatmul.f32.gmra.mxu0 %v1675
        %v2002 = vpop.f32.mrf.mxu0
        %v2003 = vadd.f32 %v1959, %v2002
        %2004 = vmatmul.f32.gmra.mxu0 %v1676
        %v2005 = vpop.f32.mrf.mxu0
        %v2006 = vadd.f32 %v1959, %v2005
        %2007 = vmatmul.f32.gmra.mxu0 %v1677
        %v2008 = vpop.f32.mrf.mxu0
        %v2009 = vadd.f32 %v1959, %v2008
        %2010 = vmatmul.f32.gmra.mxu0 %v1678
        %v2011 = vpop.f32.mrf.mxu0
        %v2012 = vadd.f32 %v1959, %v2011
        %2013 = vmatmul.f32.gmra.mxu0 %v1679
        %v2014 = vpop.f32.mrf.mxu0
        %v2015 = vadd.f32 %v1959, %v2014
        %2016 = vmatmul.f32.gmra.mxu0 %v1680
        %v2017 = vpop.f32.mrf.mxu0
        %v2018 = vadd.f32 %v1959, %v2017
        %2019 = vmatmul.f32.gmra.mxu0 %v1681
        %v2020 = vpop.f32.mrf.mxu0
        %v2021 = vadd.f32 %v1959, %v2020
        %2022 = vmatmul.f32.gmra.mxu0 %v1682
        %v2023 = vpop.f32.mrf.mxu0
        %v2024 = vadd.f32 %v1959, %v2023
        %2025 = vdwg.mxu0
        %2026 = vmatpush.msra.mxu0 %v1844
        %2027 = vmatpush.msra.mxu0 %v1843
        %2028 = vmatpush.msra.mxu0 %v1842
        %2029 = vmatpush.msra.mxu0 %v1841
        %2030 = vmatpush.msra.mxu0 %v1840
        %2031 = vmatpush.msra.mxu0 %v1839
        %2032 = vmatpush.msra.mxu0 %v1838
        %2033 = vmatpush.msra.mxu0 %v1837
        %2034 = vmatpush.msra.mxu0 %v1836
        %2035 = vmatpush.msra.mxu0 %v1835
        %2036 = vmatpush.msra.mxu0 %v1834
        %2037 = vmatpush.msra.mxu0 %v1833
        %2038 = vmatpush.msra.mxu0 %v1832
        %2039 = vmatpush.msra.mxu0 %v1831
        %2040 = vmatpush.msra.mxu0 %v1830
        %2041 = vmatpush.msra.mxu0 %v1829
        %2042 = vmatmul.f32.gmra.mxu0 %v1683
        %v2043 = vpop.f32.mrf.mxu0
        %v2044 = vadd.f32 %v1979, %v2043
        %2045 = vmatmul.f32.gmra.mxu0 %v1684
        %v2046 = vpop.f32.mrf.mxu0
        %v2047 = vadd.f32 %v1982, %v2046
        %2048 = vmatmul.f32.gmra.mxu0 %v1685
        %v2049 = vpop.f32.mrf.mxu0
        %v2050 = vadd.f32 %v1985, %v2049
        %2051 = vmatmul.f32.gmra.mxu0 %v1686
        %v2052 = vpop.f32.mrf.mxu0
        %v2053 = vadd.f32 %v1988, %v2052
        %2054 = vmatmul.f32.gmra.mxu0 %v1687
        %v2055 = vpop.f32.mrf.mxu0
        %v2056 = vadd.f32 %v1991, %v2055
        %2057 = vmatmul.f32.gmra.mxu0 %v1688
        %v2058 = vpop.f32.mrf.mxu0
        %v2059 = vadd.f32 %v1994, %v2058
        %2060 = vmatmul.f32.gmra.mxu0 %v1689
        %v2061 = vpop.f32.mrf.mxu0
        %v2062 = vadd.f32 %v1997, %v2061
        %2063 = vmatmul.f32.gmra.mxu0 %v1690
        %v2064 = vpop.f32.mrf.mxu0
        %v2065 = vadd.f32 %v2000, %v2064
        %2066 = vmatmul.f32.gmra.mxu0 %v1691
        %v2067 = vpop.f32.mrf.mxu0
        %v2068 = vadd.f32 %v2003, %v2067
        %2069 = vmatmul.f32.gmra.mxu0 %v1692
        %v2070 = vpop.f32.mrf.mxu0
        %v2071 = vadd.f32 %v2006, %v2070
        %2072 = vmatmul.f32.gmra.mxu0 %v1693
        %v2073 = vpop.f32.mrf.mxu0
        %v2074 = vadd.f32 %v2009, %v2073
        %2075 = vmatmul.f32.gmra.mxu0 %v1694
        %v2076 = vpop.f32.mrf.mxu0
        %v2077 = vadd.f32 %v2012, %v2076
        %2078 = vmatmul.f32.gmra.mxu0 %v1695
        %v2079 = vpop.f32.mrf.mxu0
        %v2080 = vadd.f32 %v2015, %v2079
        %2081 = vmatmul.f32.gmra.mxu0 %v1696
        %v2082 = vpop.f32.mrf.mxu0
        %v2083 = vadd.f32 %v2018, %v2082
        %2084 = vmatmul.f32.gmra.mxu0 %v1697
        %v2085 = vpop.f32.mrf.mxu0
        %v2086 = vadd.f32 %v2021, %v2085
        %2087 = vmatmul.f32.gmra.mxu0 %v1698
        %v2088 = vpop.f32.mrf.mxu0
        %v2089 = vadd.f32 %v2024, %v2088
        %2090 = vdwg.mxu0
        %2091 = vmatpush.msra.mxu0 %v1860
        %2092 = vmatpush.msra.mxu0 %v1859
        %2093 = vmatpush.msra.mxu0 %v1858
        %2094 = vmatpush.msra.mxu0 %v1857
        %2095 = vmatpush.msra.mxu0 %v1856
        %2096 = vmatpush.msra.mxu0 %v1855
        %2097 = vmatpush.msra.mxu0 %v1854
        %2098 = vmatpush.msra.mxu0 %v1853
        %2099 = vmatpush.msra.mxu0 %v1852
        %2100 = vmatpush.msra.mxu0 %v1851
        %2101 = vmatpush.msra.mxu0 %v1850
        %2102 = vmatpush.msra.mxu0 %v1849
        %2103 = vmatpush.msra.mxu0 %v1848
        %2104 = vmatpush.msra.mxu0 %v1847
        %2105 = vmatpush.msra.mxu0 %v1846
        %2106 = vmatpush.msra.mxu0 %v1845
        %2107 = vmatmul.f32.gmra.mxu0 %v1699
        %v2108 = vpop.f32.mrf.mxu0
        %v2109 = vadd.f32 %v2044, %v2108
        %2110 = vmatmul.f32.gmra.mxu0 %v1700
        %v2111 = vpop.f32.mrf.mxu0
        %v2112 = vadd.f32 %v2047, %v2111
        %2113 = vmatmul.f32.gmra.mxu0 %v1701
        %v2114 = vpop.f32.mrf.mxu0
        %v2115 = vadd.f32 %v2050, %v2114
        %2116 = vmatmul.f32.gmra.mxu0 %v1702
        %v2117 = vpop.f32.mrf.mxu0
        %v2118 = vadd.f32 %v2053, %v2117
        %2119 = vmatmul.f32.gmra.mxu0 %v1703
        %v2120 = vpop.f32.mrf.mxu0
        %v2121 = vadd.f32 %v2056, %v2120
        %2122 = vmatmul.f32.gmra.mxu0 %v1704
        %v2123 = vpop.f32.mrf.mxu0
        %v2124 = vadd.f32 %v2059, %v2123
        %2125 = vmatmul.f32.gmra.mxu0 %v1705
        %v2126 = vpop.f32.mrf.mxu0
        %v2127 = vadd.f32 %v2062, %v2126
        %2128 = vmatmul.f32.gmra.mxu0 %v1706
        %v2129 = vpop.f32.mrf.mxu0
        %v2130 = vadd.f32 %v2065, %v2129
        %2131 = vmatmul.f32.gmra.mxu0 %v1707
        %v2132 = vpop.f32.mrf.mxu0
        %v2133 = vadd.f32 %v2068, %v2132
        %2134 = vmatmul.f32.gmra.mxu0 %v1708
        %v2135 = vpop.f32.mrf.mxu0
        %v2136 = vadd.f32 %v2071, %v2135
        %2137 = vmatmul.f32.gmra.mxu0 %v1709
        %v2138 = vpop.f32.mrf.mxu0
        %v2139 = vadd.f32 %v2074, %v2138
        %2140 = vmatmul.f32.gmra.mxu0 %v1710
        %v2141 = vpop.f32.mrf.mxu0
        %v2142 = vadd.f32 %v2077, %v2141
        %2143 = vmatmul.f32.gmra.mxu0 %v1711
        %v2144 = vpop.f32.mrf.mxu0
        %v2145 = vadd.f32 %v2080, %v2144
        %2146 = vmatmul.f32.gmra.mxu0 %v1712
        %v2147 = vpop.f32.mrf.mxu0
        %v2148 = vadd.f32 %v2083, %v2147
        %2149 = vmatmul.f32.gmra.mxu0 %v1713
        %v2150 = vpop.f32.mrf.mxu0
        %v2151 = vadd.f32 %v2086, %v2150
        %2152 = vmatmul.f32.gmra.mxu0 %v1714
        %v2153 = vpop.f32.mrf.mxu0
        %v2154 = vadd.f32 %v2089, %v2153
        %2155 = vdwg.mxu0
        %2156 = vmatpush.msra.mxu0 %v1876
        %2157 = vmatpush.msra.mxu0 %v1875
        %2158 = vmatpush.msra.mxu0 %v1874
        %2159 = vmatpush.msra.mxu0 %v1873
        %2160 = vmatpush.msra.mxu0 %v1872
        %2161 = vmatpush.msra.mxu0 %v1871
        %2162 = vmatpush.msra.mxu0 %v1870
        %2163 = vmatpush.msra.mxu0 %v1869
        %2164 = vmatpush.msra.mxu0 %v1868
        %2165 = vmatpush.msra.mxu0 %v1867
        %2166 = vmatpush.msra.mxu0 %v1866
        %2167 = vmatpush.msra.mxu0 %v1865
        %2168 = vmatpush.msra.mxu0 %v1864
        %2169 = vmatpush.msra.mxu0 %v1863
        %2170 = vmatpush.msra.mxu0 %v1862
        %2171 = vmatpush.msra.mxu0 %v1861
        %2172 = vmatmul.f32.gmra.mxu0 %v1716
        %v2173 = vpop.f32.mrf.mxu0
        %v2174 = vadd.f32 %v2109, %v2173
        %2175 = vmatmul.f32.gmra.mxu0 %v1717
        %v2176 = vpop.f32.mrf.mxu0
        %v2177 = vadd.f32 %v2112, %v2176
        %2178 = vmatmul.f32.gmra.mxu0 %v1718
        %v2179 = vpop.f32.mrf.mxu0
        %v2180 = vadd.f32 %v2115, %v2179
        %2181 = vmatmul.f32.gmra.mxu0 %v1719
        %v2182 = vpop.f32.mrf.mxu0
        %v2183 = vadd.f32 %v2118, %v2182
        %2184 = vmatmul.f32.gmra.mxu0 %v1720
        %v2185 = vpop.f32.mrf.mxu0
        %v2186 = vadd.f32 %v2121, %v2185
        %2187 = vmatmul.f32.gmra.mxu0 %v1721
        %v2188 = vpop.f32.mrf.mxu0
        %v2189 = vadd.f32 %v2124, %v2188
        %2190 = vmatmul.f32.gmra.mxu0 %v1722
        %v2191 = vpop.f32.mrf.mxu0
        %v2192 = vadd.f32 %v2127, %v2191
        %2193 = vmatmul.f32.gmra.mxu0 %v1723
        %v2194 = vpop.f32.mrf.mxu0
        %v2195 = vadd.f32 %v2130, %v2194
        %2196 = vmatmul.f32.gmra.mxu0 %v1724
        %v2197 = vpop.f32.mrf.mxu0
        %v2198 = vadd.f32 %v2133, %v2197
        %2199 = vmatmul.f32.gmra.mxu0 %v1725
        %v2200 = vpop.f32.mrf.mxu0
        %v2201 = vadd.f32 %v2136, %v2200
        %2202 = vmatmul.f32.gmra.mxu0 %v1726
        %v2203 = vpop.f32.mrf.mxu0
        %v2204 = vadd.f32 %v2139, %v2203
        %2205 = vmatmul.f32.gmra.mxu0 %v1727
        %v2206 = vpop.f32.mrf.mxu0
        %v2207 = vadd.f32 %v2142, %v2206
        %2208 = vmatmul.f32.gmra.mxu0 %v1728
        %v2209 = vpop.f32.mrf.mxu0
        %v2210 = vadd.f32 %v2145, %v2209
        %2211 = vmatmul.f32.gmra.mxu0 %v1729
        %v2212 = vpop.f32.mrf.mxu0
        %v2213 = vadd.f32 %v2148, %v2212
        %2214 = vmatmul.f32.gmra.mxu0 %v1730
        %v2215 = vpop.f32.mrf.mxu0
        %v2216 = vadd.f32 %v2151, %v2215
        %2217 = vmatmul.f32.gmra.mxu0 %v1731
        %v2218 = vpop.f32.mrf.mxu0
        %v2219 = vadd.f32 %v2154, %v2218
        %2220 = vdwg.mxu0
        %2221 = vmatpush.msra.mxu0 %v1892
        %2222 = vmatpush.msra.mxu0 %v1891
        %2223 = vmatpush.msra.mxu0 %v1890
        %2224 = vmatpush.msra.mxu0 %v1889
        %2225 = vmatpush.msra.mxu0 %v1888
        %2226 = vmatpush.msra.mxu0 %v1887
        %2227 = vmatpush.msra.mxu0 %v1886
        %2228 = vmatpush.msra.mxu0 %v1885
        %2229 = vmatpush.msra.mxu0 %v1884
        %2230 = vmatpush.msra.mxu0 %v1883
        %2231 = vmatpush.msra.mxu0 %v1882
        %2232 = vmatpush.msra.mxu0 %v1881
        %2233 = vmatpush.msra.mxu0 %v1880
        %2234 = vmatpush.msra.mxu0 %v1879
        %2235 = vmatpush.msra.mxu0 %v1878
        %2236 = vmatpush.msra.mxu0 %v1877
        %2237 = vmatmul.f32.gmra.mxu0 %v1732
        %v2238 = vpop.f32.mrf.mxu0
        %v2239 = vadd.f32 %v2174, %v2238
        %2240 = vmatmul.f32.gmra.mxu0 %v1733
        %v2241 = vpop.f32.mrf.mxu0
        %v2242 = vadd.f32 %v2177, %v2241
        %2243 = vmatmul.f32.gmra.mxu0 %v1734
        %v2244 = vpop.f32.mrf.mxu0
        %v2245 = vadd.f32 %v2180, %v2244
        %2246 = vmatmul.f32.gmra.mxu0 %v1735
        %v2247 = vpop.f32.mrf.mxu0
        %v2248 = vadd.f32 %v2183, %v2247
        %2249 = vmatmul.f32.gmra.mxu0 %v1736
        %v2250 = vpop.f32.mrf.mxu0
        %v2251 = vadd.f32 %v2186, %v2250
        %2252 = vmatmul.f32.gmra.mxu0 %v1737
        %v2253 = vpop.f32.mrf.mxu0
        %v2254 = vadd.f32 %v2189, %v2253
        %2255 = vmatmul.f32.gmra.mxu0 %v1738
        %v2256 = vpop.f32.mrf.mxu0
        %v2257 = vadd.f32 %v2192, %v2256
        %2258 = vmatmul.f32.gmra.mxu0 %v1739
        %v2259 = vpop.f32.mrf.mxu0
        %v2260 = vadd.f32 %v2195, %v2259
        %2261 = vmatmul.f32.gmra.mxu0 %v1740
        %v2262 = vpop.f32.mrf.mxu0
        %v2263 = vadd.f32 %v2198, %v2262
        %2264 = vmatmul.f32.gmra.mxu0 %v1741
        %v2265 = vpop.f32.mrf.mxu0
        %v2266 = vadd.f32 %v2201, %v2265
        %2267 = vmatmul.f32.gmra.mxu0 %v1742
        %v2268 = vpop.f32.mrf.mxu0
        %v2269 = vadd.f32 %v2204, %v2268
        %2270 = vmatmul.f32.gmra.mxu0 %v1743
        %v2271 = vpop.f32.mrf.mxu0
        %v2272 = vadd.f32 %v2207, %v2271
        %2273 = vmatmul.f32.gmra.mxu0 %v1744
        %v2274 = vpop.f32.mrf.mxu0
        %v2275 = vadd.f32 %v2210, %v2274
        %2276 = vmatmul.f32.gmra.mxu0 %v1745
        %v2277 = vpop.f32.mrf.mxu0
        %v2278 = vadd.f32 %v2213, %v2277
        %2279 = vmatmul.f32.gmra.mxu0 %v1746
        %v2280 = vpop.f32.mrf.mxu0
        %v2281 = vadd.f32 %v2216, %v2280
        %2282 = vmatmul.f32.gmra.mxu0 %v1747
        %v2283 = vpop.f32.mrf.mxu0
        %v2284 = vadd.f32 %v2219, %v2283
        %2285 = vdwg.mxu0
        %2286 = vmatpush.msra.mxu0 %v1908
        %2287 = vmatpush.msra.mxu0 %v1907
        %2288 = vmatpush.msra.mxu0 %v1906
        %2289 = vmatpush.msra.mxu0 %v1905
        %2290 = vmatpush.msra.mxu0 %v1904
        %2291 = vmatpush.msra.mxu0 %v1903
        %2292 = vmatpush.msra.mxu0 %v1902
        %2293 = vmatpush.msra.mxu0 %v1901
        %2294 = vmatpush.msra.mxu0 %v1900
        %2295 = vmatpush.msra.mxu0 %v1899
        %2296 = vmatpush.msra.mxu0 %v1898
        %2297 = vmatpush.msra.mxu0 %v1897
        %2298 = vmatpush.msra.mxu0 %v1896
        %2299 = vmatpush.msra.mxu0 %v1895
        %2300 = vmatpush.msra.mxu0 %v1894
        %2301 = vmatpush.msra.mxu0 %v1893
        %2302 = vmatmul.f32.gmra.mxu0 %v1748
        %v2303 = vpop.f32.mrf.mxu0
        %v2304 = vadd.f32 %v2239, %v2303
        %2305 = vmatmul.f32.gmra.mxu0 %v1749
        %v2306 = vpop.f32.mrf.mxu0
        %v2307 = vadd.f32 %v2242, %v2306
        %2308 = vmatmul.f32.gmra.mxu0 %v1750
        %v2309 = vpop.f32.mrf.mxu0
        %v2310 = vadd.f32 %v2245, %v2309
        %2311 = vmatmul.f32.gmra.mxu0 %v1751
        %v2312 = vpop.f32.mrf.mxu0
        %v2313 = vadd.f32 %v2248, %v2312
        %2314 = vmatmul.f32.gmra.mxu0 %v1752
        %v2315 = vpop.f32.mrf.mxu0
        %v2316 = vadd.f32 %v2251, %v2315
        %2317 = vmatmul.f32.gmra.mxu0 %v1753
        %v2318 = vpop.f32.mrf.mxu0
        %v2319 = vadd.f32 %v2254, %v2318
        %2320 = vmatmul.f32.gmra.mxu0 %v1754
        %v2321 = vpop.f32.mrf.mxu0
        %v2322 = vadd.f32 %v2257, %v2321
        %2323 = vmatmul.f32.gmra.mxu0 %v1755
        %v2324 = vpop.f32.mrf.mxu0
        %v2325 = vadd.f32 %v2260, %v2324
        %2326 = vmatmul.f32.gmra.mxu0 %v1756
        %v2327 = vpop.f32.mrf.mxu0
        %v2328 = vadd.f32 %v2263, %v2327
        %2329 = vmatmul.f32.gmra.mxu0 %v1757
        %v2330 = vpop.f32.mrf.mxu0
        %v2331 = vadd.f32 %v2266, %v2330
        %2332 = vmatmul.f32.gmra.mxu0 %v1758
        %v2333 = vpop.f32.mrf.mxu0
        %v2334 = vadd.f32 %v2269, %v2333
        %2335 = vmatmul.f32.gmra.mxu0 %v1759
        %v2336 = vpop.f32.mrf.mxu0
        %v2337 = vadd.f32 %v2272, %v2336
        %2338 = vmatmul.f32.gmra.mxu0 %v1760
        %v2339 = vpop.f32.mrf.mxu0
        %v2340 = vadd.f32 %v2275, %v2339
        %2341 = vmatmul.f32.gmra.mxu0 %v1761
        %v2342 = vpop.f32.mrf.mxu0
        %v2343 = vadd.f32 %v2278, %v2342
        %2344 = vmatmul.f32.gmra.mxu0 %v1762
        %v2345 = vpop.f32.mrf.mxu0
        %v2346 = vadd.f32 %v2281, %v2345
        %2347 = vmatmul.f32.gmra.mxu0 %v1763
        %v2348 = vpop.f32.mrf.mxu0
        %v2349 = vadd.f32 %v2284, %v2348
        %2350 = vdwg.mxu0
        %2351 = vmatpush.msra.mxu0 %v1924
        %2352 = vmatpush.msra.mxu0 %v1923
        %2353 = vmatpush.msra.mxu0 %v1922
        %2354 = vmatpush.msra.mxu0 %v1921
        %2355 = vmatpush.msra.mxu0 %v1920
        %2356 = vmatpush.msra.mxu0 %v1919
        %2357 = vmatpush.msra.mxu0 %v1918
        %2358 = vmatpush.msra.mxu0 %v1917
        %2359 = vmatpush.msra.mxu0 %v1916
        %2360 = vmatpush.msra.mxu0 %v1915
        %2361 = vmatpush.msra.mxu0 %v1914
        %2362 = vmatpush.msra.mxu0 %v1913
        %2363 = vmatpush.msra.mxu0 %v1912
        %2364 = vmatpush.msra.mxu0 %v1911
        %2365 = vmatpush.msra.mxu0 %v1910
        %2366 = vmatpush.msra.mxu0 %v1909
        %2367 = vmatmul.f32.gmra.mxu0 %v1765
        %v2368 = vpop.f32.mrf.mxu0
        %v2369 = vadd.f32 %v2304, %v2368
        %2370 = vmatmul.f32.gmra.mxu0 %v1766
        %v2371 = vpop.f32.mrf.mxu0
        %v2372 = vadd.f32 %v2307, %v2371
        %2373 = vmatmul.f32.gmra.mxu0 %v1767
        %v2374 = vpop.f32.mrf.mxu0
        %v2375 = vadd.f32 %v2310, %v2374
        %2376 = vmatmul.f32.gmra.mxu0 %v1768
        %v2377 = vpop.f32.mrf.mxu0
        %v2378 = vadd.f32 %v2313, %v2377
        %2379 = vmatmul.f32.gmra.mxu0 %v1769
        %v2380 = vpop.f32.mrf.mxu0
        %v2381 = vadd.f32 %v2316, %v2380
        %2382 = vmatmul.f32.gmra.mxu0 %v1770
        %v2383 = vpop.f32.mrf.mxu0
        %v2384 = vadd.f32 %v2319, %v2383
        %2385 = vmatmul.f32.gmra.mxu0 %v1771
        %v2386 = vpop.f32.mrf.mxu0
        %v2387 = vadd.f32 %v2322, %v2386
        %2388 = vmatmul.f32.gmra.mxu0 %v1772
        %v2389 = vpop.f32.mrf.mxu0
        %v2390 = vadd.f32 %v2325, %v2389
        %2391 = vmatmul.f32.gmra.mxu0 %v1773
        %v2392 = vpop.f32.mrf.mxu0
        %v2393 = vadd.f32 %v2328, %v2392
        %2394 = vmatmul.f32.gmra.mxu0 %v1774
        %v2395 = vpop.f32.mrf.mxu0
        %v2396 = vadd.f32 %v2331, %v2395
        %2397 = vmatmul.f32.gmra.mxu0 %v1775
        %v2398 = vpop.f32.mrf.mxu0
        %v2399 = vadd.f32 %v2334, %v2398
        %2400 = vmatmul.f32.gmra.mxu0 %v1776
        %v2401 = vpop.f32.mrf.mxu0
        %v2402 = vadd.f32 %v2337, %v2401
        %2403 = vmatmul.f32.gmra.mxu0 %v1777
        %v2404 = vpop.f32.mrf.mxu0
        %v2405 = vadd.f32 %v2340, %v2404
        %2406 = vmatmul.f32.gmra.mxu0 %v1778
        %v2407 = vpop.f32.mrf.mxu0
        %v2408 = vadd.f32 %v2343, %v2407
        %2409 = vmatmul.f32.gmra.mxu0 %v1779
        %v2410 = vpop.f32.mrf.mxu0
        %v2411 = vadd.f32 %v2346, %v2410
        %2412 = vmatmul.f32.gmra.mxu0 %v1780
        %v2413 = vpop.f32.mrf.mxu0
        %v2414 = vadd.f32 %v2349, %v2413
        %2415 = vdwg.mxu0
        %2416 = vmatpush.msra.mxu0 %v1940
        %2417 = vmatpush.msra.mxu0 %v1939
        %2418 = vmatpush.msra.mxu0 %v1938
        %2419 = vmatpush.msra.mxu0 %v1937
        %2420 = vmatpush.msra.mxu0 %v1936
        %2421 = vmatpush.msra.mxu0 %v1935
        %2422 = vmatpush.msra.mxu0 %v1934
        %2423 = vmatpush.msra.mxu0 %v1933
        %2424 = vmatpush.msra.mxu0 %v1932
        %2425 = vmatpush.msra.mxu0 %v1931
        %2426 = vmatpush.msra.mxu0 %v1930
        %2427 = vmatpush.msra.mxu0 %v1929
        %2428 = vmatpush.msra.mxu0 %v1928
        %2429 = vmatpush.msra.mxu0 %v1927
        %2430 = vmatpush.msra.mxu0 %v1926
        %2431 = vmatpush.msra.mxu0 %v1925
        %2432 = vmatmul.f32.gmra.mxu0 %v1781
        %v2433 = vpop.f32.mrf.mxu0
        %v2434 = vadd.f32 %v2369, %v2433
        %2435 = vmatmul.f32.gmra.mxu0 %v1782
        %v2436 = vpop.f32.mrf.mxu0
        %v2437 = vadd.f32 %v2372, %v2436
        %2438 = vmatmul.f32.gmra.mxu0 %v1783
        %v2439 = vpop.f32.mrf.mxu0
        %v2440 = vadd.f32 %v2375, %v2439
        %2441 = vmatmul.f32.gmra.mxu0 %v1784
        %v2442 = vpop.f32.mrf.mxu0
        %v2443 = vadd.f32 %v2378, %v2442
        %2444 = vmatmul.f32.gmra.mxu0 %v1785
        %v2445 = vpop.f32.mrf.mxu0
        %v2446 = vadd.f32 %v2381, %v2445
        %2447 = vmatmul.f32.gmra.mxu0 %v1786
        %v2448 = vpop.f32.mrf.mxu0
        %v2449 = vadd.f32 %v2384, %v2448
        %2450 = vmatmul.f32.gmra.mxu0 %v1787
        %v2451 = vpop.f32.mrf.mxu0
        %v2452 = vadd.f32 %v2387, %v2451
        %2453 = vmatmul.f32.gmra.mxu0 %v1788
        %v2454 = vpop.f32.mrf.mxu0
        %v2455 = vadd.f32 %v2390, %v2454
        %2456 = vmatmul.f32.gmra.mxu0 %v1789
        %v2457 = vpop.f32.mrf.mxu0
        %v2458 = vadd.f32 %v2393, %v2457
        %2459 = vmatmul.f32.gmra.mxu0 %v1790
        %v2460 = vpop.f32.mrf.mxu0
        %v2461 = vadd.f32 %v2396, %v2460
        %2462 = vmatmul.f32.gmra.mxu0 %v1791
        %v2463 = vpop.f32.mrf.mxu0
        %v2464 = vadd.f32 %v2399, %v2463
        %2465 = vmatmul.f32.gmra.mxu0 %v1792
        %v2466 = vpop.f32.mrf.mxu0
        %v2467 = vadd.f32 %v2402, %v2466
        %2468 = vmatmul.f32.gmra.mxu0 %v1793
        %v2469 = vpop.f32.mrf.mxu0
        %v2470 = vadd.f32 %v2405, %v2469
        %2471 = vmatmul.f32.gmra.mxu0 %v1794
        %v2472 = vpop.f32.mrf.mxu0
        %v2473 = vadd.f32 %v2408, %v2472
        %2474 = vmatmul.f32.gmra.mxu0 %v1795
        %v2475 = vpop.f32.mrf.mxu0
        %v2476 = vadd.f32 %v2411, %v2475
        %2477 = vmatmul.f32.gmra.mxu0 %v1796
        %v2478 = vpop.f32.mrf.mxu0
        %v2479 = vadd.f32 %v2414, %v2478
        %2480 = vdwg.mxu0
        %2481 = vmatpush.msra.mxu0 %v1956
        %2482 = vmatpush.msra.mxu0 %v1955
        %2483 = vmatpush.msra.mxu0 %v1954
        %2484 = vmatpush.msra.mxu0 %v1953
        %2485 = vmatpush.msra.mxu0 %v1952
        %2486 = vmatpush.msra.mxu0 %v1951
        %2487 = vmatpush.msra.mxu0 %v1950
        %2488 = vmatpush.msra.mxu0 %v1949
        %2489 = vmatpush.msra.mxu0 %v1948
        %2490 = vmatpush.msra.mxu0 %v1947
        %2491 = vmatpush.msra.mxu0 %v1946
        %2492 = vmatpush.msra.mxu0 %v1945
        %2493 = vmatpush.msra.mxu0 %v1944
        %2494 = vmatpush.msra.mxu0 %v1943
        %2495 = vmatpush.msra.mxu0 %v1942
        %2496 = vmatpush.msra.mxu0 %v1941
        %2497 = vmatmul.f32.gmra.mxu0 %v1797
        %v2498 = vpop.f32.mrf.mxu0
        %v2499 = vadd.f32 %v2434, %v2498
        %2500 = vmatmul.f32.gmra.mxu0 %v1798
        %v2501 = vpop.f32.mrf.mxu0
        %v2502 = vadd.f32 %v2437, %v2501
        %2503 = vmatmul.f32.gmra.mxu0 %v1799
        %v2504 = vpop.f32.mrf.mxu0
        %v2505 = vadd.f32 %v2440, %v2504
        %2506 = vmatmul.f32.gmra.mxu0 %v1800
        %v2507 = vpop.f32.mrf.mxu0
        %v2508 = vadd.f32 %v2443, %v2507
        %2509 = vmatmul.f32.gmra.mxu0 %v1801
        %v2510 = vpop.f32.mrf.mxu0
        %v2511 = vadd.f32 %v2446, %v2510
        %2512 = vmatmul.f32.gmra.mxu0 %v1802
        %v2513 = vpop.f32.mrf.mxu0
        %v2514 = vadd.f32 %v2449, %v2513
        %2515 = vmatmul.f32.gmra.mxu0 %v1803
        %v2516 = vpop.f32.mrf.mxu0
        %v2517 = vadd.f32 %v2452, %v2516
        %2518 = vmatmul.f32.gmra.mxu0 %v1804
        %v2519 = vpop.f32.mrf.mxu0
        %v2520 = vadd.f32 %v2455, %v2519
        %2521 = vmatmul.f32.gmra.mxu0 %v1805
        %v2522 = vpop.f32.mrf.mxu0
        %v2523 = vadd.f32 %v2458, %v2522
        %2524 = vmatmul.f32.gmra.mxu0 %v1806
        %v2525 = vpop.f32.mrf.mxu0
        %v2526 = vadd.f32 %v2461, %v2525
        %2527 = vmatmul.f32.gmra.mxu0 %v1807
        %v2528 = vpop.f32.mrf.mxu0
        %v2529 = vadd.f32 %v2464, %v2528
        %2530 = vmatmul.f32.gmra.mxu0 %v1808
        %v2531 = vpop.f32.mrf.mxu0
        %v2532 = vadd.f32 %v2467, %v2531
        %2533 = vmatmul.f32.gmra.mxu0 %v1809
        %v2534 = vpop.f32.mrf.mxu0
        %v2535 = vadd.f32 %v2470, %v2534
        %2536 = vmatmul.f32.gmra.mxu0 %v1810
        %v2537 = vpop.f32.mrf.mxu0
        %v2538 = vadd.f32 %v2473, %v2537
        %2539 = vmatmul.f32.gmra.mxu0 %v1811
        %v2540 = vpop.f32.mrf.mxu0
        %v2541 = vadd.f32 %v2476, %v2540
        %2542 = vmatmul.f32.gmra.mxu0 %v1812
        %v2543 = vpop.f32.mrf.mxu0
        %v2544 = vadd.f32 %v2479, %v2543
        %2545 = vdwg.mxu0
        %v2546 = vld [vmem:[%s394] sm:$0xff]
        %v2547 = vld [vmem:[%s394 + $0x8] sm:$0xff]
        %v2548 = vld [vmem:[%s394 + $0x10] sm:$0xff]
        %v2549 = vld [vmem:[%s394 + $0x18] sm:$0xff]
        %v2550 = vld [vmem:[%s394 + $0x20] sm:$0xff]
        %v2551 = vld [vmem:[%s394 + $0x28] sm:$0xff]
        %v2552 = vld [vmem:[%s394 + $0x30] sm:$0xff]
        %v2553 = vld [vmem:[%s394 + $0x38] sm:$0xff]
        %v2554 = vld [vmem:[%s394 + $0x40] sm:$0xff]
        %v2555 = vld [vmem:[%s394 + $0x48] sm:$0xff]
        %v2556 = vld [vmem:[%s394 + $0x50] sm:$0xff]
        %v2557 = vld [vmem:[%s394 + $0x58] sm:$0xff]
        %v2558 = vld [vmem:[%s394 + $0x60] sm:$0xff]
        %v2559 = vld [vmem:[%s394 + $0x68] sm:$0xff]
        %v2560 = vld [vmem:[%s394 + $0x70] sm:$0xff]
        %v2561 = vld [vmem:[%s394 + $0x78] sm:$0xff]
        %v2562 = vadd.f32 %v2499, %v2546
        %v2563 = vadd.f32 %v2502, %v2547
        %v2564 = vadd.f32 %v2505, %v2548
        %v2565 = vadd.f32 %v2508, %v2549
        %v2566 = vadd.f32 %v2511, %v2550
        %v2567 = vadd.f32 %v2514, %v2551
        %v2568 = vadd.f32 %v2517, %v2552
        %v2569 = vadd.f32 %v2520, %v2553
        %v2570 = vadd.f32 %v2523, %v2554
        %v2571 = vadd.f32 %v2526, %v2555
        %v2572 = vadd.f32 %v2529, %v2556
        %v2573 = vadd.f32 %v2532, %v2557
        %v2574 = vadd.f32 %v2535, %v2558
        %v2575 = vadd.f32 %v2538, %v2559
        %v2576 = vadd.f32 %v2541, %v2560
        %v2577 = vadd.f32 %v2544, %v2561
        %2578 = vst [vmem:[%s465] sm:$0xff] %v2562
        %2579 = vst [vmem:[%s465 + $0x8] sm:$0xff] %v2563
        %2580 = vst [vmem:[%s465 + $0x10] sm:$0xff] %v2564
        %2581 = vst [vmem:[%s465 + $0x18] sm:$0xff] %v2565
        %2582 = vst [vmem:[%s465 + $0x20] sm:$0xff] %v2566
        %2583 = vst [vmem:[%s465 + $0x28] sm:$0xff] %v2567
        %2584 = vst [vmem:[%s465 + $0x30] sm:$0xff] %v2568
        %2585 = vst [vmem:[%s465 + $0x38] sm:$0xff] %v2569
        %2586 = vst [vmem:[%s465 + $0x40] sm:$0xff] %v2570
        %2587 = vst [vmem:[%s465 + $0x48] sm:$0xff] %v2571
        %2588 = vst [vmem:[%s465 + $0x50] sm:$0xff] %v2572
        %2589 = vst [vmem:[%s465 + $0x58] sm:$0xff] %v2573
        %2590 = vst [vmem:[%s465 + $0x60] sm:$0xff] %v2574
        %2591 = vst [vmem:[%s465 + $0x68] sm:$0xff] %v2575
        %2592 = vst [vmem:[%s465 + $0x70] sm:$0xff] %v2576
        %2593 = vst [vmem:[%s465 + $0x78] sm:$0xff] %v2577
        %s2594 = sand.u32 %s234, 1
        %s2595 = scalar_lea.sflag [#allocation6], %s2594
        %s2596 = sand.u32 %s234, 1
        %s2597 = smul.addr %s2596, 128
        %s2598 = scalar_lea.vmem [#allocation13], %s2597
        // Predicated region
        $region85: #{tpu_custom_call.1} parent=47 // pred_check
          %p2599 = pneg %p244
        $region86: #{tpu_custom_call.1} parent=47 // pred_check_branch
          %2601 = sbr.rel (%p2599) target = $region88
        $region87: #{tpu_custom_call.1} parent=47 // pred_region
          %s2602 = smul.u32 8, %s33
          %2604 = vsyncadd %s2595, 0
          %s2605 = smul.addr %s2602, 2
          %s2606 = smul.addr %s32, 32
          %s2607 = sadd.s32 %s2605, %s2606
          %s2608 = smul.addr %s2607, 8
          %s2609 = scalar_lea.hbm %s7, %s2608
          %s2610 = sshll.u32 %s2598, 4
          %s2611 = int_to_ptr.vmem [resolvable:$true] %s2610
          %s2612 = sshll.u32 %s2609, 4
          %s2613 = int_to_ptr.hbm [resolvable:$true] %s2612
          %2618 = dma.vmem_to_hbm [thread:$0]  %s2611, 2048, %s2613, %s2595, 128, 128, 8
        $region88: #{tpu_custom_call.1} parent=47 // pred_fallthru
          _
      $region48: #{tpu_custom_call.1} parent=5 // pred_fallthru
        _
      %p2619 = scmp.le.s32.totalorder 2, %s23
      // Predicated region
      $region89: #{tpu_custom_call.1} parent=5 // pred_check
        %p2620 = pneg %p2619
      $region90: #{tpu_custom_call.1} parent=5 // pred_check_branch
        %2622 = sbr.rel (%p2620) target = $region92
      $region91: #{tpu_custom_call.1} parent=5 // pred_region
        %s2623 = ssub.s32 %s23, 2
        // Predicated region
        $region93: #{tpu_custom_call.1} parent=91 // pred_check
          %p2624 = pneg %p250
        $region94: #{tpu_custom_call.1} parent=91 // pred_check_branch
          %2626 = sbr.rel (%p2624) target = $region96
        $region95: #{tpu_custom_call.1} parent=91 // pred_region
          %s2627 = sand.u32 %s235, 1
          %s2628 = scalar_lea.sflag [#allocation6], %s2627
          %s2629 = sand.u32 %s235, 1
          %s2630 = smul.addr %s2629, 128
          %s2631 = scalar_lea.vmem [#allocation13], %s2630
          %2633 = dma.done %s2628, 2048
        $region96: #{tpu_custom_call.1} parent=91 // pred_fallthru
          _
      $region92: #{tpu_custom_call.1} parent=5 // pred_fallthru
        _
    $region6: #{tpu_custom_call.1} parent=1 // loop_footer
      %s27 = sadd.s32 1, %s23
    $region7: #{tpu_custom_call.1} parent=1 // loop_footer_branch
      %22 = sbr.rel target = $region3
    $region8: #{tpu_custom_call.1} parent=1 // loop_exit
      _
    %2634 = vsyncpa [#allocation5], 1
    %s2635 = scalar_lea.sflag [#allocation5], 1
    %2636 = vsyncpa %s2635, 1
    %2637 = vsyncpa [#allocation8], 1
    %s2638 = scalar_lea.sflag [#allocation8], 1
    %2639 = vsyncpa %s2638, 1
    %2640 = vsyncpa [#allocation11], 1
    %2641 = vsyncpa [#allocation6], 1
    %s2642 = scalar_lea.sflag [#allocation6], 1
    %2643 = vsyncpa %s2642, 1

</llo_original>
